<compile_context>
chip_gen: v6e
topology: v6e:2x2x1
jax: 0.10.0
libtpu: 0.0.40
codegen_flags: <defaults>
</compile_context>

<pallas_src>
import jax
import jax.numpy as jnp
from jax import lax
from jax.experimental import pallas as pl
from jax.experimental.pallas import tpu as pltpu


# ----------------------------------------------------------------------------
# Fused kernels (one grid step == one batch element, everything VMEM-resident)
# ----------------------------------------------------------------------------
def _make_stride1_kernel(H, W, D, B):
    HW = H * W

    def kernel(x_ref, w1_ref, b1_ref, w2_ref, b2_ref, w3_ref, b3_ref,
               o_ref, pad_ref):
        x = x_ref[0]                                               # (HW, D)

        # conv1: 1x1 ConvTranspose == per-pixel linear, + relu
        y1 = jnp.maximum(
            jnp.dot(x, w1_ref[...], preferred_element_type=jnp.float32)
            + b1_ref[...], 0.0)                                    # (HW, B)

        # zero-padded y1 image kept in VMEM scratch; 3x3 taps are shifted
        # static slices of it (no HBM im2col).
        pad_ref[...] = jnp.zeros(pad_ref.shape, pad_ref.dtype)
        pad_ref[1:H + 1, 1:W + 1, :] = y1.reshape(H, W, B)

        # conv2: ConvTranspose2d(3x3, stride=1, pad=1):
        #   out[oh,ow] = b2 + sum_{kh,kw} y1[oh+1-kh, ow+1-kw] @ W2[:,:,kh,kw]
        acc = jnp.zeros((HW, D), jnp.float32)
        for kh in range(3):
            for kw in range(3):
                tap = pad_ref[2 - kh:2 - kh + H, 2 - kw:2 - kw + W, :]
                acc = acc + jnp.dot(tap.reshape(HW, B), w2_ref[kh, kw],
                                    preferred_element_type=jnp.float32)
        y2 = jnp.maximum(acc + b2_ref[...], 0.0)                   # (HW, D)

        # conv3: 1x1 ConvTranspose + relu, then identity residual add
        y3 = jnp.maximum(
            jnp.dot(y2, w3_ref[...], preferred_element_type=jnp.float32)
            + b3_ref[...], 0.0)
        o_ref[0] = (y3 + x).astype(o_ref.dtype)

    return kernel


def _make_stride2_kernel(H, W, D, B):
    HW = H * W

    def kernel(x_ref, w1_ref, b1_ref, w2_ref, b2_ref, w3_ref, b3_ref,
               wr_ref, br_ref, o_ref, pad_ref):
        x = x_ref[0]                                               # (HW, D)

        # conv1: 1x1 ConvTranspose + relu
        y1 = jnp.maximum(
            jnp.dot(x, w1_ref[...], preferred_element_type=jnp.float32)
            + b1_ref[...], 0.0)                                    # (HW, B)

        pad_ref[...] = jnp.zeros(pad_ref.shape, pad_ref.dtype)
        pad_ref[1:H + 1, 1:W + 1, :] = y1.reshape(H, W, B)

        # conv2: ConvTranspose2d(3x3, stride=2, pad=0), relu, crop [:-1,:-1].
        # Decompose the 2x-upsampled output into 4 parity planes (ph, pw):
        #   out[2a+ph, 2b+pw] = b2 + sum_{kh=2sh+ph, kw=2sw+pw} y1[a-sh, b-sw] @ W2[:,:,kh,kw]
        accs = {(ph, pw): jnp.zeros((HW, D), jnp.float32)
                for ph in range(2) for pw in range(2)}
        for kh in range(3):
            ph, sh = kh % 2, kh // 2
            for kw in range(3):
                pw, sw = kw % 2, kw // 2
                tap = pad_ref[1 - sh:1 - sh + H, 1 - sw:1 - sw + W, :]
                accs[(ph, pw)] = accs[(ph, pw)] + jnp.dot(
                    tap.reshape(HW, B), w2_ref[kh, kw],
                    preferred_element_type=jnp.float32)

        # conv3 (1x1) + relu and the conv_res (2x2, stride 2) residual are
        # pointwise per parity plane, so they fuse here as well.
        for ph in range(2):
            for pw in range(2):
                y2 = jnp.maximum(accs[(ph, pw)] + b2_ref[...], 0.0)
                y3 = jnp.maximum(
                    jnp.dot(y2, w3_ref[...], preferred_element_type=jnp.float32)
                    + b3_ref[...], 0.0)
                res = jnp.dot(x, wr_ref[ph, pw],
                              preferred_element_type=jnp.float32) + br_ref[...]
                o_ref[0, ph, pw] = (y3 + res).astype(o_ref.dtype)

    return kernel


# ----------------------------------------------------------------------------
# Forward pass equivalent to ImageDecoderResidualBlock.forward
# ----------------------------------------------------------------------------
def decoder_residual_block_forward(x_nchw, params, *, stride):
    assert stride in (1, 2), "module is only shape-consistent for stride in {1, 2}"
    N, D, H, W = x_nchw.shape
    B = params["w1"].shape[1]                      # bottleneck_depth
    HW = H * W

    # NCHW -> flattened NHWC rows (done once at the boundary; tiny input)
    x_rows = x_nchw.transpose(0, 2, 3, 1).reshape(N, HW, D)

    # ConvTranspose2d weights are (in, out, kh, kw); arrange as (in, out) mats.
    w1 = params["w1"].reshape(D, B)
    b1 = params["b1"].reshape(1, B)
    w2 = params["w2"].transpose(2, 3, 0, 1)        # (3, 3, B, D)
    b2 = params["b2"].reshape(1, D)
    w3 = params["w3"].reshape(D, D)
    b3 = params["b3"].reshape(1, D)

    x_spec = pl.BlockSpec((1, HW, D), lambda i: (i, 0, 0))
    w_specs = [
        pl.BlockSpec((D, B), lambda i: (0, 0)),
        pl.BlockSpec((1, B), lambda i: (0, 0)),
        pl.BlockSpec((3, 3, B, D), lambda i: (0, 0, 0, 0)),
        pl.BlockSpec((1, D), lambda i: (0, 0)),
        pl.BlockSpec((D, D), lambda i: (0, 0)),
        pl.BlockSpec((1, D), lambda i: (0, 0)),
    ]
    scratch = [pltpu.VMEM((H + 2, W + 2, B), jnp.float32)]
    cparams = pltpu.CompilerParams(dimension_semantics=("parallel",))

    if stride <= 1:
        out = pl.pallas_call(
            _make_stride1_kernel(H, W, D, B),
            out_shape=jax.ShapeDtypeStruct((N, HW, D), jnp.float32),
            grid_spec=pltpu.PrefetchScalarGridSpec(
                num_scalar_prefetch=0,
                grid=(N,),
                in_specs=[x_spec] + w_specs,
                out_specs=pl.BlockSpec((1, HW, D), lambda i: (i, 0, 0)),
                scratch_shapes=scratch),
            compiler_params=cparams,
        )(x_rows, w1, b1, w2, b2, w3, b3)
        return out.reshape(N, H, W, D).transpose(0, 3, 1, 2)

    # stride == 2: upsampling path with conv_res residual
    wr = params["wr"].transpose(2, 3, 0, 1)        # (2, 2, D, D)
    br = params["br"].reshape(1, D)
    out = pl.pallas_call(
        _make_stride2_kernel(H, W, D, B),
        out_shape=jax.ShapeDtypeStruct((N, 2, 2, HW, D), jnp.float32),
        grid_spec=pltpu.PrefetchScalarGridSpec(
            num_scalar_prefetch=0,
            grid=(N,),
            in_specs=[x_spec] + w_specs + [
                pl.BlockSpec((2, 2, D, D), lambda i: (0, 0, 0, 0)),
                pl.BlockSpec((1, D), lambda i: (0, 0)),
            ],
            out_specs=pl.BlockSpec((1, 2, 2, HW, D), lambda i: (i, 0, 0, 0, 0)),
            scratch_shapes=scratch),
        compiler_params=cparams,
    )(x_rows, w1, b1, w2, b2, w3, b3, wr, br)
    # (N, ph, pw, H*W, D) -> interleave parity planes -> (N, D, 2H, 2W)
    out = out.reshape(N, 2, 2, H, W, D).transpose(0, 3, 1, 4, 2, 5)
    out = out.reshape(N, 2 * H, 2 * W, D).transpose(0, 3, 1, 2)
    return out


# ----------------------------------------------------------------------------
# Pure-JAX reference (mirrors the PyTorch forward) for a correctness check.
# ----------------------------------------------------------------------------
def _conv_transpose_ref(x, w, b, stride, padding):
    # x: NCHW; w: torch ConvTranspose2d layout (in, out, kh, kw)
    k = w.shape[2]
    w_oihw = jnp.flip(w, (2, 3)).transpose(1, 0, 2, 3)
    y = lax.conv_general_dilated(
        x, w_oihw, window_strides=(1, 1),
        padding=[(k - 1 - padding, k - 1 - padding)] * 2,
        lhs_dilation=(stride, stride),
        dimension_numbers=("NCHW", "OIHW", "NCHW"),
        precision=lax.Precision.HIGHEST)
    return y + b.reshape(1, -1, 1, 1)


def reference_forward(x, params, *, stride):
    v = jax.nn.relu(_conv_transpose_ref(x, params["w1"], params["b1"], 1, 0))
    if stride > 1:
        v = jax.nn.relu(_conv_transpose_ref(v, params["w2"], params["b2"], 2, 0))
        v = v[:, :, :-1, :-1]
    else:
        v = jax.nn.relu(_conv_transpose_ref(v, params["w2"], params["b2"], 1, 1))
    v = jax.nn.relu(_conv_transpose_ref(v, params["w3"], params["b3"], 1, 0))
    res = x if stride <= 1 else _conv_transpose_ref(
        x, params["wr"], params["br"], stride, 0)
    return v + res


if __name__ == "__main__":
    key = jax.random.PRNGKey(0)
    N, depth, bneck, H, W = 2, 128, 64, 16, 16   # depth=128 -> lane-dense stores

    def init_params(k, stride):
        ks = jax.random.split(k, 8)
        p = {
            "w1": 0.01 * jax.random.normal(ks[0], (depth, bneck, 1, 1), jnp.float32),
            "b1": 0.01 * jax.random.normal(ks[1], (bneck,), jnp.float32),
            "w2": 0.01 * jax.random.normal(ks[2], (bneck, depth, 3, 3), jnp.float32),
            "b2": 0.01 * jax.random.normal(ks[3], (depth,), jnp.float32),
            "w3": 0.01 * jax.random.normal(ks[4], (depth, depth, 1, 1), jnp.float32),
            "b3": 0.01 * jax.random.normal(ks[5], (depth,), jnp.float32),
        }
        if stride > 1:
            p["wr"] = 0.01 * jax.random.normal(
                ks[6], (depth, depth, stride, stride), jnp.float32)
            p["br"] = 0.01 * jax.random.normal(ks[7], (depth,), jnp.float32)
        return p

    kx, k1, k2 = jax.random.split(key, 3)
    x = jax.random.normal(kx, (N, depth, H, W), jnp.float32)

    fwd = jax.jit(decoder_residual_block_forward, static_argnames=("stride",))

    # ---- stride == 1 path (identity residual) ----
    p1 = init_params(k1, 1)
    out1 = jax.block_until_ready(fwd(x, p1, stride=1))
    assert out1.shape == (N, depth, H, W), out1.shape
    ref1 = jax.block_until_ready(reference_forward(x, p1, stride=1))
    err1 = float(jnp.max(jnp.abs(out1 - ref1)))
    assert err1 < 1e-2, f"stride=1 max abs err vs reference: {err1}"

    # ---- stride == 2 path (2x upsampling + conv_res residual) ----
    p2 = init_params(k2, 2)
    out2 = jax.block_until_ready(fwd(x, p2, stride=2))
    assert out2.shape == (N, depth, 2 * H, 2 * W), out2.shape
    ref2 = jax.block_until_ready(reference_forward(x, p2, stride=2))
    err2 = float(jnp.max(jnp.abs(out2 - ref2)))
    assert err2 < 1e-2, f"stride=2 max abs err vs reference: {err2}"

    print("KERNEL_OK")
</pallas_src>

<mosaic_0001>
module attributes {stable_mosaic.version = 11 : i64} {
  func.func @kernel(%arg0: i32, %arg1: memref<1x256x128xf32, #tpu.memory_space<vmem>>, %arg2: memref<128x64xf32, #tpu.memory_space<vmem>>, %arg3: memref<1x64xf32, #tpu.memory_space<vmem>>, %arg4: memref<3x3x64x128xf32, #tpu.memory_space<vmem>>, %arg5: memref<1x128xf32, #tpu.memory_space<vmem>>, %arg6: memref<128x128xf32, #tpu.memory_space<vmem>>, %arg7: memref<1x128xf32, #tpu.memory_space<vmem>>, %arg8: memref<1x256x128xf32, #tpu.memory_space<vmem>>, %arg9: memref<18x18x64xf32, #tpu.memory_space<vmem>>) attributes {dimension_semantics = [#tpu.dimension_semantics<parallel>], iteration_bounds = array<i64: 2>, scalar_prefetch = 0 : i64, scratch_operands = 1 : i64, tpu.core_type = #tpu.core_type<tc>, window_params = [{transform_indices = @transform_0, window_bounds = array<i64: 1, 256, 128>}, {pipeline_mode = #tpu.pipeline_mode<synchronous>, transform_indices = @transform_1, window_bounds = array<i64: 128, 64>}, {pipeline_mode = #tpu.pipeline_mode<synchronous>, transform_indices = @transform_2, window_bounds = array<i64: 1, 64>}, {pipeline_mode = #tpu.pipeline_mode<synchronous>, transform_indices = @transform_3, window_bounds = array<i64: 3, 3, 64, 128>}, {pipeline_mode = #tpu.pipeline_mode<synchronous>, transform_indices = @transform_4, window_bounds = array<i64: 1, 128>}, {pipeline_mode = #tpu.pipeline_mode<synchronous>, transform_indices = @transform_5, window_bounds = array<i64: 128, 128>}, {pipeline_mode = #tpu.pipeline_mode<synchronous>, transform_indices = @transform_6, window_bounds = array<i64: 1, 128>}, {transform_indices = @transform_7, window_bounds = array<i64: 1, 256, 128>}]} {
    %c0 = arith.constant 0 : index
    %c0_0 = arith.constant 0 : index
    %c0_1 = arith.constant 0 : index
    %0 = vector.load %arg1[%c0, %c0_0, %c0_1] : memref<1x256x128xf32, #tpu.memory_space<vmem>>, vector<1x256x128xf32>
    %1 = vector.shape_cast %0 : vector<1x256x128xf32> to vector<256x128xf32>
    %c0_2 = arith.constant 0 : index
    %c0_3 = arith.constant 0 : index
    %2 = vector.load %arg2[%c0_2, %c0_3] : memref<128x64xf32, #tpu.memory_space<vmem>>, vector<128x64xf32>
    %cst = arith.constant dense<0.000000e+00> : vector<256x64xf32>
    %3 = tpu.matmul %1, %2, %cst {dimension_numbers = #tpu.dot_dimension_numbers<[1], [0], [0], [1], [0, 0, 1, 1], [], []>} : vector<256x128xf32>, vector<128x64xf32>, vector<256x64xf32> -> vector<256x64xf32>
    %c0_4 = arith.constant 0 : index
    %c0_5 = arith.constant 0 : index
    %4 = vector.load %arg3[%c0_4, %c0_5] : memref<1x64xf32, #tpu.memory_space<vmem>>, vector<1x64xf32>
    %5 = vector.broadcast %4 : vector<1x64xf32> to vector<256x64xf32>
    %6 = arith.addf %3, %5 : vector<256x64xf32>
    %cst_6 = arith.constant 0.000000e+00 : f32
    %7 = vector.broadcast %cst_6 : f32 to vector<256x64xf32>
    %8 = arith.maximumf %6, %7 : vector<256x64xf32>
    %cst_7 = arith.constant 0.000000e+00 : f32
    %9 = vector.broadcast %cst_7 : f32 to vector<18x18x64xf32>
    %c0_8 = arith.constant 0 : index
    %c0_9 = arith.constant 0 : index
    %c0_10 = arith.constant 0 : index
    %10 = vector.load %arg9[%c0_8, %c0_9, %c0_10] : memref<18x18x64xf32, #tpu.memory_space<vmem>>, vector<18x18x64xf32>
    tpu.vector_store %arg9[%c0_8, %c0_9, %c0_10], %9 {strides = array<i32>} : memref<18x18x64xf32, #tpu.memory_space<vmem>>, vector<18x18x64xf32>,
    %11 = vector.shape_cast %8 : vector<256x64xf32> to vector<16x16x64xf32>
    %c1 = arith.constant 1 : index
    %c1_11 = arith.constant 1 : index
    %c0_12 = arith.constant 0 : index
    %12 = vector.load %arg9[%c1, %c1_11, %c0_12] : memref<18x18x64xf32, #tpu.memory_space<vmem>>, vector<16x16x64xf32>
    tpu.vector_store %arg9[%c1, %c1_11, %c0_12], %11 {strides = array<i32>} : memref<18x18x64xf32, #tpu.memory_space<vmem>>, vector<16x16x64xf32>,
    %cst_13 = arith.constant 0.000000e+00 : f32
    %13 = vector.broadcast %cst_13 : f32 to vector<256x128xf32>
    %c2 = arith.constant 2 : index
    %c2_14 = arith.constant 2 : index
    %c0_15 = arith.constant 0 : index
    %14 = vector.load %arg9[%c2, %c2_14, %c0_15] : memref<18x18x64xf32, #tpu.memory_space<vmem>>, vector<16x16x64xf32>
    %15 = vector.shape_cast %14 : vector<16x16x64xf32> to vector<256x64xf32>
    %c0_16 = arith.constant 0 : index
    %c0_17 = arith.constant 0 : index
    %c0_18 = arith.constant 0 : index
    %c0_19 = arith.constant 0 : index
    %16 = vector.load %arg4[%c0_16, %c0_17, %c0_18, %c0_19] : memref<3x3x64x128xf32, #tpu.memory_space<vmem>>, vector<1x1x64x128xf32>
    %17 = vector.shape_cast %16 : vector<1x1x64x128xf32> to vector<64x128xf32>
    %cst_20 = arith.constant dense<0.000000e+00> : vector<256x128xf32>
    %18 = tpu.matmul %15, %17, %cst_20 {dimension_numbers = #tpu.dot_dimension_numbers<[1], [0], [0], [1], [0, 0, 1, 1], [], []>} : vector<256x64xf32>, vector<64x128xf32>, vector<256x128xf32> -> vector<256x128xf32>
    %19 = arith.addf %13, %18 : vector<256x128xf32>
    %c2_21 = arith.constant 2 : index
    %c1_22 = arith.constant 1 : index
    %c0_23 = arith.constant 0 : index
    %20 = vector.load %arg9[%c2_21, %c1_22, %c0_23] : memref<18x18x64xf32, #tpu.memory_space<vmem>>, vector<16x16x64xf32>
    %21 = vector.shape_cast %20 : vector<16x16x64xf32> to vector<256x64xf32>
    %c0_24 = arith.constant 0 : index
    %c1_25 = arith.constant 1 : index
    %c0_26 = arith.constant 0 : index
    %c0_27 = arith.constant 0 : index
    %22 = vector.load %arg4[%c0_24, %c1_25, %c0_26, %c0_27] : memref<3x3x64x128xf32, #tpu.memory_space<vmem>>, vector<1x1x64x128xf32>
    %23 = vector.shape_cast %22 : vector<1x1x64x128xf32> to vector<64x128xf32>
    %cst_28 = arith.constant dense<0.000000e+00> : vector<256x128xf32>
    %24 = tpu.matmul %21, %23, %cst_28 {dimension_numbers = #tpu.dot_dimension_numbers<[1], [0], [0], [1], [0, 0, 1, 1], [], []>} : vector<256x64xf32>, vector<64x128xf32>, vector<256x128xf32> -> vector<256x128xf32>
    %25 = arith.addf %19, %24 : vector<256x128xf32>
    %c2_29 = arith.constant 2 : index
    %c0_30 = arith.constant 0 : index
    %c0_31 = arith.constant 0 : index
    %26 = vector.load %arg9[%c2_29, %c0_30, %c0_31] : memref<18x18x64xf32, #tpu.memory_space<vmem>>, vector<16x16x64xf32>
    %27 = vector.shape_cast %26 : vector<16x16x64xf32> to vector<256x64xf32>
    %c0_32 = arith.constant 0 : index
    %c2_33 = arith.constant 2 : index
    %c0_34 = arith.constant 0 : index
    %c0_35 = arith.constant 0 : index
    %28 = vector.load %arg4[%c0_32, %c2_33, %c0_34, %c0_35] : memref<3x3x64x128xf32, #tpu.memory_space<vmem>>, vector<1x1x64x128xf32>
    %29 = vector.shape_cast %28 : vector<1x1x64x128xf32> to vector<64x128xf32>
    %cst_36 = arith.constant dense<0.000000e+00> : vector<256x128xf32>
    %30 = tpu.matmul %27, %29, %cst_36 {dimension_numbers = #tpu.dot_dimension_numbers<[1], [0], [0], [1], [0, 0, 1, 1], [], []>} : vector<256x64xf32>, vector<64x128xf32>, vector<256x128xf32> -> vector<256x128xf32>
    %31 = arith.addf %25, %30 : vector<256x128xf32>
    %c1_37 = arith.constant 1 : index
    %c2_38 = arith.constant 2 : index
    %c0_39 = arith.constant 0 : index
    %32 = vector.load %arg9[%c1_37, %c2_38, %c0_39] : memref<18x18x64xf32, #tpu.memory_space<vmem>>, vector<16x16x64xf32>
    %33 = vector.shape_cast %32 : vector<16x16x64xf32> to vector<256x64xf32>
    %c1_40 = arith.constant 1 : index
    %c0_41 = arith.constant 0 : index
    %c0_42 = arith.constant 0 : index
    %c0_43 = arith.constant 0 : index
    %34 = vector.load %arg4[%c1_40, %c0_41, %c0_42, %c0_43] : memref<3x3x64x128xf32, #tpu.memory_space<vmem>>, vector<1x1x64x128xf32>
    %35 = vector.shape_cast %34 : vector<1x1x64x128xf32> to vector<64x128xf32>
    %cst_44 = arith.constant dense<0.000000e+00> : vector<256x128xf32>
    %36 = tpu.matmul %33, %35, %cst_44 {dimension_numbers = #tpu.dot_dimension_numbers<[1], [0], [0], [1], [0, 0, 1, 1], [], []>} : vector<256x64xf32>, vector<64x128xf32>, vector<256x128xf32> -> vector<256x128xf32>
    %37 = arith.addf %31, %36 : vector<256x128xf32>
    %c1_45 = arith.constant 1 : index
    %c1_46 = arith.constant 1 : index
    %c0_47 = arith.constant 0 : index
    %38 = vector.load %arg9[%c1_45, %c1_46, %c0_47] : memref<18x18x64xf32, #tpu.memory_space<vmem>>, vector<16x16x64xf32>
    %39 = vector.shape_cast %38 : vector<16x16x64xf32> to vector<256x64xf32>
    %c1_48 = arith.constant 1 : index
    %c1_49 = arith.constant 1 : index
    %c0_50 = arith.constant 0 : index
    %c0_51 = arith.constant 0 : index
    %40 = vector.load %arg4[%c1_48, %c1_49, %c0_50, %c0_51] : memref<3x3x64x128xf32, #tpu.memory_space<vmem>>, vector<1x1x64x128xf32>
    %41 = vector.shape_cast %40 : vector<1x1x64x128xf32> to vector<64x128xf32>
    %cst_52 = arith.constant dense<0.000000e+00> : vector<256x128xf32>
    %42 = tpu.matmul %39, %41, %cst_52 {dimension_numbers = #tpu.dot_dimension_numbers<[1], [0], [0], [1], [0, 0, 1, 1], [], []>} : vector<256x64xf32>, vector<64x128xf32>, vector<256x128xf32> -> vector<256x128xf32>
    %43 = arith.addf %37, %42 : vector<256x128xf32>
    %c1_53 = arith.constant 1 : index
    %c0_54 = arith.constant 0 : index
    %c0_55 = arith.constant 0 : index
    %44 = vector.load %arg9[%c1_53, %c0_54, %c0_55] : memref<18x18x64xf32, #tpu.memory_space<vmem>>, vector<16x16x64xf32>
    %45 = vector.shape_cast %44 : vector<16x16x64xf32> to vector<256x64xf32>
    %c1_56 = arith.constant 1 : index
    %c2_57 = arith.constant 2 : index
    %c0_58 = arith.constant 0 : index
    %c0_59 = arith.constant 0 : index
    %46 = vector.load %arg4[%c1_56, %c2_57, %c0_58, %c0_59] : memref<3x3x64x128xf32, #tpu.memory_space<vmem>>, vector<1x1x64x128xf32>
    %47 = vector.shape_cast %46 : vector<1x1x64x128xf32> to vector<64x128xf32>
    %cst_60 = arith.constant dense<0.000000e+00> : vector<256x128xf32>
    %48 = tpu.matmul %45, %47, %cst_60 {dimension_numbers = #tpu.dot_dimension_numbers<[1], [0], [0], [1], [0, 0, 1, 1], [], []>} : vector<256x64xf32>, vector<64x128xf32>, vector<256x128xf32> -> vector<256x128xf32>
    %49 = arith.addf %43, %48 : vector<256x128xf32>
    %c0_61 = arith.constant 0 : index
    %c2_62 = arith.constant 2 : index
    %c0_63 = arith.constant 0 : index
    %50 = vector.load %arg9[%c0_61, %c2_62, %c0_63] : memref<18x18x64xf32, #tpu.memory_space<vmem>>, vector<16x16x64xf32>
    %51 = vector.shape_cast %50 : vector<16x16x64xf32> to vector<256x64xf32>
    %c2_64 = arith.constant 2 : index
    %c0_65 = arith.constant 0 : index
    %c0_66 = arith.constant 0 : index
    %c0_67 = arith.constant 0 : index
    %52 = vector.load %arg4[%c2_64, %c0_65, %c0_66, %c0_67] : memref<3x3x64x128xf32, #tpu.memory_space<vmem>>, vector<1x1x64x128xf32>
    %53 = vector.shape_cast %52 : vector<1x1x64x128xf32> to vector<64x128xf32>
    %cst_68 = arith.constant dense<0.000000e+00> : vector<256x128xf32>
    %54 = tpu.matmul %51, %53, %cst_68 {dimension_numbers = #tpu.dot_dimension_numbers<[1], [0], [0], [1], [0, 0, 1, 1], [], []>} : vector<256x64xf32>, vector<64x128xf32>, vector<256x128xf32> -> vector<256x128xf32>
    %55 = arith.addf %49, %54 : vector<256x128xf32>
    %c0_69 = arith.constant 0 : index
    %c1_70 = arith.constant 1 : index
    %c0_71 = arith.constant 0 : index
    %56 = vector.load %arg9[%c0_69, %c1_70, %c0_71] : memref<18x18x64xf32, #tpu.memory_space<vmem>>, vector<16x16x64xf32>
    %57 = vector.shape_cast %56 : vector<16x16x64xf32> to vector<256x64xf32>
    %c2_72 = arith.constant 2 : index
    %c1_73 = arith.constant 1 : index
    %c0_74 = arith.constant 0 : index
    %c0_75 = arith.constant 0 : index
    %58 = vector.load %arg4[%c2_72, %c1_73, %c0_74, %c0_75] : memref<3x3x64x128xf32, #tpu.memory_space<vmem>>, vector<1x1x64x128xf32>
    %59 = vector.shape_cast %58 : vector<1x1x64x128xf32> to vector<64x128xf32>
    %cst_76 = arith.constant dense<0.000000e+00> : vector<256x128xf32>
    %60 = tpu.matmul %57, %59, %cst_76 {dimension_numbers = #tpu.dot_dimension_numbers<[1], [0], [0], [1], [0, 0, 1, 1], [], []>} : vector<256x64xf32>, vector<64x128xf32>, vector<256x128xf32> -> vector<256x128xf32>
    %61 = arith.addf %55, %60 : vector<256x128xf32>
    %c0_77 = arith.constant 0 : index
    %c0_78 = arith.constant 0 : index
    %c0_79 = arith.constant 0 : index
    %62 = vector.load %arg9[%c0_77, %c0_78, %c0_79] : memref<18x18x64xf32, #tpu.memory_space<vmem>>, vector<16x16x64xf32>
    %63 = vector.shape_cast %62 : vector<16x16x64xf32> to vector<256x64xf32>
    %c2_80 = arith.constant 2 : index
    %c2_81 = arith.constant 2 : index
    %c0_82 = arith.constant 0 : index
    %c0_83 = arith.constant 0 : index
    %64 = vector.load %arg4[%c2_80, %c2_81, %c0_82, %c0_83] : memref<3x3x64x128xf32, #tpu.memory_space<vmem>>, vector<1x1x64x128xf32>
    %65 = vector.shape_cast %64 : vector<1x1x64x128xf32> to vector<64x128xf32>
    %cst_84 = arith.constant dense<0.000000e+00> : vector<256x128xf32>
    %66 = tpu.matmul %63, %65, %cst_84 {dimension_numbers = #tpu.dot_dimension_numbers<[1], [0], [0], [1], [0, 0, 1, 1], [], []>} : vector<256x64xf32>, vector<64x128xf32>, vector<256x128xf32> -> vector<256x128xf32>
    %67 = arith.addf %61, %66 : vector<256x128xf32>
    %c0_85 = arith.constant 0 : index
    %c0_86 = arith.constant 0 : index
    %68 = vector.load %arg5[%c0_85, %c0_86] : memref<1x128xf32, #tpu.memory_space<vmem>>, vector<1x128xf32>
    %69 = vector.broadcast %68 : vector<1x128xf32> to vector<256x128xf32>
    %70 = arith.addf %67, %69 : vector<256x128xf32>
    %cst_87 = arith.constant 0.000000e+00 : f32
    %71 = vector.broadcast %cst_87 : f32 to vector<256x128xf32>
    %72 = arith.maximumf %70, %71 : vector<256x128xf32>
    %c0_88 = arith.constant 0 : index
    %c0_89 = arith.constant 0 : index
    %73 = vector.load %arg6[%c0_88, %c0_89] : memref<128x128xf32, #tpu.memory_space<vmem>>, vector<128x128xf32>
    %cst_90 = arith.constant dense<0.000000e+00> : vector<256x128xf32>
    %74 = tpu.matmul %72, %73, %cst_90 {dimension_numbers = #tpu.dot_dimension_numbers<[1], [0], [0], [1], [0, 0, 1, 1], [], []>} : vector<256x128xf32>, vector<128x128xf32>, vector<256x128xf32> -> vector<256x128xf32>
    %c0_91 = arith.constant 0 : index
    %c0_92 = arith.constant 0 : index
    %75 = vector.load %arg7[%c0_91, %c0_92] : memref<1x128xf32, #tpu.memory_space<vmem>>, vector<1x128xf32>
    %76 = vector.broadcast %75 : vector<1x128xf32> to vector<256x128xf32>
    %77 = arith.addf %74, %76 : vector<256x128xf32>
    %cst_93 = arith.constant 0.000000e+00 : f32
    %78 = vector.broadcast %cst_93 : f32 to vector<256x128xf32>
    %79 = arith.maximumf %77, %78 : vector<256x128xf32>
    %80 = arith.addf %79, %1 : vector<256x128xf32>
    %c0_94 = arith.constant 0 : index
    %c0_95 = arith.constant 0 : index
    %c0_96 = arith.constant 0 : index
    %81 = vector.load %arg8[%c0_94, %c0_95, %c0_96] : memref<1x256x128xf32, #tpu.memory_space<vmem>>, vector<1x256x128xf32>
    %82 = vector.shape_cast %81 : vector<1x256x128xf32> to vector<256x128xf32>
    %83 = vector.shape_cast %80 : vector<256x128xf32> to vector<1x256x128xf32>
    tpu.vector_store %arg8[%c0_94, %c0_95, %c0_96], %83 {strides = array<i32>} : memref<1x256x128xf32, #tpu.memory_space<vmem>>, vector<1x256x128xf32>,
    return
  }
  func.func @transform_0(%arg0: i32) -> (i32, i32, i32) {
    %c0_i32 = arith.constant 0 : i32
    %c0_i32_0 = arith.constant 0 : i32
    %c0_i32_1 = arith.constant 0 : i32
    return %arg0, %c0_i32, %c0_i32_0 : i32, i32, i32
  }
  func.func @transform_1(%arg0: i32) -> (i32, i32) {
    %c0_i32 = arith.constant 0 : i32
    %c0_i32_0 = arith.constant 0 : i32
    %c0_i32_1 = arith.constant 0 : i32
    return %c0_i32, %c0_i32_0 : i32, i32
  }
  func.func @transform_2(%arg0: i32) -> (i32, i32) {
    %c0_i32 = arith.constant 0 : i32
    %c0_i32_0 = arith.constant 0 : i32
    %c0_i32_1 = arith.constant 0 : i32
    return %c0_i32, %c0_i32_0 : i32, i32
  }
  func.func @transform_3(%arg0: i32) -> (i32, i32, i32, i32) {
    %c0_i32 = arith.constant 0 : i32
    %c0_i32_0 = arith.constant 0 : i32
    %c0_i32_1 = arith.constant 0 : i32
    %c0_i32_2 = arith.constant 0 : i32
    %c0_i32_3 = arith.constant 0 : i32
    return %c0_i32, %c0_i32_0, %c0_i32_1, %c0_i32_2 : i32, i32, i32, i32
  }
  func.func @transform_4(%arg0: i32) -> (i32, i32) {
    %c0_i32 = arith.constant 0 : i32
    %c0_i32_0 = arith.constant 0 : i32
    %c0_i32_1 = arith.constant 0 : i32
    return %c0_i32, %c0_i32_0 : i32, i32
  }
  func.func @transform_5(%arg0: i32) -> (i32, i32) {
    %c0_i32 = arith.constant 0 : i32
    %c0_i32_0 = arith.constant 0 : i32
    %c0_i32_1 = arith.constant 0 : i32
    return %c0_i32, %c0_i32_0 : i32, i32
  }
  func.func @transform_6(%arg0: i32) -> (i32, i32) {
    %c0_i32 = arith.constant 0 : i32
    %c0_i32_0 = arith.constant 0 : i32
    %c0_i32_1 = arith.constant 0 : i32
    return %c0_i32, %c0_i32_0 : i32, i32
  }
  func.func @transform_7(%arg0: i32) -> (i32, i32, i32) {
    %c0_i32 = arith.constant 0 : i32
    %c0_i32_0 = arith.constant 0 : i32
    %c0_i32_1 = arith.constant 0 : i32
    return %arg0, %c0_i32, %c0_i32_0 : i32, i32, i32
  }
}

</mosaic_0001>

<llo_original>
// kernel: decoder_residual_block_forward.1
$region0: #{decoder_residual_block_forward.1}
  #allocation0 [shape = 'u32[]', space=smem, size = 0x4, offset = 0x4, fixed_abs, tag = 'smem constant byte address 0x4 - core index']
  #allocation1 [shape = 'u32[144,128]{1,0:T(1,128)}', space=vmem, size = 0x12000, scoped, tag = 'internal scratch']
  #allocation2 [shape = 'f32[18,18,64]{2,1,0:T(8,128)}', space=vmem, size = 0x36000, scoped, tag = 'scratch operand']
  %s0 = inlined_call_operand.hbm [shape: f32[2,256,128], index: 0, kind: input, shape index: {}]
  %s1 = inlined_call_operand.vmem [shape: f32[128,64], index: 1, kind: input, shape index: {}]
  %s2 = inlined_call_operand.vmem [shape: f32[1,64], index: 2, kind: input, shape index: {}]
  %s3 = inlined_call_operand.hbm [shape: f32[3,3,64,128], index: 3, kind: input, shape index: {}]
  %s4 = inlined_call_operand.vmem [shape: f32[1,128], index: 4, kind: input, shape index: {}]
  %s5 = inlined_call_operand.vmem [shape: f32[128,128], index: 5, kind: input, shape index: {}]
  %s6 = inlined_call_operand.vmem [shape: f32[1,128], index: 6, kind: input, shape index: {}]
  %s7 = inlined_call_operand.hbm [shape: f32[2,256,128], index: 7, kind: output, shape index: {}]
  %s8 = sld [smem:[#allocation0]]
  $region69: #{decoder_residual_block_forward.1} parent=0
    _
  %s10 = ssub.s32 1, %s8
  %s11 = scalar_select 0, %s10, %s8
  $region1: #{decoder_residual_block_forward.1} parent=0
    #allocation3 [shape = 'u8[262144]{0}', space=vmem, size = 0x40000, scoped, tag = 'input window, operand 0']
    #allocation4 [shape = 's32[2]{0}', space=sflag, size = 0x8, scoped, tag = 'scoped memory for decoder_residual_block_forward.1']
    #allocation5 [shape = 's32[2]{0}', space=sflag, size = 0x8, scoped, tag = 'scoped memory for decoder_residual_block_forward.1']
    #allocation6 [shape = 'u8[294912]{0}', space=vmem, size = 0x48000, scoped, tag = 'input window, operand 3, single buffered']
    #allocation7 [shape = 's32[1]{0}', space=sflag, size = 0x4, scoped, tag = 'scoped memory for decoder_residual_block_forward.1']
    #allocation8 [shape = 'u8[262144]{0}', space=vmem, size = 0x40000, scoped, tag = 'output window, operand 0']
    %12 = vsyncpa [#allocation4], 0
    %s13 = scalar_lea.sflag [#allocation4], 1
    %14 = vsyncpa %s13, 0
    %15 = vsyncpa [#allocation7], 0
    %16 = vsyncpa [#allocation5], 0
    %s17 = scalar_lea.sflag [#allocation5], 1
    %18 = vsyncpa %s17, 0
    loop: start=0, step=1, limit=4
    $region2: #{decoder_residual_block_forward.1} parent=1 // loop_pre_header
      _
    $region3: #{decoder_residual_block_forward.1} parent=1 // loop_header
      %s20 = sphi 0, %s24
      %p21 = scmp.ge.s32.totalorder %s20, 4
      %s30 = sphi 0, %s32
      %s33 = sphi 0, %s30
      %s34 = sphi 0, %s33
      %s50 = sphi 0, %s34
      %s54 = sphi 0, %s54
      %s56 = sphi 0, %s54
      %s57 = sphi 0, %s56
      %s71 = sphi 0, %s57
      %s75 = sphi 0, %s75
      %s77 = sphi 0, %s75
      %s78 = sphi 0, %s77
      %s92 = sphi 0, %s78
      %s96 = sphi 0, %s96
      %s98 = sphi 0, %s96
      %s99 = sphi 0, %s98
      %s113 = sphi 0, %s99
      %s117 = sphi 0, %s117
      %s119 = sphi 0, %s117
      %s120 = sphi 0, %s119
      %s134 = sphi 0, %s120
      %s138 = sphi 0, %s138
      %s140 = sphi 0, %s138
      %s141 = sphi 0, %s140
      %s155 = sphi 0, %s141
      %s159 = sphi 0, %s159
      %s161 = sphi 0, %s159
      %s162 = sphi 0, %s161
      %s176 = sphi 0, %s162
      %s182 = sphi 0, %s184
      %s185 = sphi 0, %s182
      %s186 = sphi 0, %s185
      %s202 = sphi 0, %s186
    $region4: #{decoder_residual_block_forward.1} parent=1 // loop_header_branch
      %23 = sbr.rel (%p21) target = $region8
    $region5: #{decoder_residual_block_forward.1} parent=1 // loop_body
      %s25 = ssub.s32 %s20, 1
      %s26 = ssub.s32 %s20, 2
      %s27 = sadd.s32 %s20, 1
      %s28 = ssub.s32 %s20, %s27
      %p29 = scmp.eq.s32.totalorder %s28, 0
      %s31 = sadd.s32 %s30, 1
      %s32 = scalar_select %p29, %s30, %s31
      %p35 = pneg %p29
      %p36 = scmp.eq.s32.totalorder %s20, 1
      %p37 = por %p35, %p36
      %p38 = scmp.ne.s32.totalorder %s30, %s33
      %p39 = scmp.eq.s32.totalorder %s20, 0
      %p40 = por %p38, %p39
      %p41 = scmp.ne.s32.totalorder %s30, %s33
      %p42 = scmp.eq.s32.totalorder %s25, 1
      %p43 = por %p41, %p42
      %p44 = scmp.ne.s32.totalorder %s33, %s34
      %p45 = scmp.eq.s32.totalorder %s25, 0
      %p46 = por %p44, %p45
      %p47 = scmp.ne.s32.totalorder %s33, %s34
      %p48 = scmp.eq.s32.totalorder %s26, 1
      %p49 = por %p47, %p48
      %p51 = scmp.ne.s32.totalorder %s34, %s50
      %p52 = scmp.eq.s32.totalorder %s26, 0
      %p53 = por %p51, %p52
      %s55 = sadd.s32 %s54, 1
      %p58 = scmp.eq.s32.totalorder %s20, 1
      %p59 = scmp.ne.s32.totalorder %s54, %s56
      %p60 = scmp.eq.s32.totalorder %s20, 0
      %p61 = por %p59, %p60
      %p62 = scmp.ne.s32.totalorder %s54, %s56
      %p63 = scmp.eq.s32.totalorder %s25, 1
      %p64 = por %p62, %p63
      %p65 = scmp.ne.s32.totalorder %s56, %s57
      %p66 = scmp.eq.s32.totalorder %s25, 0
      %p67 = por %p65, %p66
      %p68 = scmp.ne.s32.totalorder %s56, %s57
      %p69 = scmp.eq.s32.totalorder %s26, 1
      %p70 = por %p68, %p69
      %p72 = scmp.ne.s32.totalorder %s57, %s71
      %p73 = scmp.eq.s32.totalorder %s26, 0
      %p74 = por %p72, %p73
      %s76 = sadd.s32 %s75, 1
      %p79 = scmp.eq.s32.totalorder %s20, 1
      %p80 = scmp.ne.s32.totalorder %s75, %s77
      %p81 = scmp.eq.s32.totalorder %s20, 0
      %p82 = por %p80, %p81
      %p83 = scmp.ne.s32.totalorder %s75, %s77
      %p84 = scmp.eq.s32.totalorder %s25, 1
      %p85 = por %p83, %p84
      %p86 = scmp.ne.s32.totalorder %s77, %s78
      %p87 = scmp.eq.s32.totalorder %s25, 0
      %p88 = por %p86, %p87
      %p89 = scmp.ne.s32.totalorder %s77, %s78
      %p90 = scmp.eq.s32.totalorder %s26, 1
      %p91 = por %p89, %p90
      %p93 = scmp.ne.s32.totalorder %s78, %s92
      %p94 = scmp.eq.s32.totalorder %s26, 0
      %p95 = por %p93, %p94
      %s97 = sadd.s32 %s96, 1
      %p100 = scmp.eq.s32.totalorder %s20, 1
      %p101 = scmp.ne.s32.totalorder %s96, %s98
      %p102 = scmp.eq.s32.totalorder %s20, 0
      %p103 = por %p101, %p102
      %p104 = scmp.ne.s32.totalorder %s96, %s98
      %p105 = scmp.eq.s32.totalorder %s25, 1
      %p106 = por %p104, %p105
      %p107 = scmp.ne.s32.totalorder %s98, %s99
      %p108 = scmp.eq.s32.totalorder %s25, 0
      %p109 = por %p107, %p108
      %p110 = scmp.ne.s32.totalorder %s98, %s99
      %p111 = scmp.eq.s32.totalorder %s26, 1
      %p112 = por %p110, %p111
      %p114 = scmp.ne.s32.totalorder %s99, %s113
      %p115 = scmp.eq.s32.totalorder %s26, 0
      %p116 = por %p114, %p115
      %s118 = sadd.s32 %s117, 1
      %p121 = scmp.eq.s32.totalorder %s20, 1
      %p122 = scmp.ne.s32.totalorder %s117, %s119
      %p123 = scmp.eq.s32.totalorder %s20, 0
      %p124 = por %p122, %p123
      %p125 = scmp.ne.s32.totalorder %s117, %s119
      %p126 = scmp.eq.s32.totalorder %s25, 1
      %p127 = por %p125, %p126
      %p128 = scmp.ne.s32.totalorder %s119, %s120
      %p129 = scmp.eq.s32.totalorder %s25, 0
      %p130 = por %p128, %p129
      %p131 = scmp.ne.s32.totalorder %s119, %s120
      %p132 = scmp.eq.s32.totalorder %s26, 1
      %p133 = por %p131, %p132
      %p135 = scmp.ne.s32.totalorder %s120, %s134
      %p136 = scmp.eq.s32.totalorder %s26, 0
      %p137 = por %p135, %p136
      %s139 = sadd.s32 %s138, 1
      %p142 = scmp.eq.s32.totalorder %s20, 1
      %p143 = scmp.ne.s32.totalorder %s138, %s140
      %p144 = scmp.eq.s32.totalorder %s20, 0
      %p145 = por %p143, %p144
      %p146 = scmp.ne.s32.totalorder %s138, %s140
      %p147 = scmp.eq.s32.totalorder %s25, 1
      %p148 = por %p146, %p147
      %p149 = scmp.ne.s32.totalorder %s140, %s141
      %p150 = scmp.eq.s32.totalorder %s25, 0
      %p151 = por %p149, %p150
      %p152 = scmp.ne.s32.totalorder %s140, %s141
      %p153 = scmp.eq.s32.totalorder %s26, 1
      %p154 = por %p152, %p153
      %p156 = scmp.ne.s32.totalorder %s141, %s155
      %p157 = scmp.eq.s32.totalorder %s26, 0
      %p158 = por %p156, %p157
      %s160 = sadd.s32 %s159, 1
      %p163 = scmp.eq.s32.totalorder %s20, 1
      %p164 = scmp.ne.s32.totalorder %s159, %s161
      %p165 = scmp.eq.s32.totalorder %s20, 0
      %p166 = por %p164, %p165
      %p167 = scmp.ne.s32.totalorder %s159, %s161
      %p168 = scmp.eq.s32.totalorder %s25, 1
      %p169 = por %p167, %p168
      %p170 = scmp.ne.s32.totalorder %s161, %s162
      %p171 = scmp.eq.s32.totalorder %s25, 0
      %p172 = por %p170, %p171
      %p173 = scmp.ne.s32.totalorder %s161, %s162
      %p174 = scmp.eq.s32.totalorder %s26, 1
      %p175 = por %p173, %p174
      %p177 = scmp.ne.s32.totalorder %s162, %s176
      %p178 = scmp.eq.s32.totalorder %s26, 0
      %p179 = por %p177, %p178
      %s180 = ssub.s32 %s20, %s27
      %p181 = scmp.eq.s32.totalorder %s180, 0
      %s183 = sadd.s32 %s182, 1
      %s184 = scalar_select %p181, %s182, %s183
      %p187 = pneg %p181
      %p188 = scmp.eq.s32.totalorder %s20, 1
      %p189 = por %p187, %p188
      %p190 = scmp.ne.s32.totalorder %s182, %s185
      %p191 = scmp.eq.s32.totalorder %s20, 0
      %p192 = por %p190, %p191
      %p193 = scmp.ne.s32.totalorder %s182, %s185
      %p194 = scmp.eq.s32.totalorder %s25, 1
      %p195 = por %p193, %p194
      %p196 = scmp.ne.s32.totalorder %s185, %s186
      %p197 = scmp.eq.s32.totalorder %s25, 0
      %p198 = por %p196, %p197
      %p199 = scmp.ne.s32.totalorder %s185, %s186
      %p200 = scmp.eq.s32.totalorder %s26, 1
      %p201 = por %p199, %p200
      %p203 = scmp.ne.s32.totalorder %s186, %s202
      %p204 = scmp.eq.s32.totalorder %s26, 0
      %p205 = por %p203, %p204
      %p206 = scmp.le.s32.totalorder 1, %s20
      %p207 = scmp.lt.s32.totalorder %s20, 3
      %p208 = pnand %p206, %p207
      %p209 = pneg %p208
      // Predicated region
      $region9: #{decoder_residual_block_forward.1} parent=5 // pred_check
        _
      $region10: #{decoder_residual_block_forward.1} parent=5 // pred_check_branch
        %211 = sbr.rel (%p208) target = $region12
      $region11: #{decoder_residual_block_forward.1} parent=5 // pred_region
        %s212 = ssub.s32 %s20, 1
        // Predicated region
        $region13: #{decoder_residual_block_forward.1} parent=11 // pred_check
          %p213 = pneg %p67
        $region14: #{decoder_residual_block_forward.1} parent=11 // pred_check_branch
          %215 = sbr.rel (%p213) target = $region16
        $region15: #{decoder_residual_block_forward.1} parent=11 // pred_region
          _
        $region16: #{decoder_residual_block_forward.1} parent=11 // pred_fallthru
          _
        // Predicated region
        $region17: #{decoder_residual_block_forward.1} parent=11 // pred_check
          %p216 = pneg %p88
        $region18: #{decoder_residual_block_forward.1} parent=11 // pred_check_branch
          %218 = sbr.rel (%p216) target = $region20
        $region19: #{decoder_residual_block_forward.1} parent=11 // pred_region
          _
        $region20: #{decoder_residual_block_forward.1} parent=11 // pred_fallthru
          _
        // Predicated region
        $region21: #{decoder_residual_block_forward.1} parent=11 // pred_check
          %p219 = pneg %p109
        $region22: #{decoder_residual_block_forward.1} parent=11 // pred_check_branch
          %221 = sbr.rel (%p219) target = $region24
        $region23: #{decoder_residual_block_forward.1} parent=11 // pred_region
          %s223 = ssub.s32 9216, 9216
          %224 = vsyncadd [#allocation7], %s223
          %s225 = sshll.u32 [#allocation6], 4
          %s226 = int_to_ptr.vmem [resolvable:$true] %s225
          %231 = dma.hbm_to_vmem [thread:$0]  %s3, 9216, %s226, [#allocation7], 128, 128, 8
        $region24: #{decoder_residual_block_forward.1} parent=11 // pred_fallthru
          _
        // Predicated region
        $region25: #{decoder_residual_block_forward.1} parent=11 // pred_check
          %p232 = pneg %p130
        $region26: #{decoder_residual_block_forward.1} parent=11 // pred_check_branch
          %234 = sbr.rel (%p232) target = $region28
        $region27: #{decoder_residual_block_forward.1} parent=11 // pred_region
          _
        $region28: #{decoder_residual_block_forward.1} parent=11 // pred_fallthru
          _
        // Predicated region
        $region29: #{decoder_residual_block_forward.1} parent=11 // pred_check
          %p235 = pneg %p151
        $region30: #{decoder_residual_block_forward.1} parent=11 // pred_check_branch
          %237 = sbr.rel (%p235) target = $region32
        $region31: #{decoder_residual_block_forward.1} parent=11 // pred_region
          _
        $region32: #{decoder_residual_block_forward.1} parent=11 // pred_fallthru
          _
        // Predicated region
        $region33: #{decoder_residual_block_forward.1} parent=11 // pred_check
          %p238 = pneg %p172
        $region34: #{decoder_residual_block_forward.1} parent=11 // pred_check_branch
          %240 = sbr.rel (%p238) target = $region36
        $region35: #{decoder_residual_block_forward.1} parent=11 // pred_region
          _
        $region36: #{decoder_residual_block_forward.1} parent=11 // pred_fallthru
          _
      $region12: #{decoder_residual_block_forward.1} parent=5 // pred_fallthru
        _
      %p241 = scmp.lt.s32.totalorder %s20, 2
      // Predicated region
      $region37: #{decoder_residual_block_forward.1} parent=5 // pred_check
        %p242 = pneg %p241
      $region38: #{decoder_residual_block_forward.1} parent=5 // pred_check_branch
        %244 = sbr.rel (%p242) target = $region40
      $region39: #{decoder_residual_block_forward.1} parent=5 // pred_region
        // Predicated region
        $region41: #{decoder_residual_block_forward.1} parent=39 // pred_check
          %p245 = pneg %p40
        $region42: #{decoder_residual_block_forward.1} parent=39 // pred_check_branch
          %247 = sbr.rel (%p245) target = $region44
        $region43: #{decoder_residual_block_forward.1} parent=39 // pred_region
          %s248 = sand.u32 %s30, 1
          %s249 = scalar_lea.sflag [#allocation4], %s248
          %s250 = sand.u32 %s30, 1
          %s251 = smul.addr %s250, 256
          %s252 = scalar_lea.vmem [#allocation3], %s251
          %s254 = ssub.s32 4096, 4096
          %255 = vsyncadd %s249, %s254
          %s256 = smul.addr %s20, 32
          %s257 = smul.addr %s256, 128
          %s258 = scalar_lea.hbm %s0, %s257
          %s259 = sshll.u32 %s252, 4
          %s260 = int_to_ptr.vmem [resolvable:$true] %s259
          %265 = dma.hbm_to_vmem [thread:$0]  %s258, 4096, %s260, %s249, 128, 128, 8
        $region44: #{decoder_residual_block_forward.1} parent=39 // pred_fallthru
          _
      $region40: #{decoder_residual_block_forward.1} parent=5 // pred_fallthru
        _
      %p266 = scmp.le.s32.totalorder 1, %s20
      %p267 = scmp.lt.s32.totalorder %s20, 3
      %p268 = pnand %p266, %p267
      %p269 = pneg %p268
      // Predicated region
      $region45: #{decoder_residual_block_forward.1} parent=5 // pred_check
        _
      $region46: #{decoder_residual_block_forward.1} parent=5 // pred_check_branch
        %271 = sbr.rel (%p268) target = $region48
      $region47: #{decoder_residual_block_forward.1} parent=5 // pred_region
        %s272 = ssub.s32 %s20, 1
        %s273 = sand.u32 %s33, 1
        %s274 = scalar_lea.sflag [#allocation4], %s273
        %s275 = sand.u32 %s33, 1
        %s276 = smul.addr %s275, 256
        %s277 = scalar_lea.vmem [#allocation3], %s276
        // Predicated region
        $region49: #{decoder_residual_block_forward.1} parent=47 // pred_check
          %p278 = pneg %p46
        $region50: #{decoder_residual_block_forward.1} parent=47 // pred_check_branch
          %280 = sbr.rel (%p278) target = $region52
        $region51: #{decoder_residual_block_forward.1} parent=47 // pred_region
          %281 = dma.done %s274, 4096
        $region52: #{decoder_residual_block_forward.1} parent=47 // pred_fallthru
          _
        // Predicated region
        $region53: #{decoder_residual_block_forward.1} parent=47 // pred_check
          %p282 = pneg %p109
        $region54: #{decoder_residual_block_forward.1} parent=47 // pred_check_branch
          %284 = sbr.rel (%p282) target = $region56
        $region55: #{decoder_residual_block_forward.1} parent=47 // pred_region
          %285 = dma.done [#allocation7], 9216
        $region56: #{decoder_residual_block_forward.1} parent=47 // pred_fallthru
          _
        %s286 = sand.u32 %s33, 1
        %s287 = scalar_lea.sflag [#allocation4], %s286
        %s288 = sand.u32 %s33, 1
        %s289 = smul.addr %s288, 256
        %s290 = scalar_lea.vmem [#allocation3], %s289
        %p291 = pneg %p46
        %p292 = pneg %p43
        %p293 = pneg %p67
        %p294 = pneg %p64
        %p295 = pneg %p88
        %p296 = pneg %p85
        %p297 = pneg %p109
        %p298 = pneg %p106
        %p299 = pneg %p130
        %p300 = pneg %p127
        %p301 = pneg %p151
        %p302 = pneg %p148
        %p303 = pneg %p172
        %p304 = pneg %p169
        %p305 = pneg %p198
        %p306 = pneg %p195
        %s307 = sand.u32 %s185, 1
        %s308 = scalar_lea.sflag [#allocation5], %s307
        %s309 = sand.u32 %s185, 1
        %s310 = smul.addr %s309, 256
        %s311 = scalar_lea.vmem [#allocation8], %s310
        %v312 = vld [vmem:[%s277] sm:$0xff]
        %v313 = vld [vmem:[%s277 + $0x8] sm:$0xff]
        %v314 = vld [vmem:[%s277 + $0x10] sm:$0xff]
        %v315 = vld [vmem:[%s277 + $0x18] sm:$0xff]
        %v316 = vld [vmem:[%s277 + $0x20] sm:$0xff]
        %v317 = vld [vmem:[%s277 + $0x28] sm:$0xff]
        %v318 = vld [vmem:[%s277 + $0x30] sm:$0xff]
        %v319 = vld [vmem:[%s277 + $0x38] sm:$0xff]
        %v320 = vld [vmem:[%s277 + $0x40] sm:$0xff]
        %v321 = vld [vmem:[%s277 + $0x48] sm:$0xff]
        %v322 = vld [vmem:[%s277 + $0x50] sm:$0xff]
        %v323 = vld [vmem:[%s277 + $0x58] sm:$0xff]
        %v324 = vld [vmem:[%s277 + $0x60] sm:$0xff]
        %v325 = vld [vmem:[%s277 + $0x68] sm:$0xff]
        %v326 = vld [vmem:[%s277 + $0x70] sm:$0xff]
        %v327 = vld [vmem:[%s277 + $0x78] sm:$0xff]
        %v328 = vld [vmem:[%s277 + $0x80] sm:$0xff]
        %v329 = vld [vmem:[%s277 + $0x88] sm:$0xff]
        %v330 = vld [vmem:[%s277 + $0x90] sm:$0xff]
        %v331 = vld [vmem:[%s277 + $0x98] sm:$0xff]
        %v332 = vld [vmem:[%s277 + $0xa0] sm:$0xff]
        %v333 = vld [vmem:[%s277 + $0xa8] sm:$0xff]
        %v334 = vld [vmem:[%s277 + $0xb0] sm:$0xff]
        %v335 = vld [vmem:[%s277 + $0xb8] sm:$0xff]
        %v336 = vld [vmem:[%s277 + $0xc0] sm:$0xff]
        %v337 = vld [vmem:[%s277 + $0xc8] sm:$0xff]
        %v338 = vld [vmem:[%s277 + $0xd0] sm:$0xff]
        %v339 = vld [vmem:[%s277 + $0xd8] sm:$0xff]
        %v340 = vld [vmem:[%s277 + $0xe0] sm:$0xff]
        %v341 = vld [vmem:[%s277 + $0xe8] sm:$0xff]
        %v342 = vld [vmem:[%s277 + $0xf0] sm:$0xff]
        %v343 = vld [vmem:[%s277 + $0xf8] sm:$0xff]
        %v344 = vld [vmem:[%s1] sm:$0xff]
        %v345 = vld [vmem:[%s1 + $0x8] sm:$0xff]
        %v346 = vld [vmem:[%s1 + $0x10] sm:$0xff]
        %v347 = vld [vmem:[%s1 + $0x18] sm:$0xff]
        %v348 = vld [vmem:[%s1 + $0x20] sm:$0xff]
        %v349 = vld [vmem:[%s1 + $0x28] sm:$0xff]
        %v350 = vld [vmem:[%s1 + $0x30] sm:$0xff]
        %v351 = vld [vmem:[%s1 + $0x38] sm:$0xff]
        %v352 = vld [vmem:[%s1 + $0x40] sm:$0xff]
        %v353 = vld [vmem:[%s1 + $0x48] sm:$0xff]
        %v354 = vld [vmem:[%s1 + $0x50] sm:$0xff]
        %v355 = vld [vmem:[%s1 + $0x58] sm:$0xff]
        %v356 = vld [vmem:[%s1 + $0x60] sm:$0xff]
        %v357 = vld [vmem:[%s1 + $0x68] sm:$0xff]
        %v358 = vld [vmem:[%s1 + $0x70] sm:$0xff]
        %v359 = vld [vmem:[%s1 + $0x78] sm:$0xff]
        %v360 = vld [vmem:[%s2] sm:$0x1]
        %v362 = vlaneseq
        %v363 = vshrl.u32 %v362, 7
        %v364 = vsub.s32 0, %v363
        %v365 = vrot.slane %v360, %v364
        %367 = vmatprep.subr.mxu0 0.0
        %368 = vmatpush1.msra.mxu0 %v359
        %369 = vmatprep.subr.mxu0 0.0
        %370 = vmatpush1.msra.mxu0 %v358
        %371 = vmatprep.subr.mxu0 0.0
        %372 = vmatpush1.msra.mxu0 %v357
        %373 = vmatprep.subr.mxu0 0.0
        %374 = vmatpush1.msra.mxu0 %v356
        %375 = vmatprep.subr.mxu0 0.0
        %376 = vmatpush1.msra.mxu0 %v355
        %377 = vmatprep.subr.mxu0 0.0
        %378 = vmatpush1.msra.mxu0 %v354
        %379 = vmatprep.subr.mxu0 0.0
        %380 = vmatpush1.msra.mxu0 %v353
        %381 = vmatprep.subr.mxu0 0.0
        %382 = vmatpush1.msra.mxu0 %v352
        %383 = vmatprep.subr.mxu0 0.0
        %384 = vmatpush1.msra.mxu0 %v351
        %385 = vmatprep.subr.mxu0 0.0
        %386 = vmatpush1.msra.mxu0 %v350
        %387 = vmatprep.subr.mxu0 0.0
        %388 = vmatpush1.msra.mxu0 %v349
        %389 = vmatprep.subr.mxu0 0.0
        %390 = vmatpush1.msra.mxu0 %v348
        %391 = vmatprep.subr.mxu0 0.0
        %392 = vmatpush1.msra.mxu0 %v347
        %393 = vmatprep.subr.mxu0 0.0
        %394 = vmatpush1.msra.mxu0 %v346
        %395 = vmatprep.subr.mxu0 0.0
        %396 = vmatpush1.msra.mxu0 %v345
        %397 = vmatprep.subr.mxu0 0.0
        %398 = vmatpush1.msra.mxu0 %v344
        %399 = vmatprep.subr.mxu0 0.0
        %400 = vmatpush2.msra.mxu0 0.0
        %401 = vmatprep.subr.mxu0 0.0
        %402 = vmatpush2.msra.mxu0 0.0
        %403 = vmatprep.subr.mxu0 0.0
        %404 = vmatpush2.msra.mxu0 0.0
        %405 = vmatprep.subr.mxu0 0.0
        %406 = vmatpush2.msra.mxu0 0.0
        %407 = vmatprep.subr.mxu0 0.0
        %408 = vmatpush2.msra.mxu0 0.0
        %409 = vmatprep.subr.mxu0 0.0
        %410 = vmatpush2.msra.mxu0 0.0
        %411 = vmatprep.subr.mxu0 0.0
        %412 = vmatpush2.msra.mxu0 0.0
        %413 = vmatprep.subr.mxu0 0.0
        %414 = vmatpush2.msra.mxu0 0.0
        %415 = vmatprep.subr.mxu0 0.0
        %416 = vmatpush2.msra.mxu0 0.0
        %417 = vmatprep.subr.mxu0 0.0
        %418 = vmatpush2.msra.mxu0 0.0
        %419 = vmatprep.subr.mxu0 0.0
        %420 = vmatpush2.msra.mxu0 0.0
        %421 = vmatprep.subr.mxu0 0.0
        %422 = vmatpush2.msra.mxu0 0.0
        %423 = vmatprep.subr.mxu0 0.0
        %424 = vmatpush2.msra.mxu0 0.0
        %425 = vmatprep.subr.mxu0 0.0
        %426 = vmatpush2.msra.mxu0 0.0
        %427 = vmatprep.subr.mxu0 0.0
        %428 = vmatpush2.msra.mxu0 0.0
        %429 = vmatprep.subr.mxu0 0.0
        %430 = vmatpush2.msra.mxu0 0.0
        %431 = vmatprep.mubr.f32.mxu0 0.0
        %432 = vmatmul.mubr.f32.gmra.mxu0 %v312
        %v433 = vpop.f32.mrf.mxu0
        %v434 = vadd.f32 %v365, %v433
        %v435 = vpop.f32.mrf.mxu0
        %436 = vmatprep.mubr.f32.mxu0 0.0
        %437 = vmatmul.mubr.f32.gmra.mxu0 %v313
        %v438 = vpop.f32.mrf.mxu0
        %v439 = vadd.f32 %v365, %v438
        %v440 = vpop.f32.mrf.mxu0
        %441 = vmatprep.mubr.f32.mxu0 0.0
        %442 = vmatmul.mubr.f32.gmra.mxu0 %v314
        %v443 = vpop.f32.mrf.mxu0
        %v444 = vadd.f32 %v365, %v443
        %v445 = vpop.f32.mrf.mxu0
        %446 = vmatprep.mubr.f32.mxu0 0.0
        %447 = vmatmul.mubr.f32.gmra.mxu0 %v315
        %v448 = vpop.f32.mrf.mxu0
        %v449 = vadd.f32 %v365, %v448
        %v450 = vpop.f32.mrf.mxu0
        %451 = vmatprep.mubr.f32.mxu0 0.0
        %452 = vmatmul.mubr.f32.gmra.mxu0 %v316
        %v453 = vpop.f32.mrf.mxu0
        %v454 = vadd.f32 %v365, %v453
        %v455 = vpop.f32.mrf.mxu0
        %456 = vmatprep.mubr.f32.mxu0 0.0
        %457 = vmatmul.mubr.f32.gmra.mxu0 %v317
        %v458 = vpop.f32.mrf.mxu0
        %v459 = vadd.f32 %v365, %v458
        %v460 = vpop.f32.mrf.mxu0
        %461 = vmatprep.mubr.f32.mxu0 0.0
        %462 = vmatmul.mubr.f32.gmra.mxu0 %v318
        %v463 = vpop.f32.mrf.mxu0
        %v464 = vadd.f32 %v365, %v463
        %v465 = vpop.f32.mrf.mxu0
        %466 = vmatprep.mubr.f32.mxu0 0.0
        %467 = vmatmul.mubr.f32.gmra.mxu0 %v319
        %v468 = vpop.f32.mrf.mxu0
        %v469 = vadd.f32 %v365, %v468
        %v470 = vpop.f32.mrf.mxu0
        %471 = vmatprep.mubr.f32.mxu0 0.0
        %472 = vmatmul.mubr.f32.gmra.mxu0 %v320
        %v473 = vpop.f32.mrf.mxu0
        %v474 = vadd.f32 %v365, %v473
        %v475 = vpop.f32.mrf.mxu0
        %476 = vmatprep.mubr.f32.mxu0 0.0
        %477 = vmatmul.mubr.f32.gmra.mxu0 %v321
        %v478 = vpop.f32.mrf.mxu0
        %v479 = vadd.f32 %v365, %v478
        %v480 = vpop.f32.mrf.mxu0
        %481 = vmatprep.mubr.f32.mxu0 0.0
        %482 = vmatmul.mubr.f32.gmra.mxu0 %v322
        %v483 = vpop.f32.mrf.mxu0
        %v484 = vadd.f32 %v365, %v483
        %v485 = vpop.f32.mrf.mxu0
        %486 = vmatprep.mubr.f32.mxu0 0.0
        %487 = vmatmul.mubr.f32.gmra.mxu0 %v323
        %v488 = vpop.f32.mrf.mxu0
        %v489 = vadd.f32 %v365, %v488
        %v490 = vpop.f32.mrf.mxu0
        %491 = vmatprep.mubr.f32.mxu0 0.0
        %492 = vmatmul.mubr.f32.gmra.mxu0 %v324
        %v493 = vpop.f32.mrf.mxu0
        %v494 = vadd.f32 %v365, %v493
        %v495 = vpop.f32.mrf.mxu0
        %496 = vmatprep.mubr.f32.mxu0 0.0
        %497 = vmatmul.mubr.f32.gmra.mxu0 %v325
        %v498 = vpop.f32.mrf.mxu0
        %v499 = vadd.f32 %v365, %v498
        %v500 = vpop.f32.mrf.mxu0
        %501 = vmatprep.mubr.f32.mxu0 0.0
        %502 = vmatmul.mubr.f32.gmra.mxu0 %v326
        %v503 = vpop.f32.mrf.mxu0
        %v504 = vadd.f32 %v365, %v503
        %v505 = vpop.f32.mrf.mxu0
        %506 = vmatprep.mubr.f32.mxu0 0.0
        %507 = vmatmul.mubr.f32.gmra.mxu0 %v327
        %v508 = vpop.f32.mrf.mxu0
        %v509 = vadd.f32 %v365, %v508
        %v510 = vpop.f32.mrf.mxu0
        %511 = vmatprep.mubr.f32.mxu0 0.0
        %512 = vmatmul.mubr.f32.gmra.mxu0 %v328
        %v513 = vpop.f32.mrf.mxu0
        %v514 = vadd.f32 %v365, %v513
        %v515 = vpop.f32.mrf.mxu0
        %516 = vmatprep.mubr.f32.mxu0 0.0
        %517 = vmatmul.mubr.f32.gmra.mxu0 %v329
        %v518 = vpop.f32.mrf.mxu0
        %v519 = vadd.f32 %v365, %v518
        %v520 = vpop.f32.mrf.mxu0
        %521 = vmatprep.mubr.f32.mxu0 0.0
        %522 = vmatmul.mubr.f32.gmra.mxu0 %v330
        %v523 = vpop.f32.mrf.mxu0
        %v524 = vadd.f32 %v365, %v523
        %v525 = vpop.f32.mrf.mxu0
        %526 = vmatprep.mubr.f32.mxu0 0.0
        %527 = vmatmul.mubr.f32.gmra.mxu0 %v331
        %v528 = vpop.f32.mrf.mxu0
        %v529 = vadd.f32 %v365, %v528
        %v530 = vpop.f32.mrf.mxu0
        %531 = vmatprep.mubr.f32.mxu0 0.0
        %532 = vmatmul.mubr.f32.gmra.mxu0 %v332
        %v533 = vpop.f32.mrf.mxu0
        %v534 = vadd.f32 %v365, %v533
        %v535 = vpop.f32.mrf.mxu0
        %536 = vmatprep.mubr.f32.mxu0 0.0
        %537 = vmatmul.mubr.f32.gmra.mxu0 %v333
        %v538 = vpop.f32.mrf.mxu0
        %v539 = vadd.f32 %v365, %v538
        %v540 = vpop.f32.mrf.mxu0
        %541 = vmatprep.mubr.f32.mxu0 0.0
        %542 = vmatmul.mubr.f32.gmra.mxu0 %v334
        %v543 = vpop.f32.mrf.mxu0
        %v544 = vadd.f32 %v365, %v543
        %v545 = vpop.f32.mrf.mxu0
        %546 = vmatprep.mubr.f32.mxu0 0.0
        %547 = vmatmul.mubr.f32.gmra.mxu0 %v335
        %v548 = vpop.f32.mrf.mxu0
        %v549 = vadd.f32 %v365, %v548
        %v550 = vpop.f32.mrf.mxu0
        %551 = vmatprep.mubr.f32.mxu0 0.0
        %552 = vmatmul.mubr.f32.gmra.mxu0 %v336
        %v553 = vpop.f32.mrf.mxu0
        %v554 = vadd.f32 %v365, %v553
        %v555 = vpop.f32.mrf.mxu0
        %556 = vmatprep.mubr.f32.mxu0 0.0
        %557 = vmatmul.mubr.f32.gmra.mxu0 %v337
        %v558 = vpop.f32.mrf.mxu0
        %v559 = vadd.f32 %v365, %v558
        %v560 = vpop.f32.mrf.mxu0
        %561 = vmatprep.mubr.f32.mxu0 0.0
        %562 = vmatmul.mubr.f32.gmra.mxu0 %v338
        %v563 = vpop.f32.mrf.mxu0
        %v564 = vadd.f32 %v365, %v563
        %v565 = vpop.f32.mrf.mxu0
        %566 = vmatprep.mubr.f32.mxu0 0.0
        %567 = vmatmul.mubr.f32.gmra.mxu0 %v339
        %v568 = vpop.f32.mrf.mxu0
        %v569 = vadd.f32 %v365, %v568
        %v570 = vpop.f32.mrf.mxu0
        %571 = vmatprep.mubr.f32.mxu0 0.0
        %572 = vmatmul.mubr.f32.gmra.mxu0 %v340
        %v573 = vpop.f32.mrf.mxu0
        %v574 = vadd.f32 %v365, %v573
        %v575 = vpop.f32.mrf.mxu0
        %576 = vmatprep.mubr.f32.mxu0 0.0
        %577 = vmatmul.mubr.f32.gmra.mxu0 %v341
        %v578 = vpop.f32.mrf.mxu0
        %v579 = vadd.f32 %v365, %v578
        %v580 = vpop.f32.mrf.mxu0
        %581 = vmatprep.mubr.f32.mxu0 0.0
        %582 = vmatmul.mubr.f32.gmra.mxu0 %v342
        %v583 = vpop.f32.mrf.mxu0
        %v584 = vadd.f32 %v365, %v583
        %v585 = vpop.f32.mrf.mxu0
        %586 = vmatprep.mubr.f32.mxu0 0.0
        %587 = vmatmul.mubr.f32.gmra.mxu0 %v343
        %v588 = vpop.f32.mrf.mxu0
        %v589 = vadd.f32 %v365, %v588
        %v590 = vpop.f32.mrf.mxu0
        %591 = vdwg.mxu0
        %v592 = vmax.f32 %v434, 0.0
        %v593 = vmax.f32 %v439, 0.0
        %v594 = vmax.f32 %v444, 0.0
        %v595 = vmax.f32 %v449, 0.0
        %v596 = vmax.f32 %v454, 0.0
        %v597 = vmax.f32 %v459, 0.0
        %v598 = vmax.f32 %v464, 0.0
        %v599 = vmax.f32 %v469, 0.0
        %v600 = vmax.f32 %v474, 0.0
        %v601 = vmax.f32 %v479, 0.0
        %v602 = vmax.f32 %v484, 0.0
        %v603 = vmax.f32 %v489, 0.0
        %v604 = vmax.f32 %v494, 0.0
        %v605 = vmax.f32 %v499, 0.0
        %v606 = vmax.f32 %v504, 0.0
        %v607 = vmax.f32 %v509, 0.0
        %v608 = vmax.f32 %v514, 0.0
        %v609 = vmax.f32 %v519, 0.0
        %v610 = vmax.f32 %v524, 0.0
        %v611 = vmax.f32 %v529, 0.0
        %v612 = vmax.f32 %v534, 0.0
        %v613 = vmax.f32 %v539, 0.0
        %v614 = vmax.f32 %v544, 0.0
        %v615 = vmax.f32 %v549, 0.0
        %v616 = vmax.f32 %v554, 0.0
        %v617 = vmax.f32 %v559, 0.0
        %v618 = vmax.f32 %v564, 0.0
        %v619 = vmax.f32 %v569, 0.0
        %v620 = vmax.f32 %v574, 0.0
        %v621 = vmax.f32 %v579, 0.0
        %v622 = vmax.f32 %v584, 0.0
        %v623 = vmax.f32 %v589, 0.0
        %vm624 = vcmask 523264
        %625 = vst.msk [vmem:[#allocation2] sm:$0xff] %vm624, 0.0
        %626 = vst.msk [vmem:[#allocation2 + $0x8] sm:$0xff] %vm624, 0.0
        %vm627 = vcmask 517120
        %628 = vst.msk [vmem:[#allocation2 + $0x10] sm:$0x3] %vm627, 0.0
        %629 = vst.msk [vmem:[#allocation2 + $0x18] sm:$0xff] %vm624, 0.0
        %630 = vst.msk [vmem:[#allocation2 + $0x20] sm:$0xff] %vm624, 0.0
        %631 = vst.msk [vmem:[#allocation2 + $0x28] sm:$0x3] %vm627, 0.0
        %632 = vst.msk [vmem:[#allocation2 + $0x30] sm:$0xff] %vm624, 0.0
        %633 = vst.msk [vmem:[#allocation2 + $0x38] sm:$0xff] %vm624, 0.0
        %634 = vst.msk [vmem:[#allocation2 + $0x40] sm:$0x3] %vm627, 0.0
        %635 = vst.msk [vmem:[#allocation2 + $0x48] sm:$0xff] %vm624, 0.0
        %636 = vst.msk [vmem:[#allocation2 + $0x50] sm:$0xff] %vm624, 0.0
        %637 = vst.msk [vmem:[#allocation2 + $0x58] sm:$0x3] %vm627, 0.0
        %638 = vst.msk [vmem:[#allocation2 + $0x60] sm:$0xff] %vm624, 0.0
        %639 = vst.msk [vmem:[#allocation2 + $0x68] sm:$0xff] %vm624, 0.0
        %640 = vst.msk [vmem:[#allocation2 + $0x70] sm:$0x3] %vm627, 0.0
        %641 = vst.msk [vmem:[#allocation2 + $0x78] sm:$0xff] %vm624, 0.0
        %642 = vst.msk [vmem:[#allocation2 + $0x80] sm:$0xff] %vm624, 0.0
        %643 = vst.msk [vmem:[#allocation2 + $0x88] sm:$0x3] %vm627, 0.0
        %644 = vst.msk [vmem:[#allocation2 + $0x90] sm:$0xff] %vm624, 0.0
        %645 = vst.msk [vmem:[#allocation2 + $0x98] sm:$0xff] %vm624, 0.0
        %646 = vst.msk [vmem:[#allocation2 + $0xa0] sm:$0x3] %vm627, 0.0
        %647 = vst.msk [vmem:[#allocation2 + $0xa8] sm:$0xff] %vm624, 0.0
        %648 = vst.msk [vmem:[#allocation2 + $0xb0] sm:$0xff] %vm624, 0.0
        %649 = vst.msk [vmem:[#allocation2 + $0xb8] sm:$0x3] %vm627, 0.0
        %650 = vst.msk [vmem:[#allocation2 + $0xc0] sm:$0xff] %vm624, 0.0
        %651 = vst.msk [vmem:[#allocation2 + $0xc8] sm:$0xff] %vm624, 0.0
        %652 = vst.msk [vmem:[#allocation2 + $0xd0] sm:$0x3] %vm627, 0.0
        %653 = vst.msk [vmem:[#allocation2 + $0xd8] sm:$0xff] %vm624, 0.0
        %654 = vst.msk [vmem:[#allocation2 + $0xe0] sm:$0xff] %vm624, 0.0
        %655 = vst.msk [vmem:[#allocation2 + $0xe8] sm:$0x3] %vm627, 0.0
        %656 = vst.msk [vmem:[#allocation2 + $0xf0] sm:$0xff] %vm624, 0.0
        %657 = vst.msk [vmem:[#allocation2 + $0xf8] sm:$0xff] %vm624, 0.0
        %658 = vst.msk [vmem:[#allocation2 + $0x100] sm:$0x3] %vm627, 0.0
        %659 = vst.msk [vmem:[#allocation2 + $0x108] sm:$0xff] %vm624, 0.0
        %660 = vst.msk [vmem:[#allocation2 + $0x110] sm:$0xff] %vm624, 0.0
        %661 = vst.msk [vmem:[#allocation2 + $0x118] sm:$0x3] %vm627, 0.0
        %662 = vst.msk [vmem:[#allocation2 + $0x120] sm:$0xff] %vm624, 0.0
        %663 = vst.msk [vmem:[#allocation2 + $0x128] sm:$0xff] %vm624, 0.0
        %664 = vst.msk [vmem:[#allocation2 + $0x130] sm:$0x3] %vm627, 0.0
        %665 = vst.msk [vmem:[#allocation2 + $0x138] sm:$0xff] %vm624, 0.0
        %666 = vst.msk [vmem:[#allocation2 + $0x140] sm:$0xff] %vm624, 0.0
        %667 = vst.msk [vmem:[#allocation2 + $0x148] sm:$0x3] %vm627, 0.0
        %668 = vst.msk [vmem:[#allocation2 + $0x150] sm:$0xff] %vm624, 0.0
        %669 = vst.msk [vmem:[#allocation2 + $0x158] sm:$0xff] %vm624, 0.0
        %670 = vst.msk [vmem:[#allocation2 + $0x160] sm:$0x3] %vm627, 0.0
        %671 = vst.msk [vmem:[#allocation2 + $0x168] sm:$0xff] %vm624, 0.0
        %672 = vst.msk [vmem:[#allocation2 + $0x170] sm:$0xff] %vm624, 0.0
        %673 = vst.msk [vmem:[#allocation2 + $0x178] sm:$0x3] %vm627, 0.0
        %674 = vst.msk [vmem:[#allocation2 + $0x180] sm:$0xff] %vm624, 0.0
        %675 = vst.msk [vmem:[#allocation2 + $0x188] sm:$0xff] %vm624, 0.0
        %676 = vst.msk [vmem:[#allocation2 + $0x190] sm:$0x3] %vm627, 0.0
        %677 = vst.msk [vmem:[#allocation2 + $0x198] sm:$0xff] %vm624, 0.0
        %678 = vst.msk [vmem:[#allocation2 + $0x1a0] sm:$0xff] %vm624, 0.0
        %679 = vst.msk [vmem:[#allocation2 + $0x1a8] sm:$0x3] %vm627, 0.0
        %s680 = scalar_lea.vmem [#allocation2], 24
        %681 = vst.msk [vmem:[%s680 + $0x1] sm:$0xff] %vm624, %v592
        %682 = vst.msk [vmem:[%s680 + $0x9] sm:$0xff] %vm624, %v593
        %683 = vst.msk [vmem:[%s680 + $0x19] sm:$0xff] %vm624, %v594
        %684 = vst.msk [vmem:[%s680 + $0x21] sm:$0xff] %vm624, %v595
        %685 = vst.msk [vmem:[%s680 + $0x31] sm:$0xff] %vm624, %v596
        %686 = vst.msk [vmem:[%s680 + $0x39] sm:$0xff] %vm624, %v597
        %687 = vst.msk [vmem:[%s680 + $0x49] sm:$0xff] %vm624, %v598
        %688 = vst.msk [vmem:[%s680 + $0x51] sm:$0xff] %vm624, %v599
        %689 = vst.msk [vmem:[%s680 + $0x61] sm:$0xff] %vm624, %v600
        %690 = vst.msk [vmem:[%s680 + $0x69] sm:$0xff] %vm624, %v601
        %691 = vst.msk [vmem:[%s680 + $0x79] sm:$0xff] %vm624, %v602
        %692 = vst.msk [vmem:[%s680 + $0x81] sm:$0xff] %vm624, %v603
        %693 = vst.msk [vmem:[%s680 + $0x91] sm:$0xff] %vm624, %v604
        %694 = vst.msk [vmem:[%s680 + $0x99] sm:$0xff] %vm624, %v605
        %695 = vst.msk [vmem:[%s680 + $0xa9] sm:$0xff] %vm624, %v606
        %696 = vst.msk [vmem:[%s680 + $0xb1] sm:$0xff] %vm624, %v607
        %697 = vst.msk [vmem:[%s680 + $0xc1] sm:$0xff] %vm624, %v608
        %698 = vst.msk [vmem:[%s680 + $0xc9] sm:$0xff] %vm624, %v609
        %699 = vst.msk [vmem:[%s680 + $0xd9] sm:$0xff] %vm624, %v610
        %700 = vst.msk [vmem:[%s680 + $0xe1] sm:$0xff] %vm624, %v611
        %701 = vst.msk [vmem:[%s680 + $0xf1] sm:$0xff] %vm624, %v612
        %702 = vst.msk [vmem:[%s680 + $0xf9] sm:$0xff] %vm624, %v613
        %703 = vst.msk [vmem:[%s680 + $0x109] sm:$0xff] %vm624, %v614
        %704 = vst.msk [vmem:[%s680 + $0x111] sm:$0xff] %vm624, %v615
        %705 = vst.msk [vmem:[%s680 + $0x121] sm:$0xff] %vm624, %v616
        %706 = vst.msk [vmem:[%s680 + $0x129] sm:$0xff] %vm624, %v617
        %707 = vst.msk [vmem:[%s680 + $0x139] sm:$0xff] %vm624, %v618
        %708 = vst.msk [vmem:[%s680 + $0x141] sm:$0xff] %vm624, %v619
        %709 = vst.msk [vmem:[%s680 + $0x151] sm:$0xff] %vm624, %v620
        %710 = vst.msk [vmem:[%s680 + $0x159] sm:$0xff] %vm624, %v621
        %711 = vst.msk [vmem:[%s680 + $0x169] sm:$0xff] %vm624, %v622
        %712 = vst.msk [vmem:[%s680 + $0x171] sm:$0xff] %vm624, %v623
        %s713 = scalar_lea.vmem [#allocation2], 48
        %v714 = vld [vmem:[%s713 + $0x2] sm:$0xff]
        %v715 = vld [vmem:[%s713 + $0xa] sm:$0xff]
        %v716 = vld [vmem:[%s713 + $0x1a] sm:$0xff]
        %v717 = vld [vmem:[%s713 + $0x22] sm:$0xff]
        %v718 = vld [vmem:[%s713 + $0x32] sm:$0xff]
        %v719 = vld [vmem:[%s713 + $0x3a] sm:$0xff]
        %v720 = vld [vmem:[%s713 + $0x4a] sm:$0xff]
        %v721 = vld [vmem:[%s713 + $0x52] sm:$0xff]
        %v722 = vld [vmem:[%s713 + $0x62] sm:$0xff]
        %v723 = vld [vmem:[%s713 + $0x6a] sm:$0xff]
        %v724 = vld [vmem:[%s713 + $0x7a] sm:$0xff]
        %v725 = vld [vmem:[%s713 + $0x82] sm:$0xff]
        %v726 = vld [vmem:[%s713 + $0x92] sm:$0xff]
        %v727 = vld [vmem:[%s713 + $0x9a] sm:$0xff]
        %v728 = vld [vmem:[%s713 + $0xaa] sm:$0xff]
        %v729 = vld [vmem:[%s713 + $0xb2] sm:$0xff]
        %v730 = vld [vmem:[%s713 + $0xc2] sm:$0xff]
        %v731 = vld [vmem:[%s713 + $0xca] sm:$0xff]
        %v732 = vld [vmem:[%s713 + $0xda] sm:$0xff]
        %v733 = vld [vmem:[%s713 + $0xe2] sm:$0xff]
        %v734 = vld [vmem:[%s713 + $0xf2] sm:$0xff]
        %v735 = vld [vmem:[%s713 + $0xfa] sm:$0xff]
        %v736 = vld [vmem:[%s713 + $0x10a] sm:$0xff]
        %v737 = vld [vmem:[%s713 + $0x112] sm:$0xff]
        %v738 = vld [vmem:[%s713 + $0x122] sm:$0xff]
        %v739 = vld [vmem:[%s713 + $0x12a] sm:$0xff]
        %v740 = vld [vmem:[%s713 + $0x13a] sm:$0xff]
        %v741 = vld [vmem:[%s713 + $0x142] sm:$0xff]
        %v742 = vld [vmem:[%s713 + $0x152] sm:$0xff]
        %v743 = vld [vmem:[%s713 + $0x15a] sm:$0xff]
        %v744 = vld [vmem:[%s713 + $0x16a] sm:$0xff]
        %v745 = vld [vmem:[%s713 + $0x172] sm:$0xff]
        %v746 = vld [vmem:[#allocation6] sm:$0xff]
        %v747 = vld [vmem:[#allocation6 + $0x8] sm:$0xff]
        %v748 = vld [vmem:[#allocation6 + $0x10] sm:$0xff]
        %v749 = vld [vmem:[#allocation6 + $0x18] sm:$0xff]
        %v750 = vld [vmem:[#allocation6 + $0x20] sm:$0xff]
        %v751 = vld [vmem:[#allocation6 + $0x28] sm:$0xff]
        %v752 = vld [vmem:[#allocation6 + $0x30] sm:$0xff]
        %v753 = vld [vmem:[#allocation6 + $0x38] sm:$0xff]
        %v754 = vld [vmem:[%s713 + $0x1] sm:$0xff]
        %v755 = vld [vmem:[%s713 + $0x9] sm:$0xff]
        %v756 = vld [vmem:[%s713 + $0x19] sm:$0xff]
        %v757 = vld [vmem:[%s713 + $0x21] sm:$0xff]
        %v758 = vld [vmem:[%s713 + $0x31] sm:$0xff]
        %v759 = vld [vmem:[%s713 + $0x39] sm:$0xff]
        %v760 = vld [vmem:[%s713 + $0x49] sm:$0xff]
        %v761 = vld [vmem:[%s713 + $0x51] sm:$0xff]
        %v762 = vld [vmem:[%s713 + $0x61] sm:$0xff]
        %v763 = vld [vmem:[%s713 + $0x69] sm:$0xff]
        %v764 = vld [vmem:[%s713 + $0x79] sm:$0xff]
        %v765 = vld [vmem:[%s713 + $0x81] sm:$0xff]
        %v766 = vld [vmem:[%s713 + $0x91] sm:$0xff]
        %v767 = vld [vmem:[%s713 + $0x99] sm:$0xff]
        %v768 = vld [vmem:[%s713 + $0xa9] sm:$0xff]
        %v769 = vld [vmem:[%s713 + $0xb1] sm:$0xff]
        %v770 = vld [vmem:[%s713 + $0xc1] sm:$0xff]
        %v771 = vld [vmem:[%s713 + $0xc9] sm:$0xff]
        %v772 = vld [vmem:[%s713 + $0xd9] sm:$0xff]
        %v773 = vld [vmem:[%s713 + $0xe1] sm:$0xff]
        %v774 = vld [vmem:[%s713 + $0xf1] sm:$0xff]
        %v775 = vld [vmem:[%s713 + $0xf9] sm:$0xff]
        %v776 = vld [vmem:[%s713 + $0x109] sm:$0xff]
        %v777 = vld [vmem:[%s713 + $0x111] sm:$0xff]
        %v778 = vld [vmem:[%s713 + $0x121] sm:$0xff]
        %v779 = vld [vmem:[%s713 + $0x129] sm:$0xff]
        %v780 = vld [vmem:[%s713 + $0x139] sm:$0xff]
        %v781 = vld [vmem:[%s713 + $0x141] sm:$0xff]
        %v782 = vld [vmem:[%s713 + $0x151] sm:$0xff]
        %v783 = vld [vmem:[%s713 + $0x159] sm:$0xff]
        %v784 = vld [vmem:[%s713 + $0x169] sm:$0xff]
        %v785 = vld [vmem:[%s713 + $0x171] sm:$0xff]
        %s786 = scalar_lea.vmem [#allocation6], 64
        %v787 = vld [vmem:[%s786] sm:$0xff]
        %v788 = vld [vmem:[%s786 + $0x8] sm:$0xff]
        %v789 = vld [vmem:[%s786 + $0x10] sm:$0xff]
        %v790 = vld [vmem:[%s786 + $0x18] sm:$0xff]
        %v791 = vld [vmem:[%s786 + $0x20] sm:$0xff]
        %v792 = vld [vmem:[%s786 + $0x28] sm:$0xff]
        %v793 = vld [vmem:[%s786 + $0x30] sm:$0xff]
        %v794 = vld [vmem:[%s786 + $0x38] sm:$0xff]
        %v796 = vsel %vm624, %v754, 0
        %v799 = vsel %vm624, %v755, 0
        %v802 = vsel %vm624, %v756, 0
        %v805 = vsel %vm624, %v757, 0
        %v808 = vsel %vm624, %v758, 0
        %v811 = vsel %vm624, %v759, 0
        %v814 = vsel %vm624, %v760, 0
        %v817 = vsel %vm624, %v761, 0
        %v820 = vsel %vm624, %v762, 0
        %v823 = vsel %vm624, %v763, 0
        %v826 = vsel %vm624, %v764, 0
        %v829 = vsel %vm624, %v765, 0
        %v832 = vsel %vm624, %v766, 0
        %v835 = vsel %vm624, %v767, 0
        %v838 = vsel %vm624, %v768, 0
        %v841 = vsel %vm624, %v769, 0
        %v844 = vsel %vm624, %v770, 0
        %v847 = vsel %vm624, %v771, 0
        %v850 = vsel %vm624, %v772, 0
        %v853 = vsel %vm624, %v773, 0
        %v856 = vsel %vm624, %v774, 0
        %v859 = vsel %vm624, %v775, 0
        %v862 = vsel %vm624, %v776, 0
        %v865 = vsel %vm624, %v777, 0
        %v868 = vsel %vm624, %v778, 0
        %v871 = vsel %vm624, %v779, 0
        %v874 = vsel %vm624, %v780, 0
        %v877 = vsel %vm624, %v781, 0
        %v880 = vsel %vm624, %v782, 0
        %v883 = vsel %vm624, %v783, 0
        %v886 = vsel %vm624, %v784, 0
        %v889 = vsel %vm624, %v785, 0
        %891 = vmatprep.subr.mxu0 0.0
        %892 = vmatpush1.msra.mxu0 0.0
        %893 = vmatprep.subr.mxu0 0.0
        %894 = vmatpush1.msra.mxu0 0.0
        %895 = vmatprep.subr.mxu0 0.0
        %896 = vmatpush1.msra.mxu0 0.0
        %897 = vmatprep.subr.mxu0 0.0
        %898 = vmatpush1.msra.mxu0 0.0
        %899 = vmatprep.subr.mxu0 0.0
        %900 = vmatpush1.msra.mxu0 0.0
        %901 = vmatprep.subr.mxu0 0.0
        %902 = vmatpush1.msra.mxu0 0.0
        %903 = vmatprep.subr.mxu0 0.0
        %904 = vmatpush1.msra.mxu0 0.0
        %905 = vmatprep.subr.mxu0 0.0
        %906 = vmatpush1.msra.mxu0 0.0
        %907 = vmatprep.subr.mxu0 0.0
        %908 = vmatpush1.msra.mxu0 %v794
        %909 = vmatprep.subr.mxu0 0.0
        %910 = vmatpush1.msra.mxu0 %v793
        %911 = vmatprep.subr.mxu0 0.0
        %912 = vmatpush1.msra.mxu0 %v792
        %913 = vmatprep.subr.mxu0 0.0
        %914 = vmatpush1.msra.mxu0 %v791
        %915 = vmatprep.subr.mxu0 0.0
        %916 = vmatpush1.msra.mxu0 %v790
        %917 = vmatprep.subr.mxu0 0.0
        %918 = vmatpush1.msra.mxu0 %v789
        %919 = vmatprep.subr.mxu0 0.0
        %920 = vmatpush1.msra.mxu0 %v788
        %921 = vmatprep.subr.mxu0 0.0
        %922 = vmatpush1.msra.mxu0 %v787
        %923 = vmatprep.subr.mxu0 0.0
        %924 = vmatpush2.msra.mxu0 0.0
        %925 = vmatprep.subr.mxu0 0.0
        %926 = vmatpush2.msra.mxu0 0.0
        %927 = vmatprep.subr.mxu0 0.0
        %928 = vmatpush2.msra.mxu0 0.0
        %929 = vmatprep.subr.mxu0 0.0
        %930 = vmatpush2.msra.mxu0 0.0
        %931 = vmatprep.subr.mxu0 0.0
        %932 = vmatpush2.msra.mxu0 0.0
        %933 = vmatprep.subr.mxu0 0.0
        %934 = vmatpush2.msra.mxu0 0.0
        %935 = vmatprep.subr.mxu0 0.0
        %936 = vmatpush2.msra.mxu0 0.0
        %937 = vmatprep.subr.mxu0 0.0
        %938 = vmatpush2.msra.mxu0 0.0
        %939 = vmatprep.subr.mxu0 0.0
        %940 = vmatpush2.msra.mxu0 0.0
        %941 = vmatprep.subr.mxu0 0.0
        %942 = vmatpush2.msra.mxu0 0.0
        %943 = vmatprep.subr.mxu0 0.0
        %944 = vmatpush2.msra.mxu0 0.0
        %945 = vmatprep.subr.mxu0 0.0
        %946 = vmatpush2.msra.mxu0 0.0
        %947 = vmatprep.subr.mxu0 0.0
        %948 = vmatpush2.msra.mxu0 0.0
        %949 = vmatprep.subr.mxu0 0.0
        %950 = vmatpush2.msra.mxu0 0.0
        %951 = vmatprep.subr.mxu0 0.0
        %952 = vmatpush2.msra.mxu0 0.0
        %953 = vmatprep.subr.mxu0 0.0
        %954 = vmatpush2.msra.mxu0 0.0
        %955 = vmatprep.mubr.f32.mxu0 0.0
        %956 = vmatmul.mubr.f32.gmra.mxu0 %v796
        %v957 = vpop.f32.mrf.mxu0
        %v958 = vadd.f32 0.0, %v957
        %v959 = vpop.f32.mrf.mxu0
        %960 = vmatprep.mubr.f32.mxu0 0.0
        %961 = vmatmul.mubr.f32.gmra.mxu0 %v799
        %v962 = vpop.f32.mrf.mxu0
        %v963 = vadd.f32 0.0, %v962
        %v964 = vpop.f32.mrf.mxu0
        %965 = vmatprep.mubr.f32.mxu0 0.0
        %966 = vmatmul.mubr.f32.gmra.mxu0 %v802
        %v967 = vpop.f32.mrf.mxu0
        %v968 = vadd.f32 0.0, %v967
        %v969 = vpop.f32.mrf.mxu0
        %970 = vmatprep.mubr.f32.mxu0 0.0
        %971 = vmatmul.mubr.f32.gmra.mxu0 %v805
        %v972 = vpop.f32.mrf.mxu0
        %v973 = vadd.f32 0.0, %v972
        %v974 = vpop.f32.mrf.mxu0
        %975 = vmatprep.mubr.f32.mxu0 0.0
        %976 = vmatmul.mubr.f32.gmra.mxu0 %v808
        %v977 = vpop.f32.mrf.mxu0
        %v978 = vadd.f32 0.0, %v977
        %v979 = vpop.f32.mrf.mxu0
        %980 = vmatprep.mubr.f32.mxu0 0.0
        %981 = vmatmul.mubr.f32.gmra.mxu0 %v811
        %v982 = vpop.f32.mrf.mxu0
        %v983 = vadd.f32 0.0, %v982
        %v984 = vpop.f32.mrf.mxu0
        %985 = vmatprep.mubr.f32.mxu0 0.0
        %986 = vmatmul.mubr.f32.gmra.mxu0 %v814
        %v987 = vpop.f32.mrf.mxu0
        %v988 = vadd.f32 0.0, %v987
        %v989 = vpop.f32.mrf.mxu0
        %990 = vmatprep.mubr.f32.mxu0 0.0
        %991 = vmatmul.mubr.f32.gmra.mxu0 %v817
        %v992 = vpop.f32.mrf.mxu0
        %v993 = vadd.f32 0.0, %v992
        %v994 = vpop.f32.mrf.mxu0
        %995 = vmatprep.mubr.f32.mxu0 0.0
        %996 = vmatmul.mubr.f32.gmra.mxu0 %v820
        %v997 = vpop.f32.mrf.mxu0
        %v998 = vadd.f32 0.0, %v997
        %v999 = vpop.f32.mrf.mxu0
        %1000 = vmatprep.mubr.f32.mxu0 0.0
        %1001 = vmatmul.mubr.f32.gmra.mxu0 %v823
        %v1002 = vpop.f32.mrf.mxu0
        %v1003 = vadd.f32 0.0, %v1002
        %v1004 = vpop.f32.mrf.mxu0
        %1005 = vmatprep.mubr.f32.mxu0 0.0
        %1006 = vmatmul.mubr.f32.gmra.mxu0 %v826
        %v1007 = vpop.f32.mrf.mxu0
        %v1008 = vadd.f32 0.0, %v1007
        %v1009 = vpop.f32.mrf.mxu0
        %1010 = vmatprep.mubr.f32.mxu0 0.0
        %1011 = vmatmul.mubr.f32.gmra.mxu0 %v829
        %v1012 = vpop.f32.mrf.mxu0
        %v1013 = vadd.f32 0.0, %v1012
        %v1014 = vpop.f32.mrf.mxu0
        %1015 = vmatprep.mubr.f32.mxu0 0.0
        %1016 = vmatmul.mubr.f32.gmra.mxu0 %v832
        %v1017 = vpop.f32.mrf.mxu0
        %v1018 = vadd.f32 0.0, %v1017
        %v1019 = vpop.f32.mrf.mxu0
        %1020 = vmatprep.mubr.f32.mxu0 0.0
        %1021 = vmatmul.mubr.f32.gmra.mxu0 %v835
        %v1022 = vpop.f32.mrf.mxu0
        %v1023 = vadd.f32 0.0, %v1022
        %v1024 = vpop.f32.mrf.mxu0
        %1025 = vmatprep.mubr.f32.mxu0 0.0
        %1026 = vmatmul.mubr.f32.gmra.mxu0 %v838
        %v1027 = vpop.f32.mrf.mxu0
        %v1028 = vadd.f32 0.0, %v1027
        %v1029 = vpop.f32.mrf.mxu0
        %1030 = vmatprep.mubr.f32.mxu0 0.0
        %1031 = vmatmul.mubr.f32.gmra.mxu0 %v841
        %v1032 = vpop.f32.mrf.mxu0
        %v1033 = vadd.f32 0.0, %v1032
        %v1034 = vpop.f32.mrf.mxu0
        %1035 = vmatprep.mubr.f32.mxu0 0.0
        %1036 = vmatmul.mubr.f32.gmra.mxu0 %v844
        %v1037 = vpop.f32.mrf.mxu0
        %v1038 = vadd.f32 0.0, %v1037
        %v1039 = vpop.f32.mrf.mxu0
        %1040 = vmatprep.mubr.f32.mxu0 0.0
        %1041 = vmatmul.mubr.f32.gmra.mxu0 %v847
        %v1042 = vpop.f32.mrf.mxu0
        %v1043 = vadd.f32 0.0, %v1042
        %v1044 = vpop.f32.mrf.mxu0
        %1045 = vmatprep.mubr.f32.mxu0 0.0
        %1046 = vmatmul.mubr.f32.gmra.mxu0 %v850
        %v1047 = vpop.f32.mrf.mxu0
        %v1048 = vadd.f32 0.0, %v1047
        %v1049 = vpop.f32.mrf.mxu0
        %1050 = vmatprep.mubr.f32.mxu0 0.0
        %1051 = vmatmul.mubr.f32.gmra.mxu0 %v853
        %v1052 = vpop.f32.mrf.mxu0
        %v1053 = vadd.f32 0.0, %v1052
        %v1054 = vpop.f32.mrf.mxu0
        %1055 = vmatprep.mubr.f32.mxu0 0.0
        %1056 = vmatmul.mubr.f32.gmra.mxu0 %v856
        %v1057 = vpop.f32.mrf.mxu0
        %v1058 = vadd.f32 0.0, %v1057
        %v1059 = vpop.f32.mrf.mxu0
        %1060 = vmatprep.mubr.f32.mxu0 0.0
        %1061 = vmatmul.mubr.f32.gmra.mxu0 %v859
        %v1062 = vpop.f32.mrf.mxu0
        %v1063 = vadd.f32 0.0, %v1062
        %v1064 = vpop.f32.mrf.mxu0
        %1065 = vmatprep.mubr.f32.mxu0 0.0
        %1066 = vmatmul.mubr.f32.gmra.mxu0 %v862
        %v1067 = vpop.f32.mrf.mxu0
        %v1068 = vadd.f32 0.0, %v1067
        %v1069 = vpop.f32.mrf.mxu0
        %1070 = vmatprep.mubr.f32.mxu0 0.0
        %1071 = vmatmul.mubr.f32.gmra.mxu0 %v865
        %v1072 = vpop.f32.mrf.mxu0
        %v1073 = vadd.f32 0.0, %v1072
        %v1074 = vpop.f32.mrf.mxu0
        %1075 = vmatprep.mubr.f32.mxu0 0.0
        %1076 = vmatmul.mubr.f32.gmra.mxu0 %v868
        %v1077 = vpop.f32.mrf.mxu0
        %v1078 = vadd.f32 0.0, %v1077
        %v1079 = vpop.f32.mrf.mxu0
        %1080 = vmatprep.mubr.f32.mxu0 0.0
        %1081 = vmatmul.mubr.f32.gmra.mxu0 %v871
        %v1082 = vpop.f32.mrf.mxu0
        %v1083 = vadd.f32 0.0, %v1082
        %v1084 = vpop.f32.mrf.mxu0
        %1085 = vmatprep.mubr.f32.mxu0 0.0
        %1086 = vmatmul.mubr.f32.gmra.mxu0 %v874
        %v1087 = vpop.f32.mrf.mxu0
        %v1088 = vadd.f32 0.0, %v1087
        %v1089 = vpop.f32.mrf.mxu0
        %1090 = vmatprep.mubr.f32.mxu0 0.0
        %1091 = vmatmul.mubr.f32.gmra.mxu0 %v877
        %v1092 = vpop.f32.mrf.mxu0
        %v1093 = vadd.f32 0.0, %v1092
        %v1094 = vpop.f32.mrf.mxu0
        %1095 = vmatprep.mubr.f32.mxu0 0.0
        %1096 = vmatmul.mubr.f32.gmra.mxu0 %v880
        %v1097 = vpop.f32.mrf.mxu0
        %v1098 = vadd.f32 0.0, %v1097
        %v1099 = vpop.f32.mrf.mxu0
        %1100 = vmatprep.mubr.f32.mxu0 0.0
        %1101 = vmatmul.mubr.f32.gmra.mxu0 %v883
        %v1102 = vpop.f32.mrf.mxu0
        %v1103 = vadd.f32 0.0, %v1102
        %v1104 = vpop.f32.mrf.mxu0
        %1105 = vmatprep.mubr.f32.mxu0 0.0
        %1106 = vmatmul.mubr.f32.gmra.mxu0 %v886
        %v1107 = vpop.f32.mrf.mxu0
        %v1108 = vadd.f32 0.0, %v1107
        %v1109 = vpop.f32.mrf.mxu0
        %1110 = vmatprep.mubr.f32.mxu0 0.0
        %1111 = vmatmul.mubr.f32.gmra.mxu0 %v889
        %v1112 = vpop.f32.mrf.mxu0
        %v1113 = vadd.f32 0.0, %v1112
        %v1114 = vpop.f32.mrf.mxu0
        %1115 = vdwg.mxu0
        %v1117 = vsel %vm624, %v714, 0
        %v1120 = vsel %vm624, %v715, 0
        %v1123 = vsel %vm624, %v716, 0
        %v1126 = vsel %vm624, %v717, 0
        %v1129 = vsel %vm624, %v718, 0
        %v1132 = vsel %vm624, %v719, 0
        %v1135 = vsel %vm624, %v720, 0
        %v1138 = vsel %vm624, %v721, 0
        %v1141 = vsel %vm624, %v722, 0
        %v1144 = vsel %vm624, %v723, 0
        %v1147 = vsel %vm624, %v724, 0
        %v1150 = vsel %vm624, %v725, 0
        %v1153 = vsel %vm624, %v726, 0
        %v1156 = vsel %vm624, %v727, 0
        %v1159 = vsel %vm624, %v728, 0
        %v1162 = vsel %vm624, %v729, 0
        %v1165 = vsel %vm624, %v730, 0
        %v1168 = vsel %vm624, %v731, 0
        %v1171 = vsel %vm624, %v732, 0
        %v1174 = vsel %vm624, %v733, 0
        %v1177 = vsel %vm624, %v734, 0
        %v1180 = vsel %vm624, %v735, 0
        %v1183 = vsel %vm624, %v736, 0
        %v1186 = vsel %vm624, %v737, 0
        %v1189 = vsel %vm624, %v738, 0
        %v1192 = vsel %vm624, %v739, 0
        %v1195 = vsel %vm624, %v740, 0
        %v1198 = vsel %vm624, %v741, 0
        %v1201 = vsel %vm624, %v742, 0
        %v1204 = vsel %vm624, %v743, 0
        %v1207 = vsel %vm624, %v744, 0
        %v1210 = vsel %vm624, %v745, 0
        %1212 = vmatprep.subr.mxu0 0.0
        %1213 = vmatpush1.msra.mxu0 0.0
        %1214 = vmatprep.subr.mxu0 0.0
        %1215 = vmatpush1.msra.mxu0 0.0
        %1216 = vmatprep.subr.mxu0 0.0
        %1217 = vmatpush1.msra.mxu0 0.0
        %1218 = vmatprep.subr.mxu0 0.0
        %1219 = vmatpush1.msra.mxu0 0.0
        %1220 = vmatprep.subr.mxu0 0.0
        %1221 = vmatpush1.msra.mxu0 0.0
        %1222 = vmatprep.subr.mxu0 0.0
        %1223 = vmatpush1.msra.mxu0 0.0
        %1224 = vmatprep.subr.mxu0 0.0
        %1225 = vmatpush1.msra.mxu0 0.0
        %1226 = vmatprep.subr.mxu0 0.0
        %1227 = vmatpush1.msra.mxu0 0.0
        %1228 = vmatprep.subr.mxu0 0.0
        %1229 = vmatpush1.msra.mxu0 %v753
        %1230 = vmatprep.subr.mxu0 0.0
        %1231 = vmatpush1.msra.mxu0 %v752
        %1232 = vmatprep.subr.mxu0 0.0
        %1233 = vmatpush1.msra.mxu0 %v751
        %1234 = vmatprep.subr.mxu0 0.0
        %1235 = vmatpush1.msra.mxu0 %v750
        %1236 = vmatprep.subr.mxu0 0.0
        %1237 = vmatpush1.msra.mxu0 %v749
        %1238 = vmatprep.subr.mxu0 0.0
        %1239 = vmatpush1.msra.mxu0 %v748
        %1240 = vmatprep.subr.mxu0 0.0
        %1241 = vmatpush1.msra.mxu0 %v747
        %1242 = vmatprep.subr.mxu0 0.0
        %1243 = vmatpush1.msra.mxu0 %v746
        %1244 = vmatprep.subr.mxu0 0.0
        %1245 = vmatpush2.msra.mxu0 0.0
        %1246 = vmatprep.subr.mxu0 0.0
        %1247 = vmatpush2.msra.mxu0 0.0
        %1248 = vmatprep.subr.mxu0 0.0
        %1249 = vmatpush2.msra.mxu0 0.0
        %1250 = vmatprep.subr.mxu0 0.0
        %1251 = vmatpush2.msra.mxu0 0.0
        %1252 = vmatprep.subr.mxu0 0.0
        %1253 = vmatpush2.msra.mxu0 0.0
        %1254 = vmatprep.subr.mxu0 0.0
        %1255 = vmatpush2.msra.mxu0 0.0
        %1256 = vmatprep.subr.mxu0 0.0
        %1257 = vmatpush2.msra.mxu0 0.0
        %1258 = vmatprep.subr.mxu0 0.0
        %1259 = vmatpush2.msra.mxu0 0.0
        %1260 = vmatprep.subr.mxu0 0.0
        %1261 = vmatpush2.msra.mxu0 0.0
        %1262 = vmatprep.subr.mxu0 0.0
        %1263 = vmatpush2.msra.mxu0 0.0
        %1264 = vmatprep.subr.mxu0 0.0
        %1265 = vmatpush2.msra.mxu0 0.0
        %1266 = vmatprep.subr.mxu0 0.0
        %1267 = vmatpush2.msra.mxu0 0.0
        %1268 = vmatprep.subr.mxu0 0.0
        %1269 = vmatpush2.msra.mxu0 0.0
        %1270 = vmatprep.subr.mxu0 0.0
        %1271 = vmatpush2.msra.mxu0 0.0
        %1272 = vmatprep.subr.mxu0 0.0
        %1273 = vmatpush2.msra.mxu0 0.0
        %1274 = vmatprep.subr.mxu0 0.0
        %1275 = vmatpush2.msra.mxu0 0.0
        %1276 = vmatprep.mubr.f32.mxu0 0.0
        %1277 = vmatmul.mubr.f32.gmra.mxu0 %v1117
        %v1278 = vpop.f32.mrf.mxu0
        %v1279 = vadd.f32 %v958, %v1278
        %v1280 = vpop.f32.mrf.mxu0
        %1281 = vmatprep.mubr.f32.mxu0 0.0
        %1282 = vmatmul.mubr.f32.gmra.mxu0 %v1120
        %v1283 = vpop.f32.mrf.mxu0
        %v1284 = vadd.f32 %v963, %v1283
        %v1285 = vpop.f32.mrf.mxu0
        %1286 = vmatprep.mubr.f32.mxu0 0.0
        %1287 = vmatmul.mubr.f32.gmra.mxu0 %v1123
        %v1288 = vpop.f32.mrf.mxu0
        %v1289 = vadd.f32 %v968, %v1288
        %v1290 = vpop.f32.mrf.mxu0
        %1291 = vmatprep.mubr.f32.mxu0 0.0
        %1292 = vmatmul.mubr.f32.gmra.mxu0 %v1126
        %v1293 = vpop.f32.mrf.mxu0
        %v1294 = vadd.f32 %v973, %v1293
        %v1295 = vpop.f32.mrf.mxu0
        %1296 = vmatprep.mubr.f32.mxu0 0.0
        %1297 = vmatmul.mubr.f32.gmra.mxu0 %v1129
        %v1298 = vpop.f32.mrf.mxu0
        %v1299 = vadd.f32 %v978, %v1298
        %v1300 = vpop.f32.mrf.mxu0
        %1301 = vmatprep.mubr.f32.mxu0 0.0
        %1302 = vmatmul.mubr.f32.gmra.mxu0 %v1132
        %v1303 = vpop.f32.mrf.mxu0
        %v1304 = vadd.f32 %v983, %v1303
        %v1305 = vpop.f32.mrf.mxu0
        %1306 = vmatprep.mubr.f32.mxu0 0.0
        %1307 = vmatmul.mubr.f32.gmra.mxu0 %v1135
        %v1308 = vpop.f32.mrf.mxu0
        %v1309 = vadd.f32 %v988, %v1308
        %v1310 = vpop.f32.mrf.mxu0
        %1311 = vmatprep.mubr.f32.mxu0 0.0
        %1312 = vmatmul.mubr.f32.gmra.mxu0 %v1138
        %v1313 = vpop.f32.mrf.mxu0
        %v1314 = vadd.f32 %v993, %v1313
        %v1315 = vpop.f32.mrf.mxu0
        %1316 = vmatprep.mubr.f32.mxu0 0.0
        %1317 = vmatmul.mubr.f32.gmra.mxu0 %v1141
        %v1318 = vpop.f32.mrf.mxu0
        %v1319 = vadd.f32 %v998, %v1318
        %v1320 = vpop.f32.mrf.mxu0
        %1321 = vmatprep.mubr.f32.mxu0 0.0
        %1322 = vmatmul.mubr.f32.gmra.mxu0 %v1144
        %v1323 = vpop.f32.mrf.mxu0
        %v1324 = vadd.f32 %v1003, %v1323
        %v1325 = vpop.f32.mrf.mxu0
        %1326 = vmatprep.mubr.f32.mxu0 0.0
        %1327 = vmatmul.mubr.f32.gmra.mxu0 %v1147
        %v1328 = vpop.f32.mrf.mxu0
        %v1329 = vadd.f32 %v1008, %v1328
        %v1330 = vpop.f32.mrf.mxu0
        %1331 = vmatprep.mubr.f32.mxu0 0.0
        %1332 = vmatmul.mubr.f32.gmra.mxu0 %v1150
        %v1333 = vpop.f32.mrf.mxu0
        %v1334 = vadd.f32 %v1013, %v1333
        %v1335 = vpop.f32.mrf.mxu0
        %1336 = vmatprep.mubr.f32.mxu0 0.0
        %1337 = vmatmul.mubr.f32.gmra.mxu0 %v1153
        %v1338 = vpop.f32.mrf.mxu0
        %v1339 = vadd.f32 %v1018, %v1338
        %v1340 = vpop.f32.mrf.mxu0
        %1341 = vmatprep.mubr.f32.mxu0 0.0
        %1342 = vmatmul.mubr.f32.gmra.mxu0 %v1156
        %v1343 = vpop.f32.mrf.mxu0
        %v1344 = vadd.f32 %v1023, %v1343
        %v1345 = vpop.f32.mrf.mxu0
        %1346 = vmatprep.mubr.f32.mxu0 0.0
        %1347 = vmatmul.mubr.f32.gmra.mxu0 %v1159
        %v1348 = vpop.f32.mrf.mxu0
        %v1349 = vadd.f32 %v1028, %v1348
        %v1350 = vpop.f32.mrf.mxu0
        %1351 = vmatprep.mubr.f32.mxu0 0.0
        %1352 = vmatmul.mubr.f32.gmra.mxu0 %v1162
        %v1353 = vpop.f32.mrf.mxu0
        %v1354 = vadd.f32 %v1033, %v1353
        %v1355 = vpop.f32.mrf.mxu0
        %1356 = vmatprep.mubr.f32.mxu0 0.0
        %1357 = vmatmul.mubr.f32.gmra.mxu0 %v1165
        %v1358 = vpop.f32.mrf.mxu0
        %v1359 = vadd.f32 %v1038, %v1358
        %v1360 = vpop.f32.mrf.mxu0
        %1361 = vmatprep.mubr.f32.mxu0 0.0
        %1362 = vmatmul.mubr.f32.gmra.mxu0 %v1168
        %v1363 = vpop.f32.mrf.mxu0
        %v1364 = vadd.f32 %v1043, %v1363
        %v1365 = vpop.f32.mrf.mxu0
        %1366 = vmatprep.mubr.f32.mxu0 0.0
        %1367 = vmatmul.mubr.f32.gmra.mxu0 %v1171
        %v1368 = vpop.f32.mrf.mxu0
        %v1369 = vadd.f32 %v1048, %v1368
        %v1370 = vpop.f32.mrf.mxu0
        %1371 = vmatprep.mubr.f32.mxu0 0.0
        %1372 = vmatmul.mubr.f32.gmra.mxu0 %v1174
        %v1373 = vpop.f32.mrf.mxu0
        %v1374 = vadd.f32 %v1053, %v1373
        %v1375 = vpop.f32.mrf.mxu0
        %1376 = vmatprep.mubr.f32.mxu0 0.0
        %1377 = vmatmul.mubr.f32.gmra.mxu0 %v1177
        %v1378 = vpop.f32.mrf.mxu0
        %v1379 = vadd.f32 %v1058, %v1378
        %v1380 = vpop.f32.mrf.mxu0
        %1381 = vmatprep.mubr.f32.mxu0 0.0
        %1382 = vmatmul.mubr.f32.gmra.mxu0 %v1180
        %v1383 = vpop.f32.mrf.mxu0
        %v1384 = vadd.f32 %v1063, %v1383
        %v1385 = vpop.f32.mrf.mxu0
        %1386 = vmatprep.mubr.f32.mxu0 0.0
        %1387 = vmatmul.mubr.f32.gmra.mxu0 %v1183
        %v1388 = vpop.f32.mrf.mxu0
        %v1389 = vadd.f32 %v1068, %v1388
        %v1390 = vpop.f32.mrf.mxu0
        %1391 = vmatprep.mubr.f32.mxu0 0.0
        %1392 = vmatmul.mubr.f32.gmra.mxu0 %v1186
        %v1393 = vpop.f32.mrf.mxu0
        %v1394 = vadd.f32 %v1073, %v1393
        %v1395 = vpop.f32.mrf.mxu0
        %1396 = vmatprep.mubr.f32.mxu0 0.0
        %1397 = vmatmul.mubr.f32.gmra.mxu0 %v1189
        %v1398 = vpop.f32.mrf.mxu0
        %v1399 = vadd.f32 %v1078, %v1398
        %v1400 = vpop.f32.mrf.mxu0
        %1401 = vmatprep.mubr.f32.mxu0 0.0
        %1402 = vmatmul.mubr.f32.gmra.mxu0 %v1192
        %v1403 = vpop.f32.mrf.mxu0
        %v1404 = vadd.f32 %v1083, %v1403
        %v1405 = vpop.f32.mrf.mxu0
        %1406 = vmatprep.mubr.f32.mxu0 0.0
        %1407 = vmatmul.mubr.f32.gmra.mxu0 %v1195
        %v1408 = vpop.f32.mrf.mxu0
        %v1409 = vadd.f32 %v1088, %v1408
        %v1410 = vpop.f32.mrf.mxu0
        %1411 = vmatprep.mubr.f32.mxu0 0.0
        %1412 = vmatmul.mubr.f32.gmra.mxu0 %v1198
        %v1413 = vpop.f32.mrf.mxu0
        %v1414 = vadd.f32 %v1093, %v1413
        %v1415 = vpop.f32.mrf.mxu0
        %1416 = vmatprep.mubr.f32.mxu0 0.0
        %1417 = vmatmul.mubr.f32.gmra.mxu0 %v1201
        %v1418 = vpop.f32.mrf.mxu0
        %v1419 = vadd.f32 %v1098, %v1418
        %v1420 = vpop.f32.mrf.mxu0
        %1421 = vmatprep.mubr.f32.mxu0 0.0
        %1422 = vmatmul.mubr.f32.gmra.mxu0 %v1204
        %v1423 = vpop.f32.mrf.mxu0
        %v1424 = vadd.f32 %v1103, %v1423
        %v1425 = vpop.f32.mrf.mxu0
        %1426 = vmatprep.mubr.f32.mxu0 0.0
        %1427 = vmatmul.mubr.f32.gmra.mxu0 %v1207
        %v1428 = vpop.f32.mrf.mxu0
        %v1429 = vadd.f32 %v1108, %v1428
        %v1430 = vpop.f32.mrf.mxu0
        %1431 = vmatprep.mubr.f32.mxu0 0.0
        %1432 = vmatmul.mubr.f32.gmra.mxu0 %v1210
        %v1433 = vpop.f32.mrf.mxu0
        %v1434 = vadd.f32 %v1113, %v1433
        %v1435 = vpop.f32.mrf.mxu0
        %1436 = vdwg.mxu0
        %v1437 = vld [vmem:[%s713] sm:$0xff]
        %v1438 = vld [vmem:[%s713 + $0x8] sm:$0xff]
        %v1439 = vld [vmem:[%s713 + $0x18] sm:$0xff]
        %v1440 = vld [vmem:[%s713 + $0x20] sm:$0xff]
        %v1441 = vld [vmem:[%s713 + $0x30] sm:$0xff]
        %v1442 = vld [vmem:[%s713 + $0x38] sm:$0xff]
        %v1443 = vld [vmem:[%s713 + $0x48] sm:$0xff]
        %v1444 = vld [vmem:[%s713 + $0x50] sm:$0xff]
        %v1445 = vld [vmem:[%s713 + $0x60] sm:$0xff]
        %v1446 = vld [vmem:[%s713 + $0x68] sm:$0xff]
        %v1447 = vld [vmem:[%s713 + $0x78] sm:$0xff]
        %v1448 = vld [vmem:[%s713 + $0x80] sm:$0xff]
        %v1449 = vld [vmem:[%s713 + $0x90] sm:$0xff]
        %v1450 = vld [vmem:[%s713 + $0x98] sm:$0xff]
        %v1451 = vld [vmem:[%s713 + $0xa8] sm:$0xff]
        %v1452 = vld [vmem:[%s713 + $0xb0] sm:$0xff]
        %v1453 = vld [vmem:[%s713 + $0xc0] sm:$0xff]
        %v1454 = vld [vmem:[%s713 + $0xc8] sm:$0xff]
        %v1455 = vld [vmem:[%s713 + $0xd8] sm:$0xff]
        %v1456 = vld [vmem:[%s713 + $0xe0] sm:$0xff]
        %v1457 = vld [vmem:[%s713 + $0xf0] sm:$0xff]
        %v1458 = vld [vmem:[%s713 + $0xf8] sm:$0xff]
        %v1459 = vld [vmem:[%s713 + $0x108] sm:$0xff]
        %v1460 = vld [vmem:[%s713 + $0x110] sm:$0xff]
        %v1461 = vld [vmem:[%s713 + $0x120] sm:$0xff]
        %v1462 = vld [vmem:[%s713 + $0x128] sm:$0xff]
        %v1463 = vld [vmem:[%s713 + $0x138] sm:$0xff]
        %v1464 = vld [vmem:[%s713 + $0x140] sm:$0xff]
        %v1465 = vld [vmem:[%s713 + $0x150] sm:$0xff]
        %v1466 = vld [vmem:[%s713 + $0x158] sm:$0xff]
        %v1467 = vld [vmem:[%s713 + $0x168] sm:$0xff]
        %v1468 = vld [vmem:[%s713 + $0x170] sm:$0xff]
        %s1469 = scalar_lea.vmem [#allocation6], 128
        %v1470 = vld [vmem:[%s1469] sm:$0xff]
        %v1471 = vld [vmem:[%s1469 + $0x8] sm:$0xff]
        %v1472 = vld [vmem:[%s1469 + $0x10] sm:$0xff]
        %v1473 = vld [vmem:[%s1469 + $0x18] sm:$0xff]
        %v1474 = vld [vmem:[%s1469 + $0x20] sm:$0xff]
        %v1475 = vld [vmem:[%s1469 + $0x28] sm:$0xff]
        %v1476 = vld [vmem:[%s1469 + $0x30] sm:$0xff]
        %v1477 = vld [vmem:[%s1469 + $0x38] sm:$0xff]
        %v1479 = vsel %vm624, %v1437, 0
        %v1482 = vsel %vm624, %v1438, 0
        %v1485 = vsel %vm624, %v1439, 0
        %v1488 = vsel %vm624, %v1440, 0
        %v1491 = vsel %vm624, %v1441, 0
        %v1494 = vsel %vm624, %v1442, 0
        %v1497 = vsel %vm624, %v1443, 0
        %v1500 = vsel %vm624, %v1444, 0
        %v1503 = vsel %vm624, %v1445, 0
        %v1506 = vsel %vm624, %v1446, 0
        %v1509 = vsel %vm624, %v1447, 0
        %v1512 = vsel %vm624, %v1448, 0
        %v1515 = vsel %vm624, %v1449, 0
        %v1518 = vsel %vm624, %v1450, 0
        %v1521 = vsel %vm624, %v1451, 0
        %v1524 = vsel %vm624, %v1452, 0
        %v1527 = vsel %vm624, %v1453, 0
        %v1530 = vsel %vm624, %v1454, 0
        %v1533 = vsel %vm624, %v1455, 0
        %v1536 = vsel %vm624, %v1456, 0
        %v1539 = vsel %vm624, %v1457, 0
        %v1542 = vsel %vm624, %v1458, 0
        %v1545 = vsel %vm624, %v1459, 0
        %v1548 = vsel %vm624, %v1460, 0
        %v1551 = vsel %vm624, %v1461, 0
        %v1554 = vsel %vm624, %v1462, 0
        %v1557 = vsel %vm624, %v1463, 0
        %v1560 = vsel %vm624, %v1464, 0
        %v1563 = vsel %vm624, %v1465, 0
        %v1566 = vsel %vm624, %v1466, 0
        %v1569 = vsel %vm624, %v1467, 0
        %v1572 = vsel %vm624, %v1468, 0
        %1574 = vmatprep.subr.mxu0 0.0
        %1575 = vmatpush1.msra.mxu0 0.0
        %1576 = vmatprep.subr.mxu0 0.0
        %1577 = vmatpush1.msra.mxu0 0.0
        %1578 = vmatprep.subr.mxu0 0.0
        %1579 = vmatpush1.msra.mxu0 0.0
        %1580 = vmatprep.subr.mxu0 0.0
        %1581 = vmatpush1.msra.mxu0 0.0
        %1582 = vmatprep.subr.mxu0 0.0
        %1583 = vmatpush1.msra.mxu0 0.0
        %1584 = vmatprep.subr.mxu0 0.0
        %1585 = vmatpush1.msra.mxu0 0.0
        %1586 = vmatprep.subr.mxu0 0.0
        %1587 = vmatpush1.msra.mxu0 0.0
        %1588 = vmatprep.subr.mxu0 0.0
        %1589 = vmatpush1.msra.mxu0 0.0
        %1590 = vmatprep.subr.mxu0 0.0
        %1591 = vmatpush1.msra.mxu0 %v1477
        %1592 = vmatprep.subr.mxu0 0.0
        %1593 = vmatpush1.msra.mxu0 %v1476
        %1594 = vmatprep.subr.mxu0 0.0
        %1595 = vmatpush1.msra.mxu0 %v1475
        %1596 = vmatprep.subr.mxu0 0.0
        %1597 = vmatpush1.msra.mxu0 %v1474
        %1598 = vmatprep.subr.mxu0 0.0
        %1599 = vmatpush1.msra.mxu0 %v1473
        %1600 = vmatprep.subr.mxu0 0.0
        %1601 = vmatpush1.msra.mxu0 %v1472
        %1602 = vmatprep.subr.mxu0 0.0
        %1603 = vmatpush1.msra.mxu0 %v1471
        %1604 = vmatprep.subr.mxu0 0.0
        %1605 = vmatpush1.msra.mxu0 %v1470
        %1606 = vmatprep.subr.mxu0 0.0
        %1607 = vmatpush2.msra.mxu0 0.0
        %1608 = vmatprep.subr.mxu0 0.0
        %1609 = vmatpush2.msra.mxu0 0.0
        %1610 = vmatprep.subr.mxu0 0.0
        %1611 = vmatpush2.msra.mxu0 0.0
        %1612 = vmatprep.subr.mxu0 0.0
        %1613 = vmatpush2.msra.mxu0 0.0
        %1614 = vmatprep.subr.mxu0 0.0
        %1615 = vmatpush2.msra.mxu0 0.0
        %1616 = vmatprep.subr.mxu0 0.0
        %1617 = vmatpush2.msra.mxu0 0.0
        %1618 = vmatprep.subr.mxu0 0.0
        %1619 = vmatpush2.msra.mxu0 0.0
        %1620 = vmatprep.subr.mxu0 0.0
        %1621 = vmatpush2.msra.mxu0 0.0
        %1622 = vmatprep.subr.mxu0 0.0
        %1623 = vmatpush2.msra.mxu0 0.0
        %1624 = vmatprep.subr.mxu0 0.0
        %1625 = vmatpush2.msra.mxu0 0.0
        %1626 = vmatprep.subr.mxu0 0.0
        %1627 = vmatpush2.msra.mxu0 0.0
        %1628 = vmatprep.subr.mxu0 0.0
        %1629 = vmatpush2.msra.mxu0 0.0
        %1630 = vmatprep.subr.mxu0 0.0
        %1631 = vmatpush2.msra.mxu0 0.0
        %1632 = vmatprep.subr.mxu0 0.0
        %1633 = vmatpush2.msra.mxu0 0.0
        %1634 = vmatprep.subr.mxu0 0.0
        %1635 = vmatpush2.msra.mxu0 0.0
        %1636 = vmatprep.subr.mxu0 0.0
        %1637 = vmatpush2.msra.mxu0 0.0
        %1638 = vmatprep.mubr.f32.mxu0 0.0
        %1639 = vmatmul.mubr.f32.gmra.mxu0 %v1479
        %v1640 = vpop.f32.mrf.mxu0
        %v1641 = vadd.f32 0.0, %v1640
        %v1642 = vpop.f32.mrf.mxu0
        %1643 = vmatprep.mubr.f32.mxu0 0.0
        %1644 = vmatmul.mubr.f32.gmra.mxu0 %v1482
        %v1645 = vpop.f32.mrf.mxu0
        %v1646 = vadd.f32 0.0, %v1645
        %v1647 = vpop.f32.mrf.mxu0
        %1648 = vmatprep.mubr.f32.mxu0 0.0
        %1649 = vmatmul.mubr.f32.gmra.mxu0 %v1485
        %v1650 = vpop.f32.mrf.mxu0
        %v1651 = vadd.f32 0.0, %v1650
        %v1652 = vpop.f32.mrf.mxu0
        %1653 = vmatprep.mubr.f32.mxu0 0.0
        %1654 = vmatmul.mubr.f32.gmra.mxu0 %v1488
        %v1655 = vpop.f32.mrf.mxu0
        %v1656 = vadd.f32 0.0, %v1655
        %v1657 = vpop.f32.mrf.mxu0
        %1658 = vmatprep.mubr.f32.mxu0 0.0
        %1659 = vmatmul.mubr.f32.gmra.mxu0 %v1491
        %v1660 = vpop.f32.mrf.mxu0
        %v1661 = vadd.f32 0.0, %v1660
        %v1662 = vpop.f32.mrf.mxu0
        %1663 = vmatprep.mubr.f32.mxu0 0.0
        %1664 = vmatmul.mubr.f32.gmra.mxu0 %v1494
        %v1665 = vpop.f32.mrf.mxu0
        %v1666 = vadd.f32 0.0, %v1665
        %v1667 = vpop.f32.mrf.mxu0
        %1668 = vmatprep.mubr.f32.mxu0 0.0
        %1669 = vmatmul.mubr.f32.gmra.mxu0 %v1497
        %v1670 = vpop.f32.mrf.mxu0
        %v1671 = vadd.f32 0.0, %v1670
        %v1672 = vpop.f32.mrf.mxu0
        %1673 = vmatprep.mubr.f32.mxu0 0.0
        %1674 = vmatmul.mubr.f32.gmra.mxu0 %v1500
        %v1675 = vpop.f32.mrf.mxu0
        %v1676 = vadd.f32 0.0, %v1675
        %v1677 = vpop.f32.mrf.mxu0
        %1678 = vmatprep.mubr.f32.mxu0 0.0
        %1679 = vmatmul.mubr.f32.gmra.mxu0 %v1503
        %v1680 = vpop.f32.mrf.mxu0
        %v1681 = vadd.f32 0.0, %v1680
        %v1682 = vpop.f32.mrf.mxu0
        %1683 = vmatprep.mubr.f32.mxu0 0.0
        %1684 = vmatmul.mubr.f32.gmra.mxu0 %v1506
        %v1685 = vpop.f32.mrf.mxu0
        %v1686 = vadd.f32 0.0, %v1685
        %v1687 = vpop.f32.mrf.mxu0
        %1688 = vmatprep.mubr.f32.mxu0 0.0
        %1689 = vmatmul.mubr.f32.gmra.mxu0 %v1509
        %v1690 = vpop.f32.mrf.mxu0
        %v1691 = vadd.f32 0.0, %v1690
        %v1692 = vpop.f32.mrf.mxu0
        %1693 = vmatprep.mubr.f32.mxu0 0.0
        %1694 = vmatmul.mubr.f32.gmra.mxu0 %v1512
        %v1695 = vpop.f32.mrf.mxu0
        %v1696 = vadd.f32 0.0, %v1695
        %v1697 = vpop.f32.mrf.mxu0
        %1698 = vmatprep.mubr.f32.mxu0 0.0
        %1699 = vmatmul.mubr.f32.gmra.mxu0 %v1515
        %v1700 = vpop.f32.mrf.mxu0
        %v1701 = vadd.f32 0.0, %v1700
        %v1702 = vpop.f32.mrf.mxu0
        %1703 = vmatprep.mubr.f32.mxu0 0.0
        %1704 = vmatmul.mubr.f32.gmra.mxu0 %v1518
        %v1705 = vpop.f32.mrf.mxu0
        %v1706 = vadd.f32 0.0, %v1705
        %v1707 = vpop.f32.mrf.mxu0
        %1708 = vmatprep.mubr.f32.mxu0 0.0
        %1709 = vmatmul.mubr.f32.gmra.mxu0 %v1521
        %v1710 = vpop.f32.mrf.mxu0
        %v1711 = vadd.f32 0.0, %v1710
        %v1712 = vpop.f32.mrf.mxu0
        %1713 = vmatprep.mubr.f32.mxu0 0.0
        %1714 = vmatmul.mubr.f32.gmra.mxu0 %v1524
        %v1715 = vpop.f32.mrf.mxu0
        %v1716 = vadd.f32 0.0, %v1715
        %v1717 = vpop.f32.mrf.mxu0
        %1718 = vmatprep.mubr.f32.mxu0 0.0
        %1719 = vmatmul.mubr.f32.gmra.mxu0 %v1527
        %v1720 = vpop.f32.mrf.mxu0
        %v1721 = vadd.f32 0.0, %v1720
        %v1722 = vpop.f32.mrf.mxu0
        %1723 = vmatprep.mubr.f32.mxu0 0.0
        %1724 = vmatmul.mubr.f32.gmra.mxu0 %v1530
        %v1725 = vpop.f32.mrf.mxu0
        %v1726 = vadd.f32 0.0, %v1725
        %v1727 = vpop.f32.mrf.mxu0
        %1728 = vmatprep.mubr.f32.mxu0 0.0
        %1729 = vmatmul.mubr.f32.gmra.mxu0 %v1533
        %v1730 = vpop.f32.mrf.mxu0
        %v1731 = vadd.f32 0.0, %v1730
        %v1732 = vpop.f32.mrf.mxu0
        %1733 = vmatprep.mubr.f32.mxu0 0.0
        %1734 = vmatmul.mubr.f32.gmra.mxu0 %v1536
        %v1735 = vpop.f32.mrf.mxu0
        %v1736 = vadd.f32 0.0, %v1735
        %v1737 = vpop.f32.mrf.mxu0
        %1738 = vmatprep.mubr.f32.mxu0 0.0
        %1739 = vmatmul.mubr.f32.gmra.mxu0 %v1539
        %v1740 = vpop.f32.mrf.mxu0
        %v1741 = vadd.f32 0.0, %v1740
        %v1742 = vpop.f32.mrf.mxu0
        %1743 = vmatprep.mubr.f32.mxu0 0.0
        %1744 = vmatmul.mubr.f32.gmra.mxu0 %v1542
        %v1745 = vpop.f32.mrf.mxu0
        %v1746 = vadd.f32 0.0, %v1745
        %v1747 = vpop.f32.mrf.mxu0
        %1748 = vmatprep.mubr.f32.mxu0 0.0
        %1749 = vmatmul.mubr.f32.gmra.mxu0 %v1545
        %v1750 = vpop.f32.mrf.mxu0
        %v1751 = vadd.f32 0.0, %v1750
        %v1752 = vpop.f32.mrf.mxu0
        %1753 = vmatprep.mubr.f32.mxu0 0.0
        %1754 = vmatmul.mubr.f32.gmra.mxu0 %v1548
        %v1755 = vpop.f32.mrf.mxu0
        %v1756 = vadd.f32 0.0, %v1755
        %v1757 = vpop.f32.mrf.mxu0
        %1758 = vmatprep.mubr.f32.mxu0 0.0
        %1759 = vmatmul.mubr.f32.gmra.mxu0 %v1551
        %v1760 = vpop.f32.mrf.mxu0
        %v1761 = vadd.f32 0.0, %v1760
        %v1762 = vpop.f32.mrf.mxu0
        %1763 = vmatprep.mubr.f32.mxu0 0.0
        %1764 = vmatmul.mubr.f32.gmra.mxu0 %v1554
        %v1765 = vpop.f32.mrf.mxu0
        %v1766 = vadd.f32 0.0, %v1765
        %v1767 = vpop.f32.mrf.mxu0
        %1768 = vmatprep.mubr.f32.mxu0 0.0
        %1769 = vmatmul.mubr.f32.gmra.mxu0 %v1557
        %v1770 = vpop.f32.mrf.mxu0
        %v1771 = vadd.f32 0.0, %v1770
        %v1772 = vpop.f32.mrf.mxu0
        %1773 = vmatprep.mubr.f32.mxu0 0.0
        %1774 = vmatmul.mubr.f32.gmra.mxu0 %v1560
        %v1775 = vpop.f32.mrf.mxu0
        %v1776 = vadd.f32 0.0, %v1775
        %v1777 = vpop.f32.mrf.mxu0
        %1778 = vmatprep.mubr.f32.mxu0 0.0
        %1779 = vmatmul.mubr.f32.gmra.mxu0 %v1563
        %v1780 = vpop.f32.mrf.mxu0
        %v1781 = vadd.f32 0.0, %v1780
        %v1782 = vpop.f32.mrf.mxu0
        %1783 = vmatprep.mubr.f32.mxu0 0.0
        %1784 = vmatmul.mubr.f32.gmra.mxu0 %v1566
        %v1785 = vpop.f32.mrf.mxu0
        %v1786 = vadd.f32 0.0, %v1785
        %v1787 = vpop.f32.mrf.mxu0
        %1788 = vmatprep.mubr.f32.mxu0 0.0
        %1789 = vmatmul.mubr.f32.gmra.mxu0 %v1569
        %v1790 = vpop.f32.mrf.mxu0
        %v1791 = vadd.f32 0.0, %v1790
        %v1792 = vpop.f32.mrf.mxu0
        %1793 = vmatprep.mubr.f32.mxu0 0.0
        %1794 = vmatmul.mubr.f32.gmra.mxu0 %v1572
        %v1795 = vpop.f32.mrf.mxu0
        %v1796 = vadd.f32 0.0, %v1795
        %v1797 = vpop.f32.mrf.mxu0
        %1798 = vdwg.mxu0
        %v1799 = vadd.f32 %v1279, %v1641
        %v1800 = vadd.f32 %v1284, %v1646
        %v1801 = vadd.f32 %v1289, %v1651
        %v1802 = vadd.f32 %v1294, %v1656
        %v1803 = vadd.f32 %v1299, %v1661
        %v1804 = vadd.f32 %v1304, %v1666
        %v1805 = vadd.f32 %v1309, %v1671
        %v1806 = vadd.f32 %v1314, %v1676
        %v1807 = vadd.f32 %v1319, %v1681
        %v1808 = vadd.f32 %v1324, %v1686
        %v1809 = vadd.f32 %v1329, %v1691
        %v1810 = vadd.f32 %v1334, %v1696
        %v1811 = vadd.f32 %v1339, %v1701
        %v1812 = vadd.f32 %v1344, %v1706
        %v1813 = vadd.f32 %v1349, %v1711
        %v1814 = vadd.f32 %v1354, %v1716
        %v1815 = vadd.f32 %v1359, %v1721
        %v1816 = vadd.f32 %v1364, %v1726
        %v1817 = vadd.f32 %v1369, %v1731
        %v1818 = vadd.f32 %v1374, %v1736
        %v1819 = vadd.f32 %v1379, %v1741
        %v1820 = vadd.f32 %v1384, %v1746
        %v1821 = vadd.f32 %v1389, %v1751
        %v1822 = vadd.f32 %v1394, %v1756
        %v1823 = vadd.f32 %v1399, %v1761
        %v1824 = vadd.f32 %v1404, %v1766
        %v1825 = vadd.f32 %v1409, %v1771
        %v1826 = vadd.f32 %v1414, %v1776
        %v1827 = vadd.f32 %v1419, %v1781
        %v1828 = vadd.f32 %v1424, %v1786
        %v1829 = vadd.f32 %v1429, %v1791
        %v1830 = vadd.f32 %v1434, %v1796
        %v1831 = vld [vmem:[%s680 + $0x2] sm:$0xff]
        %v1832 = vld [vmem:[%s680 + $0xa] sm:$0xff]
        %v1833 = vld [vmem:[%s680 + $0x1a] sm:$0xff]
        %v1834 = vld [vmem:[%s680 + $0x22] sm:$0xff]
        %v1835 = vld [vmem:[%s680 + $0x32] sm:$0xff]
        %v1836 = vld [vmem:[%s680 + $0x3a] sm:$0xff]
        %v1837 = vld [vmem:[%s680 + $0x4a] sm:$0xff]
        %v1838 = vld [vmem:[%s680 + $0x52] sm:$0xff]
        %v1839 = vld [vmem:[%s680 + $0x62] sm:$0xff]
        %v1840 = vld [vmem:[%s680 + $0x6a] sm:$0xff]
        %v1841 = vld [vmem:[%s680 + $0x7a] sm:$0xff]
        %v1842 = vld [vmem:[%s680 + $0x82] sm:$0xff]
        %v1843 = vld [vmem:[%s680 + $0x92] sm:$0xff]
        %v1844 = vld [vmem:[%s680 + $0x9a] sm:$0xff]
        %v1845 = vld [vmem:[%s680 + $0xaa] sm:$0xff]
        %v1846 = vld [vmem:[%s680 + $0xb2] sm:$0xff]
        %v1847 = vld [vmem:[%s680 + $0xc2] sm:$0xff]
        %v1848 = vld [vmem:[%s680 + $0xca] sm:$0xff]
        %v1849 = vld [vmem:[%s680 + $0xda] sm:$0xff]
        %v1850 = vld [vmem:[%s680 + $0xe2] sm:$0xff]
        %v1851 = vld [vmem:[%s680 + $0xf2] sm:$0xff]
        %v1852 = vld [vmem:[%s680 + $0xfa] sm:$0xff]
        %v1853 = vld [vmem:[%s680 + $0x10a] sm:$0xff]
        %v1854 = vld [vmem:[%s680 + $0x112] sm:$0xff]
        %v1855 = vld [vmem:[%s680 + $0x122] sm:$0xff]
        %v1856 = vld [vmem:[%s680 + $0x12a] sm:$0xff]
        %v1857 = vld [vmem:[%s680 + $0x13a] sm:$0xff]
        %v1858 = vld [vmem:[%s680 + $0x142] sm:$0xff]
        %v1859 = vld [vmem:[%s680 + $0x152] sm:$0xff]
        %v1860 = vld [vmem:[%s680 + $0x15a] sm:$0xff]
        %v1861 = vld [vmem:[%s680 + $0x16a] sm:$0xff]
        %v1862 = vld [vmem:[%s680 + $0x172] sm:$0xff]
        %s1863 = scalar_lea.vmem [#allocation6], 192
        %v1864 = vld [vmem:[%s1863] sm:$0xff]
        %v1865 = vld [vmem:[%s1863 + $0x8] sm:$0xff]
        %v1866 = vld [vmem:[%s1863 + $0x10] sm:$0xff]
        %v1867 = vld [vmem:[%s1863 + $0x18] sm:$0xff]
        %v1868 = vld [vmem:[%s1863 + $0x20] sm:$0xff]
        %v1869 = vld [vmem:[%s1863 + $0x28] sm:$0xff]
        %v1870 = vld [vmem:[%s1863 + $0x30] sm:$0xff]
        %v1871 = vld [vmem:[%s1863 + $0x38] sm:$0xff]
        %v1873 = vsel %vm624, %v1831, 0
        %v1876 = vsel %vm624, %v1832, 0
        %v1879 = vsel %vm624, %v1833, 0
        %v1882 = vsel %vm624, %v1834, 0
        %v1885 = vsel %vm624, %v1835, 0
        %v1888 = vsel %vm624, %v1836, 0
        %v1891 = vsel %vm624, %v1837, 0
        %v1894 = vsel %vm624, %v1838, 0
        %v1897 = vsel %vm624, %v1839, 0
        %v1900 = vsel %vm624, %v1840, 0
        %v1903 = vsel %vm624, %v1841, 0
        %v1906 = vsel %vm624, %v1842, 0
        %v1909 = vsel %vm624, %v1843, 0
        %v1912 = vsel %vm624, %v1844, 0
        %v1915 = vsel %vm624, %v1845, 0
        %v1918 = vsel %vm624, %v1846, 0
        %v1921 = vsel %vm624, %v1847, 0
        %v1924 = vsel %vm624, %v1848, 0
        %v1927 = vsel %vm624, %v1849, 0
        %v1930 = vsel %vm624, %v1850, 0
        %v1933 = vsel %vm624, %v1851, 0
        %v1936 = vsel %vm624, %v1852, 0
        %v1939 = vsel %vm624, %v1853, 0
        %v1942 = vsel %vm624, %v1854, 0
        %v1945 = vsel %vm624, %v1855, 0
        %v1948 = vsel %vm624, %v1856, 0
        %v1951 = vsel %vm624, %v1857, 0
        %v1954 = vsel %vm624, %v1858, 0
        %v1957 = vsel %vm624, %v1859, 0
        %v1960 = vsel %vm624, %v1860, 0
        %v1963 = vsel %vm624, %v1861, 0
        %v1966 = vsel %vm624, %v1862, 0
        %1968 = vmatprep.subr.mxu0 0.0
        %1969 = vmatpush1.msra.mxu0 0.0
        %1970 = vmatprep.subr.mxu0 0.0
        %1971 = vmatpush1.msra.mxu0 0.0
        %1972 = vmatprep.subr.mxu0 0.0
        %1973 = vmatpush1.msra.mxu0 0.0
        %1974 = vmatprep.subr.mxu0 0.0
        %1975 = vmatpush1.msra.mxu0 0.0
        %1976 = vmatprep.subr.mxu0 0.0
        %1977 = vmatpush1.msra.mxu0 0.0
        %1978 = vmatprep.subr.mxu0 0.0
        %1979 = vmatpush1.msra.mxu0 0.0
        %1980 = vmatprep.subr.mxu0 0.0
        %1981 = vmatpush1.msra.mxu0 0.0
        %1982 = vmatprep.subr.mxu0 0.0
        %1983 = vmatpush1.msra.mxu0 0.0
        %1984 = vmatprep.subr.mxu0 0.0
        %1985 = vmatpush1.msra.mxu0 %v1871
        %1986 = vmatprep.subr.mxu0 0.0
        %1987 = vmatpush1.msra.mxu0 %v1870
        %1988 = vmatprep.subr.mxu0 0.0
        %1989 = vmatpush1.msra.mxu0 %v1869
        %1990 = vmatprep.subr.mxu0 0.0
        %1991 = vmatpush1.msra.mxu0 %v1868
        %1992 = vmatprep.subr.mxu0 0.0
        %1993 = vmatpush1.msra.mxu0 %v1867
        %1994 = vmatprep.subr.mxu0 0.0
        %1995 = vmatpush1.msra.mxu0 %v1866
        %1996 = vmatprep.subr.mxu0 0.0
        %1997 = vmatpush1.msra.mxu0 %v1865
        %1998 = vmatprep.subr.mxu0 0.0
        %1999 = vmatpush1.msra.mxu0 %v1864
        %2000 = vmatprep.subr.mxu0 0.0
        %2001 = vmatpush2.msra.mxu0 0.0
        %2002 = vmatprep.subr.mxu0 0.0
        %2003 = vmatpush2.msra.mxu0 0.0
        %2004 = vmatprep.subr.mxu0 0.0
        %2005 = vmatpush2.msra.mxu0 0.0
        %2006 = vmatprep.subr.mxu0 0.0
        %2007 = vmatpush2.msra.mxu0 0.0
        %2008 = vmatprep.subr.mxu0 0.0
        %2009 = vmatpush2.msra.mxu0 0.0
        %2010 = vmatprep.subr.mxu0 0.0
        %2011 = vmatpush2.msra.mxu0 0.0
        %2012 = vmatprep.subr.mxu0 0.0
        %2013 = vmatpush2.msra.mxu0 0.0
        %2014 = vmatprep.subr.mxu0 0.0
        %2015 = vmatpush2.msra.mxu0 0.0
        %2016 = vmatprep.subr.mxu0 0.0
        %2017 = vmatpush2.msra.mxu0 0.0
        %2018 = vmatprep.subr.mxu0 0.0
        %2019 = vmatpush2.msra.mxu0 0.0
        %2020 = vmatprep.subr.mxu0 0.0
        %2021 = vmatpush2.msra.mxu0 0.0
        %2022 = vmatprep.subr.mxu0 0.0
        %2023 = vmatpush2.msra.mxu0 0.0
        %2024 = vmatprep.subr.mxu0 0.0
        %2025 = vmatpush2.msra.mxu0 0.0
        %2026 = vmatprep.subr.mxu0 0.0
        %2027 = vmatpush2.msra.mxu0 0.0
        %2028 = vmatprep.subr.mxu0 0.0
        %2029 = vmatpush2.msra.mxu0 0.0
        %2030 = vmatprep.subr.mxu0 0.0
        %2031 = vmatpush2.msra.mxu0 0.0
        %2032 = vmatprep.mubr.f32.mxu0 0.0
        %2033 = vmatmul.mubr.f32.gmra.mxu0 %v1873
        %v2034 = vpop.f32.mrf.mxu0
        %v2035 = vadd.f32 0.0, %v2034
        %v2036 = vpop.f32.mrf.mxu0
        %2037 = vmatprep.mubr.f32.mxu0 0.0
        %2038 = vmatmul.mubr.f32.gmra.mxu0 %v1876
        %v2039 = vpop.f32.mrf.mxu0
        %v2040 = vadd.f32 0.0, %v2039
        %v2041 = vpop.f32.mrf.mxu0
        %2042 = vmatprep.mubr.f32.mxu0 0.0
        %2043 = vmatmul.mubr.f32.gmra.mxu0 %v1879
        %v2044 = vpop.f32.mrf.mxu0
        %v2045 = vadd.f32 0.0, %v2044
        %v2046 = vpop.f32.mrf.mxu0
        %2047 = vmatprep.mubr.f32.mxu0 0.0
        %2048 = vmatmul.mubr.f32.gmra.mxu0 %v1882
        %v2049 = vpop.f32.mrf.mxu0
        %v2050 = vadd.f32 0.0, %v2049
        %v2051 = vpop.f32.mrf.mxu0
        %2052 = vmatprep.mubr.f32.mxu0 0.0
        %2053 = vmatmul.mubr.f32.gmra.mxu0 %v1885
        %v2054 = vpop.f32.mrf.mxu0
        %v2055 = vadd.f32 0.0, %v2054
        %v2056 = vpop.f32.mrf.mxu0
        %2057 = vmatprep.mubr.f32.mxu0 0.0
        %2058 = vmatmul.mubr.f32.gmra.mxu0 %v1888
        %v2059 = vpop.f32.mrf.mxu0
        %v2060 = vadd.f32 0.0, %v2059
        %v2061 = vpop.f32.mrf.mxu0
        %2062 = vmatprep.mubr.f32.mxu0 0.0
        %2063 = vmatmul.mubr.f32.gmra.mxu0 %v1891
        %v2064 = vpop.f32.mrf.mxu0
        %v2065 = vadd.f32 0.0, %v2064
        %v2066 = vpop.f32.mrf.mxu0
        %2067 = vmatprep.mubr.f32.mxu0 0.0
        %2068 = vmatmul.mubr.f32.gmra.mxu0 %v1894
        %v2069 = vpop.f32.mrf.mxu0
        %v2070 = vadd.f32 0.0, %v2069
        %v2071 = vpop.f32.mrf.mxu0
        %2072 = vmatprep.mubr.f32.mxu0 0.0
        %2073 = vmatmul.mubr.f32.gmra.mxu0 %v1897
        %v2074 = vpop.f32.mrf.mxu0
        %v2075 = vadd.f32 0.0, %v2074
        %v2076 = vpop.f32.mrf.mxu0
        %2077 = vmatprep.mubr.f32.mxu0 0.0
        %2078 = vmatmul.mubr.f32.gmra.mxu0 %v1900
        %v2079 = vpop.f32.mrf.mxu0
        %v2080 = vadd.f32 0.0, %v2079
        %v2081 = vpop.f32.mrf.mxu0
        %2082 = vmatprep.mubr.f32.mxu0 0.0
        %2083 = vmatmul.mubr.f32.gmra.mxu0 %v1903
        %v2084 = vpop.f32.mrf.mxu0
        %v2085 = vadd.f32 0.0, %v2084
        %v2086 = vpop.f32.mrf.mxu0
        %2087 = vmatprep.mubr.f32.mxu0 0.0
        %2088 = vmatmul.mubr.f32.gmra.mxu0 %v1906
        %v2089 = vpop.f32.mrf.mxu0
        %v2090 = vadd.f32 0.0, %v2089
        %v2091 = vpop.f32.mrf.mxu0
        %2092 = vmatprep.mubr.f32.mxu0 0.0
        %2093 = vmatmul.mubr.f32.gmra.mxu0 %v1909
        %v2094 = vpop.f32.mrf.mxu0
        %v2095 = vadd.f32 0.0, %v2094
        %v2096 = vpop.f32.mrf.mxu0
        %2097 = vmatprep.mubr.f32.mxu0 0.0
        %2098 = vmatmul.mubr.f32.gmra.mxu0 %v1912
        %v2099 = vpop.f32.mrf.mxu0
        %v2100 = vadd.f32 0.0, %v2099
        %v2101 = vpop.f32.mrf.mxu0
        %2102 = vmatprep.mubr.f32.mxu0 0.0
        %2103 = vmatmul.mubr.f32.gmra.mxu0 %v1915
        %v2104 = vpop.f32.mrf.mxu0
        %v2105 = vadd.f32 0.0, %v2104
        %v2106 = vpop.f32.mrf.mxu0
        %2107 = vmatprep.mubr.f32.mxu0 0.0
        %2108 = vmatmul.mubr.f32.gmra.mxu0 %v1918
        %v2109 = vpop.f32.mrf.mxu0
        %v2110 = vadd.f32 0.0, %v2109
        %v2111 = vpop.f32.mrf.mxu0
        %2112 = vmatprep.mubr.f32.mxu0 0.0
        %2113 = vmatmul.mubr.f32.gmra.mxu0 %v1921
        %v2114 = vpop.f32.mrf.mxu0
        %v2115 = vadd.f32 0.0, %v2114
        %v2116 = vpop.f32.mrf.mxu0
        %2117 = vmatprep.mubr.f32.mxu0 0.0
        %2118 = vmatmul.mubr.f32.gmra.mxu0 %v1924
        %v2119 = vpop.f32.mrf.mxu0
        %v2120 = vadd.f32 0.0, %v2119
        %v2121 = vpop.f32.mrf.mxu0
        %2122 = vmatprep.mubr.f32.mxu0 0.0
        %2123 = vmatmul.mubr.f32.gmra.mxu0 %v1927
        %v2124 = vpop.f32.mrf.mxu0
        %v2125 = vadd.f32 0.0, %v2124
        %v2126 = vpop.f32.mrf.mxu0
        %2127 = vmatprep.mubr.f32.mxu0 0.0
        %2128 = vmatmul.mubr.f32.gmra.mxu0 %v1930
        %v2129 = vpop.f32.mrf.mxu0
        %v2130 = vadd.f32 0.0, %v2129
        %v2131 = vpop.f32.mrf.mxu0
        %2132 = vmatprep.mubr.f32.mxu0 0.0
        %2133 = vmatmul.mubr.f32.gmra.mxu0 %v1933
        %v2134 = vpop.f32.mrf.mxu0
        %v2135 = vadd.f32 0.0, %v2134
        %v2136 = vpop.f32.mrf.mxu0
        %2137 = vmatprep.mubr.f32.mxu0 0.0
        %2138 = vmatmul.mubr.f32.gmra.mxu0 %v1936
        %v2139 = vpop.f32.mrf.mxu0
        %v2140 = vadd.f32 0.0, %v2139
        %v2141 = vpop.f32.mrf.mxu0
        %2142 = vmatprep.mubr.f32.mxu0 0.0
        %2143 = vmatmul.mubr.f32.gmra.mxu0 %v1939
        %v2144 = vpop.f32.mrf.mxu0
        %v2145 = vadd.f32 0.0, %v2144
        %v2146 = vpop.f32.mrf.mxu0
        %2147 = vmatprep.mubr.f32.mxu0 0.0
        %2148 = vmatmul.mubr.f32.gmra.mxu0 %v1942
        %v2149 = vpop.f32.mrf.mxu0
        %v2150 = vadd.f32 0.0, %v2149
        %v2151 = vpop.f32.mrf.mxu0
        %2152 = vmatprep.mubr.f32.mxu0 0.0
        %2153 = vmatmul.mubr.f32.gmra.mxu0 %v1945
        %v2154 = vpop.f32.mrf.mxu0
        %v2155 = vadd.f32 0.0, %v2154
        %v2156 = vpop.f32.mrf.mxu0
        %2157 = vmatprep.mubr.f32.mxu0 0.0
        %2158 = vmatmul.mubr.f32.gmra.mxu0 %v1948
        %v2159 = vpop.f32.mrf.mxu0
        %v2160 = vadd.f32 0.0, %v2159
        %v2161 = vpop.f32.mrf.mxu0
        %2162 = vmatprep.mubr.f32.mxu0 0.0
        %2163 = vmatmul.mubr.f32.gmra.mxu0 %v1951
        %v2164 = vpop.f32.mrf.mxu0
        %v2165 = vadd.f32 0.0, %v2164
        %v2166 = vpop.f32.mrf.mxu0
        %2167 = vmatprep.mubr.f32.mxu0 0.0
        %2168 = vmatmul.mubr.f32.gmra.mxu0 %v1954
        %v2169 = vpop.f32.mrf.mxu0
        %v2170 = vadd.f32 0.0, %v2169
        %v2171 = vpop.f32.mrf.mxu0
        %2172 = vmatprep.mubr.f32.mxu0 0.0
        %2173 = vmatmul.mubr.f32.gmra.mxu0 %v1957
        %v2174 = vpop.f32.mrf.mxu0
        %v2175 = vadd.f32 0.0, %v2174
        %v2176 = vpop.f32.mrf.mxu0
        %2177 = vmatprep.mubr.f32.mxu0 0.0
        %2178 = vmatmul.mubr.f32.gmra.mxu0 %v1960
        %v2179 = vpop.f32.mrf.mxu0
        %v2180 = vadd.f32 0.0, %v2179
        %v2181 = vpop.f32.mrf.mxu0
        %2182 = vmatprep.mubr.f32.mxu0 0.0
        %2183 = vmatmul.mubr.f32.gmra.mxu0 %v1963
        %v2184 = vpop.f32.mrf.mxu0
        %v2185 = vadd.f32 0.0, %v2184
        %v2186 = vpop.f32.mrf.mxu0
        %2187 = vmatprep.mubr.f32.mxu0 0.0
        %2188 = vmatmul.mubr.f32.gmra.mxu0 %v1966
        %v2189 = vpop.f32.mrf.mxu0
        %v2190 = vadd.f32 0.0, %v2189
        %v2191 = vpop.f32.mrf.mxu0
        %2192 = vdwg.mxu0
        %v2193 = vadd.f32 %v1799, %v2035
        %v2194 = vadd.f32 %v1800, %v2040
        %v2195 = vadd.f32 %v1801, %v2045
        %v2196 = vadd.f32 %v1802, %v2050
        %v2197 = vadd.f32 %v1803, %v2055
        %v2198 = vadd.f32 %v1804, %v2060
        %v2199 = vadd.f32 %v1805, %v2065
        %v2200 = vadd.f32 %v1806, %v2070
        %v2201 = vadd.f32 %v1807, %v2075
        %v2202 = vadd.f32 %v1808, %v2080
        %v2203 = vadd.f32 %v1809, %v2085
        %v2204 = vadd.f32 %v1810, %v2090
        %v2205 = vadd.f32 %v1811, %v2095
        %v2206 = vadd.f32 %v1812, %v2100
        %v2207 = vadd.f32 %v1813, %v2105
        %v2208 = vadd.f32 %v1814, %v2110
        %v2209 = vadd.f32 %v1815, %v2115
        %v2210 = vadd.f32 %v1816, %v2120
        %v2211 = vadd.f32 %v1817, %v2125
        %v2212 = vadd.f32 %v1818, %v2130
        %v2213 = vadd.f32 %v1819, %v2135
        %v2214 = vadd.f32 %v1820, %v2140
        %v2215 = vadd.f32 %v1821, %v2145
        %v2216 = vadd.f32 %v1822, %v2150
        %v2217 = vadd.f32 %v1823, %v2155
        %v2218 = vadd.f32 %v1824, %v2160
        %v2219 = vadd.f32 %v1825, %v2165
        %v2220 = vadd.f32 %v1826, %v2170
        %v2221 = vadd.f32 %v1827, %v2175
        %v2222 = vadd.f32 %v1828, %v2180
        %v2223 = vadd.f32 %v1829, %v2185
        %v2224 = vadd.f32 %v1830, %v2190
        %v2225 = vld [vmem:[%s680 + $0x1] sm:$0xff]
        %v2226 = vld [vmem:[%s680 + $0x9] sm:$0xff]
        %v2227 = vld [vmem:[%s680 + $0x19] sm:$0xff]
        %v2228 = vld [vmem:[%s680 + $0x21] sm:$0xff]
        %v2229 = vld [vmem:[%s680 + $0x31] sm:$0xff]
        %v2230 = vld [vmem:[%s680 + $0x39] sm:$0xff]
        %v2231 = vld [vmem:[%s680 + $0x49] sm:$0xff]
        %v2232 = vld [vmem:[%s680 + $0x51] sm:$0xff]
        %v2233 = vld [vmem:[%s680 + $0x61] sm:$0xff]
        %v2234 = vld [vmem:[%s680 + $0x69] sm:$0xff]
        %v2235 = vld [vmem:[%s680 + $0x79] sm:$0xff]
        %v2236 = vld [vmem:[%s680 + $0x81] sm:$0xff]
        %v2237 = vld [vmem:[%s680 + $0x91] sm:$0xff]
        %v2238 = vld [vmem:[%s680 + $0x99] sm:$0xff]
        %v2239 = vld [vmem:[%s680 + $0xa9] sm:$0xff]
        %v2240 = vld [vmem:[%s680 + $0xb1] sm:$0xff]
        %v2241 = vld [vmem:[%s680 + $0xc1] sm:$0xff]
        %v2242 = vld [vmem:[%s680 + $0xc9] sm:$0xff]
        %v2243 = vld [vmem:[%s680 + $0xd9] sm:$0xff]
        %v2244 = vld [vmem:[%s680 + $0xe1] sm:$0xff]
        %v2245 = vld [vmem:[%s680 + $0xf1] sm:$0xff]
        %v2246 = vld [vmem:[%s680 + $0xf9] sm:$0xff]
        %v2247 = vld [vmem:[%s680 + $0x109] sm:$0xff]
        %v2248 = vld [vmem:[%s680 + $0x111] sm:$0xff]
        %v2249 = vld [vmem:[%s680 + $0x121] sm:$0xff]
        %v2250 = vld [vmem:[%s680 + $0x129] sm:$0xff]
        %v2251 = vld [vmem:[%s680 + $0x139] sm:$0xff]
        %v2252 = vld [vmem:[%s680 + $0x141] sm:$0xff]
        %v2253 = vld [vmem:[%s680 + $0x151] sm:$0xff]
        %v2254 = vld [vmem:[%s680 + $0x159] sm:$0xff]
        %v2255 = vld [vmem:[%s680 + $0x169] sm:$0xff]
        %v2256 = vld [vmem:[%s680 + $0x171] sm:$0xff]
        %s2257 = scalar_lea.vmem [#allocation6], 256
        %v2258 = vld [vmem:[%s2257] sm:$0xff]
        %v2259 = vld [vmem:[%s2257 + $0x8] sm:$0xff]
        %v2260 = vld [vmem:[%s2257 + $0x10] sm:$0xff]
        %v2261 = vld [vmem:[%s2257 + $0x18] sm:$0xff]
        %v2262 = vld [vmem:[%s2257 + $0x20] sm:$0xff]
        %v2263 = vld [vmem:[%s2257 + $0x28] sm:$0xff]
        %v2264 = vld [vmem:[%s2257 + $0x30] sm:$0xff]
        %v2265 = vld [vmem:[%s2257 + $0x38] sm:$0xff]
        %v2267 = vsel %vm624, %v2225, 0
        %v2270 = vsel %vm624, %v2226, 0
        %v2273 = vsel %vm624, %v2227, 0
        %v2276 = vsel %vm624, %v2228, 0
        %v2279 = vsel %vm624, %v2229, 0
        %v2282 = vsel %vm624, %v2230, 0
        %v2285 = vsel %vm624, %v2231, 0
        %v2288 = vsel %vm624, %v2232, 0
        %v2291 = vsel %vm624, %v2233, 0
        %v2294 = vsel %vm624, %v2234, 0
        %v2297 = vsel %vm624, %v2235, 0
        %v2300 = vsel %vm624, %v2236, 0
        %v2303 = vsel %vm624, %v2237, 0
        %v2306 = vsel %vm624, %v2238, 0
        %v2309 = vsel %vm624, %v2239, 0
        %v2312 = vsel %vm624, %v2240, 0
        %v2315 = vsel %vm624, %v2241, 0
        %v2318 = vsel %vm624, %v2242, 0
        %v2321 = vsel %vm624, %v2243, 0
        %v2324 = vsel %vm624, %v2244, 0
        %v2327 = vsel %vm624, %v2245, 0
        %v2330 = vsel %vm624, %v2246, 0
        %v2333 = vsel %vm624, %v2247, 0
        %v2336 = vsel %vm624, %v2248, 0
        %v2339 = vsel %vm624, %v2249, 0
        %v2342 = vsel %vm624, %v2250, 0
        %v2345 = vsel %vm624, %v2251, 0
        %v2348 = vsel %vm624, %v2252, 0
        %v2351 = vsel %vm624, %v2253, 0
        %v2354 = vsel %vm624, %v2254, 0
        %v2357 = vsel %vm624, %v2255, 0
        %v2360 = vsel %vm624, %v2256, 0
        %2362 = vmatprep.subr.mxu0 0.0
        %2363 = vmatpush1.msra.mxu0 0.0
        %2364 = vmatprep.subr.mxu0 0.0
        %2365 = vmatpush1.msra.mxu0 0.0
        %2366 = vmatprep.subr.mxu0 0.0
        %2367 = vmatpush1.msra.mxu0 0.0
        %2368 = vmatprep.subr.mxu0 0.0
        %2369 = vmatpush1.msra.mxu0 0.0
        %2370 = vmatprep.subr.mxu0 0.0
        %2371 = vmatpush1.msra.mxu0 0.0
        %2372 = vmatprep.subr.mxu0 0.0
        %2373 = vmatpush1.msra.mxu0 0.0
        %2374 = vmatprep.subr.mxu0 0.0
        %2375 = vmatpush1.msra.mxu0 0.0
        %2376 = vmatprep.subr.mxu0 0.0
        %2377 = vmatpush1.msra.mxu0 0.0
        %2378 = vmatprep.subr.mxu0 0.0
        %2379 = vmatpush1.msra.mxu0 %v2265
        %2380 = vmatprep.subr.mxu0 0.0
        %2381 = vmatpush1.msra.mxu0 %v2264
        %2382 = vmatprep.subr.mxu0 0.0
        %2383 = vmatpush1.msra.mxu0 %v2263
        %2384 = vmatprep.subr.mxu0 0.0
        %2385 = vmatpush1.msra.mxu0 %v2262
        %2386 = vmatprep.subr.mxu0 0.0
        %2387 = vmatpush1.msra.mxu0 %v2261
        %2388 = vmatprep.subr.mxu0 0.0
        %2389 = vmatpush1.msra.mxu0 %v2260
        %2390 = vmatprep.subr.mxu0 0.0
        %2391 = vmatpush1.msra.mxu0 %v2259
        %2392 = vmatprep.subr.mxu0 0.0
        %2393 = vmatpush1.msra.mxu0 %v2258
        %2394 = vmatprep.subr.mxu0 0.0
        %2395 = vmatpush2.msra.mxu0 0.0
        %2396 = vmatprep.subr.mxu0 0.0
        %2397 = vmatpush2.msra.mxu0 0.0
        %2398 = vmatprep.subr.mxu0 0.0
        %2399 = vmatpush2.msra.mxu0 0.0
        %2400 = vmatprep.subr.mxu0 0.0
        %2401 = vmatpush2.msra.mxu0 0.0
        %2402 = vmatprep.subr.mxu0 0.0
        %2403 = vmatpush2.msra.mxu0 0.0
        %2404 = vmatprep.subr.mxu0 0.0
        %2405 = vmatpush2.msra.mxu0 0.0
        %2406 = vmatprep.subr.mxu0 0.0
        %2407 = vmatpush2.msra.mxu0 0.0
        %2408 = vmatprep.subr.mxu0 0.0
        %2409 = vmatpush2.msra.mxu0 0.0
        %2410 = vmatprep.subr.mxu0 0.0
        %2411 = vmatpush2.msra.mxu0 0.0
        %2412 = vmatprep.subr.mxu0 0.0
        %2413 = vmatpush2.msra.mxu0 0.0
        %2414 = vmatprep.subr.mxu0 0.0
        %2415 = vmatpush2.msra.mxu0 0.0
        %2416 = vmatprep.subr.mxu0 0.0
        %2417 = vmatpush2.msra.mxu0 0.0
        %2418 = vmatprep.subr.mxu0 0.0
        %2419 = vmatpush2.msra.mxu0 0.0
        %2420 = vmatprep.subr.mxu0 0.0
        %2421 = vmatpush2.msra.mxu0 0.0
        %2422 = vmatprep.subr.mxu0 0.0
        %2423 = vmatpush2.msra.mxu0 0.0
        %2424 = vmatprep.subr.mxu0 0.0
        %2425 = vmatpush2.msra.mxu0 0.0
        %2426 = vmatprep.mubr.f32.mxu0 0.0
        %2427 = vmatmul.mubr.f32.gmra.mxu0 %v2267
        %v2428 = vpop.f32.mrf.mxu0
        %v2429 = vadd.f32 0.0, %v2428
        %v2430 = vpop.f32.mrf.mxu0
        %2431 = vmatprep.mubr.f32.mxu0 0.0
        %2432 = vmatmul.mubr.f32.gmra.mxu0 %v2270
        %v2433 = vpop.f32.mrf.mxu0
        %v2434 = vadd.f32 0.0, %v2433
        %v2435 = vpop.f32.mrf.mxu0
        %2436 = vmatprep.mubr.f32.mxu0 0.0
        %2437 = vmatmul.mubr.f32.gmra.mxu0 %v2273
        %v2438 = vpop.f32.mrf.mxu0
        %v2439 = vadd.f32 0.0, %v2438
        %v2440 = vpop.f32.mrf.mxu0
        %2441 = vmatprep.mubr.f32.mxu0 0.0
        %2442 = vmatmul.mubr.f32.gmra.mxu0 %v2276
        %v2443 = vpop.f32.mrf.mxu0
        %v2444 = vadd.f32 0.0, %v2443
        %v2445 = vpop.f32.mrf.mxu0
        %2446 = vmatprep.mubr.f32.mxu0 0.0
        %2447 = vmatmul.mubr.f32.gmra.mxu0 %v2279
        %v2448 = vpop.f32.mrf.mxu0
        %v2449 = vadd.f32 0.0, %v2448
        %v2450 = vpop.f32.mrf.mxu0
        %2451 = vmatprep.mubr.f32.mxu0 0.0
        %2452 = vmatmul.mubr.f32.gmra.mxu0 %v2282
        %v2453 = vpop.f32.mrf.mxu0
        %v2454 = vadd.f32 0.0, %v2453
        %v2455 = vpop.f32.mrf.mxu0
        %2456 = vmatprep.mubr.f32.mxu0 0.0
        %2457 = vmatmul.mubr.f32.gmra.mxu0 %v2285
        %v2458 = vpop.f32.mrf.mxu0
        %v2459 = vadd.f32 0.0, %v2458
        %v2460 = vpop.f32.mrf.mxu0
        %2461 = vmatprep.mubr.f32.mxu0 0.0
        %2462 = vmatmul.mubr.f32.gmra.mxu0 %v2288
        %v2463 = vpop.f32.mrf.mxu0
        %v2464 = vadd.f32 0.0, %v2463
        %v2465 = vpop.f32.mrf.mxu0
        %2466 = vmatprep.mubr.f32.mxu0 0.0
        %2467 = vmatmul.mubr.f32.gmra.mxu0 %v2291
        %v2468 = vpop.f32.mrf.mxu0
        %v2469 = vadd.f32 0.0, %v2468
        %v2470 = vpop.f32.mrf.mxu0
        %2471 = vmatprep.mubr.f32.mxu0 0.0
        %2472 = vmatmul.mubr.f32.gmra.mxu0 %v2294
        %v2473 = vpop.f32.mrf.mxu0
        %v2474 = vadd.f32 0.0, %v2473
        %v2475 = vpop.f32.mrf.mxu0
        %2476 = vmatprep.mubr.f32.mxu0 0.0
        %2477 = vmatmul.mubr.f32.gmra.mxu0 %v2297
        %v2478 = vpop.f32.mrf.mxu0
        %v2479 = vadd.f32 0.0, %v2478
        %v2480 = vpop.f32.mrf.mxu0
        %2481 = vmatprep.mubr.f32.mxu0 0.0
        %2482 = vmatmul.mubr.f32.gmra.mxu0 %v2300
        %v2483 = vpop.f32.mrf.mxu0
        %v2484 = vadd.f32 0.0, %v2483
        %v2485 = vpop.f32.mrf.mxu0
        %2486 = vmatprep.mubr.f32.mxu0 0.0
        %2487 = vmatmul.mubr.f32.gmra.mxu0 %v2303
        %v2488 = vpop.f32.mrf.mxu0
        %v2489 = vadd.f32 0.0, %v2488
        %v2490 = vpop.f32.mrf.mxu0
        %2491 = vmatprep.mubr.f32.mxu0 0.0
        %2492 = vmatmul.mubr.f32.gmra.mxu0 %v2306
        %v2493 = vpop.f32.mrf.mxu0
        %v2494 = vadd.f32 0.0, %v2493
        %v2495 = vpop.f32.mrf.mxu0
        %2496 = vmatprep.mubr.f32.mxu0 0.0
        %2497 = vmatmul.mubr.f32.gmra.mxu0 %v2309
        %v2498 = vpop.f32.mrf.mxu0
        %v2499 = vadd.f32 0.0, %v2498
        %v2500 = vpop.f32.mrf.mxu0
        %2501 = vmatprep.mubr.f32.mxu0 0.0
        %2502 = vmatmul.mubr.f32.gmra.mxu0 %v2312
        %v2503 = vpop.f32.mrf.mxu0
        %v2504 = vadd.f32 0.0, %v2503
        %v2505 = vpop.f32.mrf.mxu0
        %2506 = vmatprep.mubr.f32.mxu0 0.0
        %2507 = vmatmul.mubr.f32.gmra.mxu0 %v2315
        %v2508 = vpop.f32.mrf.mxu0
        %v2509 = vadd.f32 0.0, %v2508
        %v2510 = vpop.f32.mrf.mxu0
        %2511 = vmatprep.mubr.f32.mxu0 0.0
        %2512 = vmatmul.mubr.f32.gmra.mxu0 %v2318
        %v2513 = vpop.f32.mrf.mxu0
        %v2514 = vadd.f32 0.0, %v2513
        %v2515 = vpop.f32.mrf.mxu0
        %2516 = vmatprep.mubr.f32.mxu0 0.0
        %2517 = vmatmul.mubr.f32.gmra.mxu0 %v2321
        %v2518 = vpop.f32.mrf.mxu0
        %v2519 = vadd.f32 0.0, %v2518
        %v2520 = vpop.f32.mrf.mxu0
        %2521 = vmatprep.mubr.f32.mxu0 0.0
        %2522 = vmatmul.mubr.f32.gmra.mxu0 %v2324
        %v2523 = vpop.f32.mrf.mxu0
        %v2524 = vadd.f32 0.0, %v2523
        %v2525 = vpop.f32.mrf.mxu0
        %2526 = vmatprep.mubr.f32.mxu0 0.0
        %2527 = vmatmul.mubr.f32.gmra.mxu0 %v2327
        %v2528 = vpop.f32.mrf.mxu0
        %v2529 = vadd.f32 0.0, %v2528
        %v2530 = vpop.f32.mrf.mxu0
        %2531 = vmatprep.mubr.f32.mxu0 0.0
        %2532 = vmatmul.mubr.f32.gmra.mxu0 %v2330
        %v2533 = vpop.f32.mrf.mxu0
        %v2534 = vadd.f32 0.0, %v2533
        %v2535 = vpop.f32.mrf.mxu0
        %2536 = vmatprep.mubr.f32.mxu0 0.0
        %2537 = vmatmul.mubr.f32.gmra.mxu0 %v2333
        %v2538 = vpop.f32.mrf.mxu0
        %v2539 = vadd.f32 0.0, %v2538
        %v2540 = vpop.f32.mrf.mxu0
        %2541 = vmatprep.mubr.f32.mxu0 0.0
        %2542 = vmatmul.mubr.f32.gmra.mxu0 %v2336
        %v2543 = vpop.f32.mrf.mxu0
        %v2544 = vadd.f32 0.0, %v2543
        %v2545 = vpop.f32.mrf.mxu0
        %2546 = vmatprep.mubr.f32.mxu0 0.0
        %2547 = vmatmul.mubr.f32.gmra.mxu0 %v2339
        %v2548 = vpop.f32.mrf.mxu0
        %v2549 = vadd.f32 0.0, %v2548
        %v2550 = vpop.f32.mrf.mxu0
        %2551 = vmatprep.mubr.f32.mxu0 0.0
        %2552 = vmatmul.mubr.f32.gmra.mxu0 %v2342
        %v2553 = vpop.f32.mrf.mxu0
        %v2554 = vadd.f32 0.0, %v2553
        %v2555 = vpop.f32.mrf.mxu0
        %2556 = vmatprep.mubr.f32.mxu0 0.0
        %2557 = vmatmul.mubr.f32.gmra.mxu0 %v2345
        %v2558 = vpop.f32.mrf.mxu0
        %v2559 = vadd.f32 0.0, %v2558
        %v2560 = vpop.f32.mrf.mxu0
        %2561 = vmatprep.mubr.f32.mxu0 0.0
        %2562 = vmatmul.mubr.f32.gmra.mxu0 %v2348
        %v2563 = vpop.f32.mrf.mxu0
        %v2564 = vadd.f32 0.0, %v2563
        %v2565 = vpop.f32.mrf.mxu0
        %2566 = vmatprep.mubr.f32.mxu0 0.0
        %2567 = vmatmul.mubr.f32.gmra.mxu0 %v2351
        %v2568 = vpop.f32.mrf.mxu0
        %v2569 = vadd.f32 0.0, %v2568
        %v2570 = vpop.f32.mrf.mxu0
        %2571 = vmatprep.mubr.f32.mxu0 0.0
        %2572 = vmatmul.mubr.f32.gmra.mxu0 %v2354
        %v2573 = vpop.f32.mrf.mxu0
        %v2574 = vadd.f32 0.0, %v2573
        %v2575 = vpop.f32.mrf.mxu0
        %2576 = vmatprep.mubr.f32.mxu0 0.0
        %2577 = vmatmul.mubr.f32.gmra.mxu0 %v2357
        %v2578 = vpop.f32.mrf.mxu0
        %v2579 = vadd.f32 0.0, %v2578
        %v2580 = vpop.f32.mrf.mxu0
        %2581 = vmatprep.mubr.f32.mxu0 0.0
        %2582 = vmatmul.mubr.f32.gmra.mxu0 %v2360
        %v2583 = vpop.f32.mrf.mxu0
        %v2584 = vadd.f32 0.0, %v2583
        %v2585 = vpop.f32.mrf.mxu0
        %2586 = vdwg.mxu0
        %v2587 = vadd.f32 %v2193, %v2429
        %v2588 = vadd.f32 %v2194, %v2434
        %v2589 = vadd.f32 %v2195, %v2439
        %v2590 = vadd.f32 %v2196, %v2444
        %v2591 = vadd.f32 %v2197, %v2449
        %v2592 = vadd.f32 %v2198, %v2454
        %v2593 = vadd.f32 %v2199, %v2459
        %v2594 = vadd.f32 %v2200, %v2464
        %v2595 = vadd.f32 %v2201, %v2469
        %v2596 = vadd.f32 %v2202, %v2474
        %v2597 = vadd.f32 %v2203, %v2479
        %v2598 = vadd.f32 %v2204, %v2484
        %v2599 = vadd.f32 %v2205, %v2489
        %v2600 = vadd.f32 %v2206, %v2494
        %v2601 = vadd.f32 %v2207, %v2499
        %v2602 = vadd.f32 %v2208, %v2504
        %v2603 = vadd.f32 %v2209, %v2509
        %v2604 = vadd.f32 %v2210, %v2514
        %v2605 = vadd.f32 %v2211, %v2519
        %v2606 = vadd.f32 %v2212, %v2524
        %v2607 = vadd.f32 %v2213, %v2529
        %v2608 = vadd.f32 %v2214, %v2534
        %v2609 = vadd.f32 %v2215, %v2539
        %v2610 = vadd.f32 %v2216, %v2544
        %v2611 = vadd.f32 %v2217, %v2549
        %v2612 = vadd.f32 %v2218, %v2554
        %v2613 = vadd.f32 %v2219, %v2559
        %v2614 = vadd.f32 %v2220, %v2564
        %v2615 = vadd.f32 %v2221, %v2569
        %v2616 = vadd.f32 %v2222, %v2574
        %v2617 = vadd.f32 %v2223, %v2579
        %v2618 = vadd.f32 %v2224, %v2584
        %v2619 = vld [vmem:[%s680] sm:$0xff]
        %v2620 = vld [vmem:[%s680 + $0x8] sm:$0xff]
        %v2621 = vld [vmem:[%s680 + $0x18] sm:$0xff]
        %v2622 = vld [vmem:[%s680 + $0x20] sm:$0xff]
        %v2623 = vld [vmem:[%s680 + $0x30] sm:$0xff]
        %v2624 = vld [vmem:[%s680 + $0x38] sm:$0xff]
        %v2625 = vld [vmem:[%s680 + $0x48] sm:$0xff]
        %v2626 = vld [vmem:[%s680 + $0x50] sm:$0xff]
        %v2627 = vld [vmem:[%s680 + $0x60] sm:$0xff]
        %v2628 = vld [vmem:[%s680 + $0x68] sm:$0xff]
        %v2629 = vld [vmem:[%s680 + $0x78] sm:$0xff]
        %v2630 = vld [vmem:[%s680 + $0x80] sm:$0xff]
        %v2631 = vld [vmem:[%s680 + $0x90] sm:$0xff]
        %v2632 = vld [vmem:[%s680 + $0x98] sm:$0xff]
        %v2633 = vld [vmem:[%s680 + $0xa8] sm:$0xff]
        %v2634 = vld [vmem:[%s680 + $0xb0] sm:$0xff]
        %v2635 = vld [vmem:[%s680 + $0xc0] sm:$0xff]
        %v2636 = vld [vmem:[%s680 + $0xc8] sm:$0xff]
        %v2637 = vld [vmem:[%s680 + $0xd8] sm:$0xff]
        %v2638 = vld [vmem:[%s680 + $0xe0] sm:$0xff]
        %v2639 = vld [vmem:[%s680 + $0xf0] sm:$0xff]
        %v2640 = vld [vmem:[%s680 + $0xf8] sm:$0xff]
        %v2641 = vld [vmem:[%s680 + $0x108] sm:$0xff]
        %v2642 = vld [vmem:[%s680 + $0x110] sm:$0xff]
        %v2643 = vld [vmem:[%s680 + $0x120] sm:$0xff]
        %v2644 = vld [vmem:[%s680 + $0x128] sm:$0xff]
        %v2645 = vld [vmem:[%s680 + $0x138] sm:$0xff]
        %v2646 = vld [vmem:[%s680 + $0x140] sm:$0xff]
        %v2647 = vld [vmem:[%s680 + $0x150] sm:$0xff]
        %v2648 = vld [vmem:[%s680 + $0x158] sm:$0xff]
        %v2649 = vld [vmem:[%s680 + $0x168] sm:$0xff]
        %v2650 = vld [vmem:[%s680 + $0x170] sm:$0xff]
        %s2651 = scalar_lea.vmem [#allocation6], 320
        %v2652 = vld [vmem:[%s2651] sm:$0xff]
        %v2653 = vld [vmem:[%s2651 + $0x8] sm:$0xff]
        %v2654 = vld [vmem:[%s2651 + $0x10] sm:$0xff]
        %v2655 = vld [vmem:[%s2651 + $0x18] sm:$0xff]
        %v2656 = vld [vmem:[%s2651 + $0x20] sm:$0xff]
        %v2657 = vld [vmem:[%s2651 + $0x28] sm:$0xff]
        %v2658 = vld [vmem:[%s2651 + $0x30] sm:$0xff]
        %v2659 = vld [vmem:[%s2651 + $0x38] sm:$0xff]
        %v2661 = vsel %vm624, %v2619, 0
        %v2664 = vsel %vm624, %v2620, 0
        %v2667 = vsel %vm624, %v2621, 0
        %v2670 = vsel %vm624, %v2622, 0
        %v2673 = vsel %vm624, %v2623, 0
        %v2676 = vsel %vm624, %v2624, 0
        %v2679 = vsel %vm624, %v2625, 0
        %v2682 = vsel %vm624, %v2626, 0
        %v2685 = vsel %vm624, %v2627, 0
        %v2688 = vsel %vm624, %v2628, 0
        %v2691 = vsel %vm624, %v2629, 0
        %v2694 = vsel %vm624, %v2630, 0
        %v2697 = vsel %vm624, %v2631, 0
        %v2700 = vsel %vm624, %v2632, 0
        %v2703 = vsel %vm624, %v2633, 0
        %v2706 = vsel %vm624, %v2634, 0
        %v2709 = vsel %vm624, %v2635, 0
        %v2712 = vsel %vm624, %v2636, 0
        %v2715 = vsel %vm624, %v2637, 0
        %v2718 = vsel %vm624, %v2638, 0
        %v2721 = vsel %vm624, %v2639, 0
        %v2724 = vsel %vm624, %v2640, 0
        %v2727 = vsel %vm624, %v2641, 0
        %v2730 = vsel %vm624, %v2642, 0
        %v2733 = vsel %vm624, %v2643, 0
        %v2736 = vsel %vm624, %v2644, 0
        %v2739 = vsel %vm624, %v2645, 0
        %v2742 = vsel %vm624, %v2646, 0
        %v2745 = vsel %vm624, %v2647, 0
        %v2748 = vsel %vm624, %v2648, 0
        %v2751 = vsel %vm624, %v2649, 0
        %v2754 = vsel %vm624, %v2650, 0
        %2756 = vmatprep.subr.mxu0 0.0
        %2757 = vmatpush1.msra.mxu0 0.0
        %2758 = vmatprep.subr.mxu0 0.0
        %2759 = vmatpush1.msra.mxu0 0.0
        %2760 = vmatprep.subr.mxu0 0.0
        %2761 = vmatpush1.msra.mxu0 0.0
        %2762 = vmatprep.subr.mxu0 0.0
        %2763 = vmatpush1.msra.mxu0 0.0
        %2764 = vmatprep.subr.mxu0 0.0
        %2765 = vmatpush1.msra.mxu0 0.0
        %2766 = vmatprep.subr.mxu0 0.0
        %2767 = vmatpush1.msra.mxu0 0.0
        %2768 = vmatprep.subr.mxu0 0.0
        %2769 = vmatpush1.msra.mxu0 0.0
        %2770 = vmatprep.subr.mxu0 0.0
        %2771 = vmatpush1.msra.mxu0 0.0
        %2772 = vmatprep.subr.mxu0 0.0
        %2773 = vmatpush1.msra.mxu0 %v2659
        %2774 = vmatprep.subr.mxu0 0.0
        %2775 = vmatpush1.msra.mxu0 %v2658
        %2776 = vmatprep.subr.mxu0 0.0
        %2777 = vmatpush1.msra.mxu0 %v2657
        %2778 = vmatprep.subr.mxu0 0.0
        %2779 = vmatpush1.msra.mxu0 %v2656
        %2780 = vmatprep.subr.mxu0 0.0
        %2781 = vmatpush1.msra.mxu0 %v2655
        %2782 = vmatprep.subr.mxu0 0.0
        %2783 = vmatpush1.msra.mxu0 %v2654
        %2784 = vmatprep.subr.mxu0 0.0
        %2785 = vmatpush1.msra.mxu0 %v2653
        %2786 = vmatprep.subr.mxu0 0.0
        %2787 = vmatpush1.msra.mxu0 %v2652
        %2788 = vmatprep.subr.mxu0 0.0
        %2789 = vmatpush2.msra.mxu0 0.0
        %2790 = vmatprep.subr.mxu0 0.0
        %2791 = vmatpush2.msra.mxu0 0.0
        %2792 = vmatprep.subr.mxu0 0.0
        %2793 = vmatpush2.msra.mxu0 0.0
        %2794 = vmatprep.subr.mxu0 0.0
        %2795 = vmatpush2.msra.mxu0 0.0
        %2796 = vmatprep.subr.mxu0 0.0
        %2797 = vmatpush2.msra.mxu0 0.0
        %2798 = vmatprep.subr.mxu0 0.0
        %2799 = vmatpush2.msra.mxu0 0.0
        %2800 = vmatprep.subr.mxu0 0.0
        %2801 = vmatpush2.msra.mxu0 0.0
        %2802 = vmatprep.subr.mxu0 0.0
        %2803 = vmatpush2.msra.mxu0 0.0
        %2804 = vmatprep.subr.mxu0 0.0
        %2805 = vmatpush2.msra.mxu0 0.0
        %2806 = vmatprep.subr.mxu0 0.0
        %2807 = vmatpush2.msra.mxu0 0.0
        %2808 = vmatprep.subr.mxu0 0.0
        %2809 = vmatpush2.msra.mxu0 0.0
        %2810 = vmatprep.subr.mxu0 0.0
        %2811 = vmatpush2.msra.mxu0 0.0
        %2812 = vmatprep.subr.mxu0 0.0
        %2813 = vmatpush2.msra.mxu0 0.0
        %2814 = vmatprep.subr.mxu0 0.0
        %2815 = vmatpush2.msra.mxu0 0.0
        %2816 = vmatprep.subr.mxu0 0.0
        %2817 = vmatpush2.msra.mxu0 0.0
        %2818 = vmatprep.subr.mxu0 0.0
        %2819 = vmatpush2.msra.mxu0 0.0
        %2820 = vmatprep.mubr.f32.mxu0 0.0
        %2821 = vmatmul.mubr.f32.gmra.mxu0 %v2661
        %v2822 = vpop.f32.mrf.mxu0
        %v2823 = vadd.f32 0.0, %v2822
        %v2824 = vpop.f32.mrf.mxu0
        %2825 = vmatprep.mubr.f32.mxu0 0.0
        %2826 = vmatmul.mubr.f32.gmra.mxu0 %v2664
        %v2827 = vpop.f32.mrf.mxu0
        %v2828 = vadd.f32 0.0, %v2827
        %v2829 = vpop.f32.mrf.mxu0
        %2830 = vmatprep.mubr.f32.mxu0 0.0
        %2831 = vmatmul.mubr.f32.gmra.mxu0 %v2667
        %v2832 = vpop.f32.mrf.mxu0
        %v2833 = vadd.f32 0.0, %v2832
        %v2834 = vpop.f32.mrf.mxu0
        %2835 = vmatprep.mubr.f32.mxu0 0.0
        %2836 = vmatmul.mubr.f32.gmra.mxu0 %v2670
        %v2837 = vpop.f32.mrf.mxu0
        %v2838 = vadd.f32 0.0, %v2837
        %v2839 = vpop.f32.mrf.mxu0
        %2840 = vmatprep.mubr.f32.mxu0 0.0
        %2841 = vmatmul.mubr.f32.gmra.mxu0 %v2673
        %v2842 = vpop.f32.mrf.mxu0
        %v2843 = vadd.f32 0.0, %v2842
        %v2844 = vpop.f32.mrf.mxu0
        %2845 = vmatprep.mubr.f32.mxu0 0.0
        %2846 = vmatmul.mubr.f32.gmra.mxu0 %v2676
        %v2847 = vpop.f32.mrf.mxu0
        %v2848 = vadd.f32 0.0, %v2847
        %v2849 = vpop.f32.mrf.mxu0
        %2850 = vmatprep.mubr.f32.mxu0 0.0
        %2851 = vmatmul.mubr.f32.gmra.mxu0 %v2679
        %v2852 = vpop.f32.mrf.mxu0
        %v2853 = vadd.f32 0.0, %v2852
        %v2854 = vpop.f32.mrf.mxu0
        %2855 = vmatprep.mubr.f32.mxu0 0.0
        %2856 = vmatmul.mubr.f32.gmra.mxu0 %v2682
        %v2857 = vpop.f32.mrf.mxu0
        %v2858 = vadd.f32 0.0, %v2857
        %v2859 = vpop.f32.mrf.mxu0
        %2860 = vmatprep.mubr.f32.mxu0 0.0
        %2861 = vmatmul.mubr.f32.gmra.mxu0 %v2685
        %v2862 = vpop.f32.mrf.mxu0
        %v2863 = vadd.f32 0.0, %v2862
        %v2864 = vpop.f32.mrf.mxu0
        %2865 = vmatprep.mubr.f32.mxu0 0.0
        %2866 = vmatmul.mubr.f32.gmra.mxu0 %v2688
        %v2867 = vpop.f32.mrf.mxu0
        %v2868 = vadd.f32 0.0, %v2867
        %v2869 = vpop.f32.mrf.mxu0
        %2870 = vmatprep.mubr.f32.mxu0 0.0
        %2871 = vmatmul.mubr.f32.gmra.mxu0 %v2691
        %v2872 = vpop.f32.mrf.mxu0
        %v2873 = vadd.f32 0.0, %v2872
        %v2874 = vpop.f32.mrf.mxu0
        %2875 = vmatprep.mubr.f32.mxu0 0.0
        %2876 = vmatmul.mubr.f32.gmra.mxu0 %v2694
        %v2877 = vpop.f32.mrf.mxu0
        %v2878 = vadd.f32 0.0, %v2877
        %v2879 = vpop.f32.mrf.mxu0
        %2880 = vmatprep.mubr.f32.mxu0 0.0
        %2881 = vmatmul.mubr.f32.gmra.mxu0 %v2697
        %v2882 = vpop.f32.mrf.mxu0
        %v2883 = vadd.f32 0.0, %v2882
        %v2884 = vpop.f32.mrf.mxu0
        %2885 = vmatprep.mubr.f32.mxu0 0.0
        %2886 = vmatmul.mubr.f32.gmra.mxu0 %v2700
        %v2887 = vpop.f32.mrf.mxu0
        %v2888 = vadd.f32 0.0, %v2887
        %v2889 = vpop.f32.mrf.mxu0
        %2890 = vmatprep.mubr.f32.mxu0 0.0
        %2891 = vmatmul.mubr.f32.gmra.mxu0 %v2703
        %v2892 = vpop.f32.mrf.mxu0
        %v2893 = vadd.f32 0.0, %v2892
        %v2894 = vpop.f32.mrf.mxu0
        %2895 = vmatprep.mubr.f32.mxu0 0.0
        %2896 = vmatmul.mubr.f32.gmra.mxu0 %v2706
        %v2897 = vpop.f32.mrf.mxu0
        %v2898 = vadd.f32 0.0, %v2897
        %v2899 = vpop.f32.mrf.mxu0
        %2900 = vmatprep.mubr.f32.mxu0 0.0
        %2901 = vmatmul.mubr.f32.gmra.mxu0 %v2709
        %v2902 = vpop.f32.mrf.mxu0
        %v2903 = vadd.f32 0.0, %v2902
        %v2904 = vpop.f32.mrf.mxu0
        %2905 = vmatprep.mubr.f32.mxu0 0.0
        %2906 = vmatmul.mubr.f32.gmra.mxu0 %v2712
        %v2907 = vpop.f32.mrf.mxu0
        %v2908 = vadd.f32 0.0, %v2907
        %v2909 = vpop.f32.mrf.mxu0
        %2910 = vmatprep.mubr.f32.mxu0 0.0
        %2911 = vmatmul.mubr.f32.gmra.mxu0 %v2715
        %v2912 = vpop.f32.mrf.mxu0
        %v2913 = vadd.f32 0.0, %v2912
        %v2914 = vpop.f32.mrf.mxu0
        %2915 = vmatprep.mubr.f32.mxu0 0.0
        %2916 = vmatmul.mubr.f32.gmra.mxu0 %v2718
        %v2917 = vpop.f32.mrf.mxu0
        %v2918 = vadd.f32 0.0, %v2917
        %v2919 = vpop.f32.mrf.mxu0
        %2920 = vmatprep.mubr.f32.mxu0 0.0
        %2921 = vmatmul.mubr.f32.gmra.mxu0 %v2721
        %v2922 = vpop.f32.mrf.mxu0
        %v2923 = vadd.f32 0.0, %v2922
        %v2924 = vpop.f32.mrf.mxu0
        %2925 = vmatprep.mubr.f32.mxu0 0.0
        %2926 = vmatmul.mubr.f32.gmra.mxu0 %v2724
        %v2927 = vpop.f32.mrf.mxu0
        %v2928 = vadd.f32 0.0, %v2927
        %v2929 = vpop.f32.mrf.mxu0
        %2930 = vmatprep.mubr.f32.mxu0 0.0
        %2931 = vmatmul.mubr.f32.gmra.mxu0 %v2727
        %v2932 = vpop.f32.mrf.mxu0
        %v2933 = vadd.f32 0.0, %v2932
        %v2934 = vpop.f32.mrf.mxu0
        %2935 = vmatprep.mubr.f32.mxu0 0.0
        %2936 = vmatmul.mubr.f32.gmra.mxu0 %v2730
        %v2937 = vpop.f32.mrf.mxu0
        %v2938 = vadd.f32 0.0, %v2937
        %v2939 = vpop.f32.mrf.mxu0
        %2940 = vmatprep.mubr.f32.mxu0 0.0
        %2941 = vmatmul.mubr.f32.gmra.mxu0 %v2733
        %v2942 = vpop.f32.mrf.mxu0
        %v2943 = vadd.f32 0.0, %v2942
        %v2944 = vpop.f32.mrf.mxu0
        %2945 = vmatprep.mubr.f32.mxu0 0.0
        %2946 = vmatmul.mubr.f32.gmra.mxu0 %v2736
        %v2947 = vpop.f32.mrf.mxu0
        %v2948 = vadd.f32 0.0, %v2947
        %v2949 = vpop.f32.mrf.mxu0
        %2950 = vmatprep.mubr.f32.mxu0 0.0
        %2951 = vmatmul.mubr.f32.gmra.mxu0 %v2739
        %v2952 = vpop.f32.mrf.mxu0
        %v2953 = vadd.f32 0.0, %v2952
        %v2954 = vpop.f32.mrf.mxu0
        %2955 = vmatprep.mubr.f32.mxu0 0.0
        %2956 = vmatmul.mubr.f32.gmra.mxu0 %v2742
        %v2957 = vpop.f32.mrf.mxu0
        %v2958 = vadd.f32 0.0, %v2957
        %v2959 = vpop.f32.mrf.mxu0
        %2960 = vmatprep.mubr.f32.mxu0 0.0
        %2961 = vmatmul.mubr.f32.gmra.mxu0 %v2745
        %v2962 = vpop.f32.mrf.mxu0
        %v2963 = vadd.f32 0.0, %v2962
        %v2964 = vpop.f32.mrf.mxu0
        %2965 = vmatprep.mubr.f32.mxu0 0.0
        %2966 = vmatmul.mubr.f32.gmra.mxu0 %v2748
        %v2967 = vpop.f32.mrf.mxu0
        %v2968 = vadd.f32 0.0, %v2967
        %v2969 = vpop.f32.mrf.mxu0
        %2970 = vmatprep.mubr.f32.mxu0 0.0
        %2971 = vmatmul.mubr.f32.gmra.mxu0 %v2751
        %v2972 = vpop.f32.mrf.mxu0
        %v2973 = vadd.f32 0.0, %v2972
        %v2974 = vpop.f32.mrf.mxu0
        %2975 = vmatprep.mubr.f32.mxu0 0.0
        %2976 = vmatmul.mubr.f32.gmra.mxu0 %v2754
        %v2977 = vpop.f32.mrf.mxu0
        %v2978 = vadd.f32 0.0, %v2977
        %v2979 = vpop.f32.mrf.mxu0
        %2980 = vdwg.mxu0
        %v2981 = vadd.f32 %v2587, %v2823
        %v2982 = vadd.f32 %v2588, %v2828
        %v2983 = vadd.f32 %v2589, %v2833
        %v2984 = vadd.f32 %v2590, %v2838
        %v2985 = vadd.f32 %v2591, %v2843
        %v2986 = vadd.f32 %v2592, %v2848
        %v2987 = vadd.f32 %v2593, %v2853
        %v2988 = vadd.f32 %v2594, %v2858
        %v2989 = vadd.f32 %v2595, %v2863
        %v2990 = vadd.f32 %v2596, %v2868
        %v2991 = vadd.f32 %v2597, %v2873
        %v2992 = vadd.f32 %v2598, %v2878
        %v2993 = vadd.f32 %v2599, %v2883
        %v2994 = vadd.f32 %v2600, %v2888
        %v2995 = vadd.f32 %v2601, %v2893
        %v2996 = vadd.f32 %v2602, %v2898
        %v2997 = vadd.f32 %v2603, %v2903
        %v2998 = vadd.f32 %v2604, %v2908
        %v2999 = vadd.f32 %v2605, %v2913
        %v3000 = vadd.f32 %v2606, %v2918
        %v3001 = vadd.f32 %v2607, %v2923
        %v3002 = vadd.f32 %v2608, %v2928
        %v3003 = vadd.f32 %v2609, %v2933
        %v3004 = vadd.f32 %v2610, %v2938
        %v3005 = vadd.f32 %v2611, %v2943
        %v3006 = vadd.f32 %v2612, %v2948
        %v3007 = vadd.f32 %v2613, %v2953
        %v3008 = vadd.f32 %v2614, %v2958
        %v3009 = vadd.f32 %v2615, %v2963
        %v3010 = vadd.f32 %v2616, %v2968
        %v3011 = vadd.f32 %v2617, %v2973
        %v3012 = vadd.f32 %v2618, %v2978
        %v3013 = vld [vmem:[#allocation2 + $0x2] sm:$0xff]
        %v3014 = vld [vmem:[#allocation2 + $0xa] sm:$0xff]
        %v3015 = vld [vmem:[#allocation2 + $0x1a] sm:$0xff]
        %v3016 = vld [vmem:[#allocation2 + $0x22] sm:$0xff]
        %v3017 = vld [vmem:[#allocation2 + $0x32] sm:$0xff]
        %v3018 = vld [vmem:[#allocation2 + $0x3a] sm:$0xff]
        %v3019 = vld [vmem:[#allocation2 + $0x4a] sm:$0xff]
        %v3020 = vld [vmem:[#allocation2 + $0x52] sm:$0xff]
        %v3021 = vld [vmem:[#allocation2 + $0x62] sm:$0xff]
        %v3022 = vld [vmem:[#allocation2 + $0x6a] sm:$0xff]
        %v3023 = vld [vmem:[#allocation2 + $0x7a] sm:$0xff]
        %v3024 = vld [vmem:[#allocation2 + $0x82] sm:$0xff]
        %v3025 = vld [vmem:[#allocation2 + $0x92] sm:$0xff]
        %v3026 = vld [vmem:[#allocation2 + $0x9a] sm:$0xff]
        %v3027 = vld [vmem:[#allocation2 + $0xaa] sm:$0xff]
        %v3028 = vld [vmem:[#allocation2 + $0xb2] sm:$0xff]
        %v3029 = vld [vmem:[#allocation2 + $0xc2] sm:$0xff]
        %v3030 = vld [vmem:[#allocation2 + $0xca] sm:$0xff]
        %v3031 = vld [vmem:[#allocation2 + $0xda] sm:$0xff]
        %v3032 = vld [vmem:[#allocation2 + $0xe2] sm:$0xff]
        %v3033 = vld [vmem:[#allocation2 + $0xf2] sm:$0xff]
        %v3034 = vld [vmem:[#allocation2 + $0xfa] sm:$0xff]
        %v3035 = vld [vmem:[#allocation2 + $0x10a] sm:$0xff]
        %v3036 = vld [vmem:[#allocation2 + $0x112] sm:$0xff]
        %v3037 = vld [vmem:[#allocation2 + $0x122] sm:$0xff]
        %v3038 = vld [vmem:[#allocation2 + $0x12a] sm:$0xff]
        %v3039 = vld [vmem:[#allocation2 + $0x13a] sm:$0xff]
        %v3040 = vld [vmem:[#allocation2 + $0x142] sm:$0xff]
        %v3041 = vld [vmem:[#allocation2 + $0x152] sm:$0xff]
        %v3042 = vld [vmem:[#allocation2 + $0x15a] sm:$0xff]
        %v3043 = vld [vmem:[#allocation2 + $0x16a] sm:$0xff]
        %v3044 = vld [vmem:[#allocation2 + $0x172] sm:$0xff]
        %s3045 = scalar_lea.vmem [#allocation6], 384
        %v3046 = vld [vmem:[%s3045] sm:$0xff]
        %v3047 = vld [vmem:[%s3045 + $0x8] sm:$0xff]
        %v3048 = vld [vmem:[%s3045 + $0x10] sm:$0xff]
        %v3049 = vld [vmem:[%s3045 + $0x18] sm:$0xff]
        %v3050 = vld [vmem:[%s3045 + $0x20] sm:$0xff]
        %v3051 = vld [vmem:[%s3045 + $0x28] sm:$0xff]
        %v3052 = vld [vmem:[%s3045 + $0x30] sm:$0xff]
        %v3053 = vld [vmem:[%s3045 + $0x38] sm:$0xff]
        %v3055 = vsel %vm624, %v3013, 0
        %v3058 = vsel %vm624, %v3014, 0
        %v3061 = vsel %vm624, %v3015, 0
        %v3064 = vsel %vm624, %v3016, 0
        %v3067 = vsel %vm624, %v3017, 0
        %v3070 = vsel %vm624, %v3018, 0
        %v3073 = vsel %vm624, %v3019, 0
        %v3076 = vsel %vm624, %v3020, 0
        %v3079 = vsel %vm624, %v3021, 0
        %v3082 = vsel %vm624, %v3022, 0
        %v3085 = vsel %vm624, %v3023, 0
        %v3088 = vsel %vm624, %v3024, 0
        %v3091 = vsel %vm624, %v3025, 0
        %v3094 = vsel %vm624, %v3026, 0
        %v3097 = vsel %vm624, %v3027, 0
        %v3100 = vsel %vm624, %v3028, 0
        %v3103 = vsel %vm624, %v3029, 0
        %v3106 = vsel %vm624, %v3030, 0
        %v3109 = vsel %vm624, %v3031, 0
        %v3112 = vsel %vm624, %v3032, 0
        %v3115 = vsel %vm624, %v3033, 0
        %v3118 = vsel %vm624, %v3034, 0
        %v3121 = vsel %vm624, %v3035, 0
        %v3124 = vsel %vm624, %v3036, 0
        %v3127 = vsel %vm624, %v3037, 0
        %v3130 = vsel %vm624, %v3038, 0
        %v3133 = vsel %vm624, %v3039, 0
        %v3136 = vsel %vm624, %v3040, 0
        %v3139 = vsel %vm624, %v3041, 0
        %v3142 = vsel %vm624, %v3042, 0
        %v3145 = vsel %vm624, %v3043, 0
        %v3148 = vsel %vm624, %v3044, 0
        %3150 = vmatprep.subr.mxu0 0.0
        %3151 = vmatpush1.msra.mxu0 0.0
        %3152 = vmatprep.subr.mxu0 0.0
        %3153 = vmatpush1.msra.mxu0 0.0
        %3154 = vmatprep.subr.mxu0 0.0
        %3155 = vmatpush1.msra.mxu0 0.0
        %3156 = vmatprep.subr.mxu0 0.0
        %3157 = vmatpush1.msra.mxu0 0.0
        %3158 = vmatprep.subr.mxu0 0.0
        %3159 = vmatpush1.msra.mxu0 0.0
        %3160 = vmatprep.subr.mxu0 0.0
        %3161 = vmatpush1.msra.mxu0 0.0
        %3162 = vmatprep.subr.mxu0 0.0
        %3163 = vmatpush1.msra.mxu0 0.0
        %3164 = vmatprep.subr.mxu0 0.0
        %3165 = vmatpush1.msra.mxu0 0.0
        %3166 = vmatprep.subr.mxu0 0.0
        %3167 = vmatpush1.msra.mxu0 %v3053
        %3168 = vmatprep.subr.mxu0 0.0
        %3169 = vmatpush1.msra.mxu0 %v3052
        %3170 = vmatprep.subr.mxu0 0.0
        %3171 = vmatpush1.msra.mxu0 %v3051
        %3172 = vmatprep.subr.mxu0 0.0
        %3173 = vmatpush1.msra.mxu0 %v3050
        %3174 = vmatprep.subr.mxu0 0.0
        %3175 = vmatpush1.msra.mxu0 %v3049
        %3176 = vmatprep.subr.mxu0 0.0
        %3177 = vmatpush1.msra.mxu0 %v3048
        %3178 = vmatprep.subr.mxu0 0.0
        %3179 = vmatpush1.msra.mxu0 %v3047
        %3180 = vmatprep.subr.mxu0 0.0
        %3181 = vmatpush1.msra.mxu0 %v3046
        %3182 = vmatprep.subr.mxu0 0.0
        %3183 = vmatpush2.msra.mxu0 0.0
        %3184 = vmatprep.subr.mxu0 0.0
        %3185 = vmatpush2.msra.mxu0 0.0
        %3186 = vmatprep.subr.mxu0 0.0
        %3187 = vmatpush2.msra.mxu0 0.0
        %3188 = vmatprep.subr.mxu0 0.0
        %3189 = vmatpush2.msra.mxu0 0.0
        %3190 = vmatprep.subr.mxu0 0.0
        %3191 = vmatpush2.msra.mxu0 0.0
        %3192 = vmatprep.subr.mxu0 0.0
        %3193 = vmatpush2.msra.mxu0 0.0
        %3194 = vmatprep.subr.mxu0 0.0
        %3195 = vmatpush2.msra.mxu0 0.0
        %3196 = vmatprep.subr.mxu0 0.0
        %3197 = vmatpush2.msra.mxu0 0.0
        %3198 = vmatprep.subr.mxu0 0.0
        %3199 = vmatpush2.msra.mxu0 0.0
        %3200 = vmatprep.subr.mxu0 0.0
        %3201 = vmatpush2.msra.mxu0 0.0
        %3202 = vmatprep.subr.mxu0 0.0
        %3203 = vmatpush2.msra.mxu0 0.0
        %3204 = vmatprep.subr.mxu0 0.0
        %3205 = vmatpush2.msra.mxu0 0.0
        %3206 = vmatprep.subr.mxu0 0.0
        %3207 = vmatpush2.msra.mxu0 0.0
        %3208 = vmatprep.subr.mxu0 0.0
        %3209 = vmatpush2.msra.mxu0 0.0
        %3210 = vmatprep.subr.mxu0 0.0
        %3211 = vmatpush2.msra.mxu0 0.0
        %3212 = vmatprep.subr.mxu0 0.0
        %3213 = vmatpush2.msra.mxu0 0.0
        %3214 = vmatprep.mubr.f32.mxu0 0.0
        %3215 = vmatmul.mubr.f32.gmra.mxu0 %v3055
        %v3216 = vpop.f32.mrf.mxu0
        %v3217 = vadd.f32 0.0, %v3216
        %v3218 = vpop.f32.mrf.mxu0
        %3219 = vmatprep.mubr.f32.mxu0 0.0
        %3220 = vmatmul.mubr.f32.gmra.mxu0 %v3058
        %v3221 = vpop.f32.mrf.mxu0
        %v3222 = vadd.f32 0.0, %v3221
        %v3223 = vpop.f32.mrf.mxu0
        %3224 = vmatprep.mubr.f32.mxu0 0.0
        %3225 = vmatmul.mubr.f32.gmra.mxu0 %v3061
        %v3226 = vpop.f32.mrf.mxu0
        %v3227 = vadd.f32 0.0, %v3226
        %v3228 = vpop.f32.mrf.mxu0
        %3229 = vmatprep.mubr.f32.mxu0 0.0
        %3230 = vmatmul.mubr.f32.gmra.mxu0 %v3064
        %v3231 = vpop.f32.mrf.mxu0
        %v3232 = vadd.f32 0.0, %v3231
        %v3233 = vpop.f32.mrf.mxu0
        %3234 = vmatprep.mubr.f32.mxu0 0.0
        %3235 = vmatmul.mubr.f32.gmra.mxu0 %v3067
        %v3236 = vpop.f32.mrf.mxu0
        %v3237 = vadd.f32 0.0, %v3236
        %v3238 = vpop.f32.mrf.mxu0
        %3239 = vmatprep.mubr.f32.mxu0 0.0
        %3240 = vmatmul.mubr.f32.gmra.mxu0 %v3070
        %v3241 = vpop.f32.mrf.mxu0
        %v3242 = vadd.f32 0.0, %v3241
        %v3243 = vpop.f32.mrf.mxu0
        %3244 = vmatprep.mubr.f32.mxu0 0.0
        %3245 = vmatmul.mubr.f32.gmra.mxu0 %v3073
        %v3246 = vpop.f32.mrf.mxu0
        %v3247 = vadd.f32 0.0, %v3246
        %v3248 = vpop.f32.mrf.mxu0
        %3249 = vmatprep.mubr.f32.mxu0 0.0
        %3250 = vmatmul.mubr.f32.gmra.mxu0 %v3076
        %v3251 = vpop.f32.mrf.mxu0
        %v3252 = vadd.f32 0.0, %v3251
        %v3253 = vpop.f32.mrf.mxu0
        %3254 = vmatprep.mubr.f32.mxu0 0.0
        %3255 = vmatmul.mubr.f32.gmra.mxu0 %v3079
        %v3256 = vpop.f32.mrf.mxu0
        %v3257 = vadd.f32 0.0, %v3256
        %v3258 = vpop.f32.mrf.mxu0
        %3259 = vmatprep.mubr.f32.mxu0 0.0
        %3260 = vmatmul.mubr.f32.gmra.mxu0 %v3082
        %v3261 = vpop.f32.mrf.mxu0
        %v3262 = vadd.f32 0.0, %v3261
        %v3263 = vpop.f32.mrf.mxu0
        %3264 = vmatprep.mubr.f32.mxu0 0.0
        %3265 = vmatmul.mubr.f32.gmra.mxu0 %v3085
        %v3266 = vpop.f32.mrf.mxu0
        %v3267 = vadd.f32 0.0, %v3266
        %v3268 = vpop.f32.mrf.mxu0
        %3269 = vmatprep.mubr.f32.mxu0 0.0
        %3270 = vmatmul.mubr.f32.gmra.mxu0 %v3088
        %v3271 = vpop.f32.mrf.mxu0
        %v3272 = vadd.f32 0.0, %v3271
        %v3273 = vpop.f32.mrf.mxu0
        %3274 = vmatprep.mubr.f32.mxu0 0.0
        %3275 = vmatmul.mubr.f32.gmra.mxu0 %v3091
        %v3276 = vpop.f32.mrf.mxu0
        %v3277 = vadd.f32 0.0, %v3276
        %v3278 = vpop.f32.mrf.mxu0
        %3279 = vmatprep.mubr.f32.mxu0 0.0
        %3280 = vmatmul.mubr.f32.gmra.mxu0 %v3094
        %v3281 = vpop.f32.mrf.mxu0
        %v3282 = vadd.f32 0.0, %v3281
        %v3283 = vpop.f32.mrf.mxu0
        %3284 = vmatprep.mubr.f32.mxu0 0.0
        %3285 = vmatmul.mubr.f32.gmra.mxu0 %v3097
        %v3286 = vpop.f32.mrf.mxu0
        %v3287 = vadd.f32 0.0, %v3286
        %v3288 = vpop.f32.mrf.mxu0
        %3289 = vmatprep.mubr.f32.mxu0 0.0
        %3290 = vmatmul.mubr.f32.gmra.mxu0 %v3100
        %v3291 = vpop.f32.mrf.mxu0
        %v3292 = vadd.f32 0.0, %v3291
        %v3293 = vpop.f32.mrf.mxu0
        %3294 = vmatprep.mubr.f32.mxu0 0.0
        %3295 = vmatmul.mubr.f32.gmra.mxu0 %v3103
        %v3296 = vpop.f32.mrf.mxu0
        %v3297 = vadd.f32 0.0, %v3296
        %v3298 = vpop.f32.mrf.mxu0
        %3299 = vmatprep.mubr.f32.mxu0 0.0
        %3300 = vmatmul.mubr.f32.gmra.mxu0 %v3106
        %v3301 = vpop.f32.mrf.mxu0
        %v3302 = vadd.f32 0.0, %v3301
        %v3303 = vpop.f32.mrf.mxu0
        %3304 = vmatprep.mubr.f32.mxu0 0.0
        %3305 = vmatmul.mubr.f32.gmra.mxu0 %v3109
        %v3306 = vpop.f32.mrf.mxu0
        %v3307 = vadd.f32 0.0, %v3306
        %v3308 = vpop.f32.mrf.mxu0
        %3309 = vmatprep.mubr.f32.mxu0 0.0
        %3310 = vmatmul.mubr.f32.gmra.mxu0 %v3112
        %v3311 = vpop.f32.mrf.mxu0
        %v3312 = vadd.f32 0.0, %v3311
        %v3313 = vpop.f32.mrf.mxu0
        %3314 = vmatprep.mubr.f32.mxu0 0.0
        %3315 = vmatmul.mubr.f32.gmra.mxu0 %v3115
        %v3316 = vpop.f32.mrf.mxu0
        %v3317 = vadd.f32 0.0, %v3316
        %v3318 = vpop.f32.mrf.mxu0
        %3319 = vmatprep.mubr.f32.mxu0 0.0
        %3320 = vmatmul.mubr.f32.gmra.mxu0 %v3118
        %v3321 = vpop.f32.mrf.mxu0
        %v3322 = vadd.f32 0.0, %v3321
        %v3323 = vpop.f32.mrf.mxu0
        %3324 = vmatprep.mubr.f32.mxu0 0.0
        %3325 = vmatmul.mubr.f32.gmra.mxu0 %v3121
        %v3326 = vpop.f32.mrf.mxu0
        %v3327 = vadd.f32 0.0, %v3326
        %v3328 = vpop.f32.mrf.mxu0
        %3329 = vmatprep.mubr.f32.mxu0 0.0
        %3330 = vmatmul.mubr.f32.gmra.mxu0 %v3124
        %v3331 = vpop.f32.mrf.mxu0
        %v3332 = vadd.f32 0.0, %v3331
        %v3333 = vpop.f32.mrf.mxu0
        %3334 = vmatprep.mubr.f32.mxu0 0.0
        %3335 = vmatmul.mubr.f32.gmra.mxu0 %v3127
        %v3336 = vpop.f32.mrf.mxu0
        %v3337 = vadd.f32 0.0, %v3336
        %v3338 = vpop.f32.mrf.mxu0
        %3339 = vmatprep.mubr.f32.mxu0 0.0
        %3340 = vmatmul.mubr.f32.gmra.mxu0 %v3130
        %v3341 = vpop.f32.mrf.mxu0
        %v3342 = vadd.f32 0.0, %v3341
        %v3343 = vpop.f32.mrf.mxu0
        %3344 = vmatprep.mubr.f32.mxu0 0.0
        %3345 = vmatmul.mubr.f32.gmra.mxu0 %v3133
        %v3346 = vpop.f32.mrf.mxu0
        %v3347 = vadd.f32 0.0, %v3346
        %v3348 = vpop.f32.mrf.mxu0
        %3349 = vmatprep.mubr.f32.mxu0 0.0
        %3350 = vmatmul.mubr.f32.gmra.mxu0 %v3136
        %v3351 = vpop.f32.mrf.mxu0
        %v3352 = vadd.f32 0.0, %v3351
        %v3353 = vpop.f32.mrf.mxu0
        %3354 = vmatprep.mubr.f32.mxu0 0.0
        %3355 = vmatmul.mubr.f32.gmra.mxu0 %v3139
        %v3356 = vpop.f32.mrf.mxu0
        %v3357 = vadd.f32 0.0, %v3356
        %v3358 = vpop.f32.mrf.mxu0
        %3359 = vmatprep.mubr.f32.mxu0 0.0
        %3360 = vmatmul.mubr.f32.gmra.mxu0 %v3142
        %v3361 = vpop.f32.mrf.mxu0
        %v3362 = vadd.f32 0.0, %v3361
        %v3363 = vpop.f32.mrf.mxu0
        %3364 = vmatprep.mubr.f32.mxu0 0.0
        %3365 = vmatmul.mubr.f32.gmra.mxu0 %v3145
        %v3366 = vpop.f32.mrf.mxu0
        %v3367 = vadd.f32 0.0, %v3366
        %v3368 = vpop.f32.mrf.mxu0
        %3369 = vmatprep.mubr.f32.mxu0 0.0
        %3370 = vmatmul.mubr.f32.gmra.mxu0 %v3148
        %v3371 = vpop.f32.mrf.mxu0
        %v3372 = vadd.f32 0.0, %v3371
        %v3373 = vpop.f32.mrf.mxu0
        %3374 = vdwg.mxu0
        %v3375 = vadd.f32 %v2981, %v3217
        %v3376 = vadd.f32 %v2982, %v3222
        %v3377 = vadd.f32 %v2983, %v3227
        %v3378 = vadd.f32 %v2984, %v3232
        %v3379 = vadd.f32 %v2985, %v3237
        %v3380 = vadd.f32 %v2986, %v3242
        %v3381 = vadd.f32 %v2987, %v3247
        %v3382 = vadd.f32 %v2988, %v3252
        %v3383 = vadd.f32 %v2989, %v3257
        %v3384 = vadd.f32 %v2990, %v3262
        %v3385 = vadd.f32 %v2991, %v3267
        %v3386 = vadd.f32 %v2992, %v3272
        %v3387 = vadd.f32 %v2993, %v3277
        %v3388 = vadd.f32 %v2994, %v3282
        %v3389 = vadd.f32 %v2995, %v3287
        %v3390 = vadd.f32 %v2996, %v3292
        %v3391 = vadd.f32 %v2997, %v3297
        %v3392 = vadd.f32 %v2998, %v3302
        %v3393 = vadd.f32 %v2999, %v3307
        %v3394 = vadd.f32 %v3000, %v3312
        %v3395 = vadd.f32 %v3001, %v3317
        %v3396 = vadd.f32 %v3002, %v3322
        %v3397 = vadd.f32 %v3003, %v3327
        %v3398 = vadd.f32 %v3004, %v3332
        %v3399 = vadd.f32 %v3005, %v3337
        %v3400 = vadd.f32 %v3006, %v3342
        %v3401 = vadd.f32 %v3007, %v3347
        %v3402 = vadd.f32 %v3008, %v3352
        %v3403 = vadd.f32 %v3009, %v3357
        %v3404 = vadd.f32 %v3010, %v3362
        %v3405 = vadd.f32 %v3011, %v3367
        %v3406 = vadd.f32 %v3012, %v3372
        %v3407 = vld [vmem:[#allocation2 + $0x1] sm:$0xff]
        %v3408 = vld [vmem:[#allocation2 + $0x9] sm:$0xff]
        %v3409 = vld [vmem:[#allocation2 + $0x19] sm:$0xff]
        %v3410 = vld [vmem:[#allocation2 + $0x21] sm:$0xff]
        %v3411 = vld [vmem:[#allocation2 + $0x31] sm:$0xff]
        %v3412 = vld [vmem:[#allocation2 + $0x39] sm:$0xff]
        %v3413 = vld [vmem:[#allocation2 + $0x49] sm:$0xff]
        %v3414 = vld [vmem:[#allocation2 + $0x51] sm:$0xff]
        %v3415 = vld [vmem:[#allocation2 + $0x61] sm:$0xff]
        %v3416 = vld [vmem:[#allocation2 + $0x69] sm:$0xff]
        %v3417 = vld [vmem:[#allocation2 + $0x79] sm:$0xff]
        %v3418 = vld [vmem:[#allocation2 + $0x81] sm:$0xff]
        %v3419 = vld [vmem:[#allocation2 + $0x91] sm:$0xff]
        %v3420 = vld [vmem:[#allocation2 + $0x99] sm:$0xff]
        %v3421 = vld [vmem:[#allocation2 + $0xa9] sm:$0xff]
        %v3422 = vld [vmem:[#allocation2 + $0xb1] sm:$0xff]
        %v3423 = vld [vmem:[#allocation2 + $0xc1] sm:$0xff]
        %v3424 = vld [vmem:[#allocation2 + $0xc9] sm:$0xff]
        %v3425 = vld [vmem:[#allocation2 + $0xd9] sm:$0xff]
        %v3426 = vld [vmem:[#allocation2 + $0xe1] sm:$0xff]
        %v3427 = vld [vmem:[#allocation2 + $0xf1] sm:$0xff]
        %v3428 = vld [vmem:[#allocation2 + $0xf9] sm:$0xff]
        %v3429 = vld [vmem:[#allocation2 + $0x109] sm:$0xff]
        %v3430 = vld [vmem:[#allocation2 + $0x111] sm:$0xff]
        %v3431 = vld [vmem:[#allocation2 + $0x121] sm:$0xff]
        %v3432 = vld [vmem:[#allocation2 + $0x129] sm:$0xff]
        %v3433 = vld [vmem:[#allocation2 + $0x139] sm:$0xff]
        %v3434 = vld [vmem:[#allocation2 + $0x141] sm:$0xff]
        %v3435 = vld [vmem:[#allocation2 + $0x151] sm:$0xff]
        %v3436 = vld [vmem:[#allocation2 + $0x159] sm:$0xff]
        %v3437 = vld [vmem:[#allocation2 + $0x169] sm:$0xff]
        %v3438 = vld [vmem:[#allocation2 + $0x171] sm:$0xff]
        %s3439 = scalar_lea.vmem [#allocation6], 448
        %v3440 = vld [vmem:[%s3439] sm:$0xff]
        %v3441 = vld [vmem:[%s3439 + $0x8] sm:$0xff]
        %v3442 = vld [vmem:[%s3439 + $0x10] sm:$0xff]
        %v3443 = vld [vmem:[%s3439 + $0x18] sm:$0xff]
        %v3444 = vld [vmem:[%s3439 + $0x20] sm:$0xff]
        %v3445 = vld [vmem:[%s3439 + $0x28] sm:$0xff]
        %v3446 = vld [vmem:[%s3439 + $0x30] sm:$0xff]
        %v3447 = vld [vmem:[%s3439 + $0x38] sm:$0xff]
        %v3449 = vsel %vm624, %v3407, 0
        %v3452 = vsel %vm624, %v3408, 0
        %v3455 = vsel %vm624, %v3409, 0
        %v3458 = vsel %vm624, %v3410, 0
        %v3461 = vsel %vm624, %v3411, 0
        %v3464 = vsel %vm624, %v3412, 0
        %v3467 = vsel %vm624, %v3413, 0
        %v3470 = vsel %vm624, %v3414, 0
        %v3473 = vsel %vm624, %v3415, 0
        %v3476 = vsel %vm624, %v3416, 0
        %v3479 = vsel %vm624, %v3417, 0
        %v3482 = vsel %vm624, %v3418, 0
        %v3485 = vsel %vm624, %v3419, 0
        %v3488 = vsel %vm624, %v3420, 0
        %v3491 = vsel %vm624, %v3421, 0
        %v3494 = vsel %vm624, %v3422, 0
        %v3497 = vsel %vm624, %v3423, 0
        %v3500 = vsel %vm624, %v3424, 0
        %v3503 = vsel %vm624, %v3425, 0
        %v3506 = vsel %vm624, %v3426, 0
        %v3509 = vsel %vm624, %v3427, 0
        %v3512 = vsel %vm624, %v3428, 0
        %v3515 = vsel %vm624, %v3429, 0
        %v3518 = vsel %vm624, %v3430, 0
        %v3521 = vsel %vm624, %v3431, 0
        %v3524 = vsel %vm624, %v3432, 0
        %v3527 = vsel %vm624, %v3433, 0
        %v3530 = vsel %vm624, %v3434, 0
        %v3533 = vsel %vm624, %v3435, 0
        %v3536 = vsel %vm624, %v3436, 0
        %v3539 = vsel %vm624, %v3437, 0
        %v3542 = vsel %vm624, %v3438, 0
        %3544 = vmatprep.subr.mxu0 0.0
        %3545 = vmatpush1.msra.mxu0 0.0
        %3546 = vmatprep.subr.mxu0 0.0
        %3547 = vmatpush1.msra.mxu0 0.0
        %3548 = vmatprep.subr.mxu0 0.0
        %3549 = vmatpush1.msra.mxu0 0.0
        %3550 = vmatprep.subr.mxu0 0.0
        %3551 = vmatpush1.msra.mxu0 0.0
        %3552 = vmatprep.subr.mxu0 0.0
        %3553 = vmatpush1.msra.mxu0 0.0
        %3554 = vmatprep.subr.mxu0 0.0
        %3555 = vmatpush1.msra.mxu0 0.0
        %3556 = vmatprep.subr.mxu0 0.0
        %3557 = vmatpush1.msra.mxu0 0.0
        %3558 = vmatprep.subr.mxu0 0.0
        %3559 = vmatpush1.msra.mxu0 0.0
        %3560 = vmatprep.subr.mxu0 0.0
        %3561 = vmatpush1.msra.mxu0 %v3447
        %3562 = vmatprep.subr.mxu0 0.0
        %3563 = vmatpush1.msra.mxu0 %v3446
        %3564 = vmatprep.subr.mxu0 0.0
        %3565 = vmatpush1.msra.mxu0 %v3445
        %3566 = vmatprep.subr.mxu0 0.0
        %3567 = vmatpush1.msra.mxu0 %v3444
        %3568 = vmatprep.subr.mxu0 0.0
        %3569 = vmatpush1.msra.mxu0 %v3443
        %3570 = vmatprep.subr.mxu0 0.0
        %3571 = vmatpush1.msra.mxu0 %v3442
        %3572 = vmatprep.subr.mxu0 0.0
        %3573 = vmatpush1.msra.mxu0 %v3441
        %3574 = vmatprep.subr.mxu0 0.0
        %3575 = vmatpush1.msra.mxu0 %v3440
        %3576 = vmatprep.subr.mxu0 0.0
        %3577 = vmatpush2.msra.mxu0 0.0
        %3578 = vmatprep.subr.mxu0 0.0
        %3579 = vmatpush2.msra.mxu0 0.0
        %3580 = vmatprep.subr.mxu0 0.0
        %3581 = vmatpush2.msra.mxu0 0.0
        %3582 = vmatprep.subr.mxu0 0.0
        %3583 = vmatpush2.msra.mxu0 0.0
        %3584 = vmatprep.subr.mxu0 0.0
        %3585 = vmatpush2.msra.mxu0 0.0
        %3586 = vmatprep.subr.mxu0 0.0
        %3587 = vmatpush2.msra.mxu0 0.0
        %3588 = vmatprep.subr.mxu0 0.0
        %3589 = vmatpush2.msra.mxu0 0.0
        %3590 = vmatprep.subr.mxu0 0.0
        %3591 = vmatpush2.msra.mxu0 0.0
        %3592 = vmatprep.subr.mxu0 0.0
        %3593 = vmatpush2.msra.mxu0 0.0
        %3594 = vmatprep.subr.mxu0 0.0
        %3595 = vmatpush2.msra.mxu0 0.0
        %3596 = vmatprep.subr.mxu0 0.0
        %3597 = vmatpush2.msra.mxu0 0.0
        %3598 = vmatprep.subr.mxu0 0.0
        %3599 = vmatpush2.msra.mxu0 0.0
        %3600 = vmatprep.subr.mxu0 0.0
        %3601 = vmatpush2.msra.mxu0 0.0
        %3602 = vmatprep.subr.mxu0 0.0
        %3603 = vmatpush2.msra.mxu0 0.0
        %3604 = vmatprep.subr.mxu0 0.0
        %3605 = vmatpush2.msra.mxu0 0.0
        %3606 = vmatprep.subr.mxu0 0.0
        %3607 = vmatpush2.msra.mxu0 0.0
        %3608 = vmatprep.mubr.f32.mxu0 0.0
        %3609 = vmatmul.mubr.f32.gmra.mxu0 %v3449
        %v3610 = vpop.f32.mrf.mxu0
        %v3611 = vadd.f32 0.0, %v3610
        %v3612 = vpop.f32.mrf.mxu0
        %3613 = vmatprep.mubr.f32.mxu0 0.0
        %3614 = vmatmul.mubr.f32.gmra.mxu0 %v3452
        %v3615 = vpop.f32.mrf.mxu0
        %v3616 = vadd.f32 0.0, %v3615
        %v3617 = vpop.f32.mrf.mxu0
        %3618 = vmatprep.mubr.f32.mxu0 0.0
        %3619 = vmatmul.mubr.f32.gmra.mxu0 %v3455
        %v3620 = vpop.f32.mrf.mxu0
        %v3621 = vadd.f32 0.0, %v3620
        %v3622 = vpop.f32.mrf.mxu0
        %3623 = vmatprep.mubr.f32.mxu0 0.0
        %3624 = vmatmul.mubr.f32.gmra.mxu0 %v3458
        %v3625 = vpop.f32.mrf.mxu0
        %v3626 = vadd.f32 0.0, %v3625
        %v3627 = vpop.f32.mrf.mxu0
        %3628 = vmatprep.mubr.f32.mxu0 0.0
        %3629 = vmatmul.mubr.f32.gmra.mxu0 %v3461
        %v3630 = vpop.f32.mrf.mxu0
        %v3631 = vadd.f32 0.0, %v3630
        %v3632 = vpop.f32.mrf.mxu0
        %3633 = vmatprep.mubr.f32.mxu0 0.0
        %3634 = vmatmul.mubr.f32.gmra.mxu0 %v3464
        %v3635 = vpop.f32.mrf.mxu0
        %v3636 = vadd.f32 0.0, %v3635
        %v3637 = vpop.f32.mrf.mxu0
        %3638 = vmatprep.mubr.f32.mxu0 0.0
        %3639 = vmatmul.mubr.f32.gmra.mxu0 %v3467
        %v3640 = vpop.f32.mrf.mxu0
        %v3641 = vadd.f32 0.0, %v3640
        %v3642 = vpop.f32.mrf.mxu0
        %3643 = vmatprep.mubr.f32.mxu0 0.0
        %3644 = vmatmul.mubr.f32.gmra.mxu0 %v3470
        %v3645 = vpop.f32.mrf.mxu0
        %v3646 = vadd.f32 0.0, %v3645
        %v3647 = vpop.f32.mrf.mxu0
        %3648 = vmatprep.mubr.f32.mxu0 0.0
        %3649 = vmatmul.mubr.f32.gmra.mxu0 %v3473
        %v3650 = vpop.f32.mrf.mxu0
        %v3651 = vadd.f32 0.0, %v3650
        %v3652 = vpop.f32.mrf.mxu0
        %3653 = vmatprep.mubr.f32.mxu0 0.0
        %3654 = vmatmul.mubr.f32.gmra.mxu0 %v3476
        %v3655 = vpop.f32.mrf.mxu0
        %v3656 = vadd.f32 0.0, %v3655
        %v3657 = vpop.f32.mrf.mxu0
        %3658 = vmatprep.mubr.f32.mxu0 0.0
        %3659 = vmatmul.mubr.f32.gmra.mxu0 %v3479
        %v3660 = vpop.f32.mrf.mxu0
        %v3661 = vadd.f32 0.0, %v3660
        %v3662 = vpop.f32.mrf.mxu0
        %3663 = vmatprep.mubr.f32.mxu0 0.0
        %3664 = vmatmul.mubr.f32.gmra.mxu0 %v3482
        %v3665 = vpop.f32.mrf.mxu0
        %v3666 = vadd.f32 0.0, %v3665
        %v3667 = vpop.f32.mrf.mxu0
        %3668 = vmatprep.mubr.f32.mxu0 0.0
        %3669 = vmatmul.mubr.f32.gmra.mxu0 %v3485
        %v3670 = vpop.f32.mrf.mxu0
        %v3671 = vadd.f32 0.0, %v3670
        %v3672 = vpop.f32.mrf.mxu0
        %3673 = vmatprep.mubr.f32.mxu0 0.0
        %3674 = vmatmul.mubr.f32.gmra.mxu0 %v3488
        %v3675 = vpop.f32.mrf.mxu0
        %v3676 = vadd.f32 0.0, %v3675
        %v3677 = vpop.f32.mrf.mxu0
        %3678 = vmatprep.mubr.f32.mxu0 0.0
        %3679 = vmatmul.mubr.f32.gmra.mxu0 %v3491
        %v3680 = vpop.f32.mrf.mxu0
        %v3681 = vadd.f32 0.0, %v3680
        %v3682 = vpop.f32.mrf.mxu0
        %3683 = vmatprep.mubr.f32.mxu0 0.0
        %3684 = vmatmul.mubr.f32.gmra.mxu0 %v3494
        %v3685 = vpop.f32.mrf.mxu0
        %v3686 = vadd.f32 0.0, %v3685
        %v3687 = vpop.f32.mrf.mxu0
        %3688 = vmatprep.mubr.f32.mxu0 0.0
        %3689 = vmatmul.mubr.f32.gmra.mxu0 %v3497
        %v3690 = vpop.f32.mrf.mxu0
        %v3691 = vadd.f32 0.0, %v3690
        %v3692 = vpop.f32.mrf.mxu0
        %3693 = vmatprep.mubr.f32.mxu0 0.0
        %3694 = vmatmul.mubr.f32.gmra.mxu0 %v3500
        %v3695 = vpop.f32.mrf.mxu0
        %v3696 = vadd.f32 0.0, %v3695
        %v3697 = vpop.f32.mrf.mxu0
        %3698 = vmatprep.mubr.f32.mxu0 0.0
        %3699 = vmatmul.mubr.f32.gmra.mxu0 %v3503
        %v3700 = vpop.f32.mrf.mxu0
        %v3701 = vadd.f32 0.0, %v3700
        %v3702 = vpop.f32.mrf.mxu0
        %3703 = vmatprep.mubr.f32.mxu0 0.0
        %3704 = vmatmul.mubr.f32.gmra.mxu0 %v3506
        %v3705 = vpop.f32.mrf.mxu0
        %v3706 = vadd.f32 0.0, %v3705
        %v3707 = vpop.f32.mrf.mxu0
        %3708 = vmatprep.mubr.f32.mxu0 0.0
        %3709 = vmatmul.mubr.f32.gmra.mxu0 %v3509
        %v3710 = vpop.f32.mrf.mxu0
        %v3711 = vadd.f32 0.0, %v3710
        %v3712 = vpop.f32.mrf.mxu0
        %3713 = vmatprep.mubr.f32.mxu0 0.0
        %3714 = vmatmul.mubr.f32.gmra.mxu0 %v3512
        %v3715 = vpop.f32.mrf.mxu0
        %v3716 = vadd.f32 0.0, %v3715
        %v3717 = vpop.f32.mrf.mxu0
        %3718 = vmatprep.mubr.f32.mxu0 0.0
        %3719 = vmatmul.mubr.f32.gmra.mxu0 %v3515
        %v3720 = vpop.f32.mrf.mxu0
        %v3721 = vadd.f32 0.0, %v3720
        %v3722 = vpop.f32.mrf.mxu0
        %3723 = vmatprep.mubr.f32.mxu0 0.0
        %3724 = vmatmul.mubr.f32.gmra.mxu0 %v3518
        %v3725 = vpop.f32.mrf.mxu0
        %v3726 = vadd.f32 0.0, %v3725
        %v3727 = vpop.f32.mrf.mxu0
        %3728 = vmatprep.mubr.f32.mxu0 0.0
        %3729 = vmatmul.mubr.f32.gmra.mxu0 %v3521
        %v3730 = vpop.f32.mrf.mxu0
        %v3731 = vadd.f32 0.0, %v3730
        %v3732 = vpop.f32.mrf.mxu0
        %3733 = vmatprep.mubr.f32.mxu0 0.0
        %3734 = vmatmul.mubr.f32.gmra.mxu0 %v3524
        %v3735 = vpop.f32.mrf.mxu0
        %v3736 = vadd.f32 0.0, %v3735
        %v3737 = vpop.f32.mrf.mxu0
        %3738 = vmatprep.mubr.f32.mxu0 0.0
        %3739 = vmatmul.mubr.f32.gmra.mxu0 %v3527
        %v3740 = vpop.f32.mrf.mxu0
        %v3741 = vadd.f32 0.0, %v3740
        %v3742 = vpop.f32.mrf.mxu0
        %3743 = vmatprep.mubr.f32.mxu0 0.0
        %3744 = vmatmul.mubr.f32.gmra.mxu0 %v3530
        %v3745 = vpop.f32.mrf.mxu0
        %v3746 = vadd.f32 0.0, %v3745
        %v3747 = vpop.f32.mrf.mxu0
        %3748 = vmatprep.mubr.f32.mxu0 0.0
        %3749 = vmatmul.mubr.f32.gmra.mxu0 %v3533
        %v3750 = vpop.f32.mrf.mxu0
        %v3751 = vadd.f32 0.0, %v3750
        %v3752 = vpop.f32.mrf.mxu0
        %3753 = vmatprep.mubr.f32.mxu0 0.0
        %3754 = vmatmul.mubr.f32.gmra.mxu0 %v3536
        %v3755 = vpop.f32.mrf.mxu0
        %v3756 = vadd.f32 0.0, %v3755
        %v3757 = vpop.f32.mrf.mxu0
        %3758 = vmatprep.mubr.f32.mxu0 0.0
        %3759 = vmatmul.mubr.f32.gmra.mxu0 %v3539
        %v3760 = vpop.f32.mrf.mxu0
        %v3761 = vadd.f32 0.0, %v3760
        %v3762 = vpop.f32.mrf.mxu0
        %3763 = vmatprep.mubr.f32.mxu0 0.0
        %3764 = vmatmul.mubr.f32.gmra.mxu0 %v3542
        %v3765 = vpop.f32.mrf.mxu0
        %v3766 = vadd.f32 0.0, %v3765
        %v3767 = vpop.f32.mrf.mxu0
        %3768 = vdwg.mxu0
        %v3769 = vadd.f32 %v3375, %v3611
        %v3770 = vadd.f32 %v3376, %v3616
        %v3771 = vadd.f32 %v3377, %v3621
        %v3772 = vadd.f32 %v3378, %v3626
        %v3773 = vadd.f32 %v3379, %v3631
        %v3774 = vadd.f32 %v3380, %v3636
        %v3775 = vadd.f32 %v3381, %v3641
        %v3776 = vadd.f32 %v3382, %v3646
        %v3777 = vadd.f32 %v3383, %v3651
        %v3778 = vadd.f32 %v3384, %v3656
        %v3779 = vadd.f32 %v3385, %v3661
        %v3780 = vadd.f32 %v3386, %v3666
        %v3781 = vadd.f32 %v3387, %v3671
        %v3782 = vadd.f32 %v3388, %v3676
        %v3783 = vadd.f32 %v3389, %v3681
        %v3784 = vadd.f32 %v3390, %v3686
        %v3785 = vadd.f32 %v3391, %v3691
        %v3786 = vadd.f32 %v3392, %v3696
        %v3787 = vadd.f32 %v3393, %v3701
        %v3788 = vadd.f32 %v3394, %v3706
        %v3789 = vadd.f32 %v3395, %v3711
        %v3790 = vadd.f32 %v3396, %v3716
        %v3791 = vadd.f32 %v3397, %v3721
        %v3792 = vadd.f32 %v3398, %v3726
        %v3793 = vadd.f32 %v3399, %v3731
        %v3794 = vadd.f32 %v3400, %v3736
        %v3795 = vadd.f32 %v3401, %v3741
        %v3796 = vadd.f32 %v3402, %v3746
        %v3797 = vadd.f32 %v3403, %v3751
        %v3798 = vadd.f32 %v3404, %v3756
        %v3799 = vadd.f32 %v3405, %v3761
        %v3800 = vadd.f32 %v3406, %v3766
        %v3801 = vld [vmem:[#allocation2] sm:$0xff]
        %v3802 = vld [vmem:[#allocation2 + $0x8] sm:$0xff]
        %v3803 = vld [vmem:[#allocation2 + $0x18] sm:$0xff]
        %v3804 = vld [vmem:[#allocation2 + $0x20] sm:$0xff]
        %v3805 = vld [vmem:[#allocation2 + $0x30] sm:$0xff]
        %v3806 = vld [vmem:[#allocation2 + $0x38] sm:$0xff]
        %v3807 = vld [vmem:[#allocation2 + $0x48] sm:$0xff]
        %v3808 = vld [vmem:[#allocation2 + $0x50] sm:$0xff]
        %v3809 = vld [vmem:[#allocation2 + $0x60] sm:$0xff]
        %v3810 = vld [vmem:[#allocation2 + $0x68] sm:$0xff]
        %v3811 = vld [vmem:[#allocation2 + $0x78] sm:$0xff]
        %v3812 = vld [vmem:[#allocation2 + $0x80] sm:$0xff]
        %v3813 = vld [vmem:[#allocation2 + $0x90] sm:$0xff]
        %v3814 = vld [vmem:[#allocation2 + $0x98] sm:$0xff]
        %v3815 = vld [vmem:[#allocation2 + $0xa8] sm:$0xff]
        %v3816 = vld [vmem:[#allocation2 + $0xb0] sm:$0xff]
        %v3817 = vld [vmem:[#allocation2 + $0xc0] sm:$0xff]
        %v3818 = vld [vmem:[#allocation2 + $0xc8] sm:$0xff]
        %v3819 = vld [vmem:[#allocation2 + $0xd8] sm:$0xff]
        %v3820 = vld [vmem:[#allocation2 + $0xe0] sm:$0xff]
        %v3821 = vld [vmem:[#allocation2 + $0xf0] sm:$0xff]
        %v3822 = vld [vmem:[#allocation2 + $0xf8] sm:$0xff]
        %v3823 = vld [vmem:[#allocation2 + $0x108] sm:$0xff]
        %v3824 = vld [vmem:[#allocation2 + $0x110] sm:$0xff]
        %v3825 = vld [vmem:[#allocation2 + $0x120] sm:$0xff]
        %v3826 = vld [vmem:[#allocation2 + $0x128] sm:$0xff]
        %v3827 = vld [vmem:[#allocation2 + $0x138] sm:$0xff]
        %v3828 = vld [vmem:[#allocation2 + $0x140] sm:$0xff]
        %v3829 = vld [vmem:[#allocation2 + $0x150] sm:$0xff]
        %v3830 = vld [vmem:[#allocation2 + $0x158] sm:$0xff]
        %v3831 = vld [vmem:[#allocation2 + $0x168] sm:$0xff]
        %v3832 = vld [vmem:[#allocation2 + $0x170] sm:$0xff]
        %s3833 = scalar_lea.vmem [#allocation6], 512
        %v3834 = vld [vmem:[%s3833] sm:$0xff]
        %v3835 = vld [vmem:[%s3833 + $0x8] sm:$0xff]
        %v3836 = vld [vmem:[%s3833 + $0x10] sm:$0xff]
        %v3837 = vld [vmem:[%s3833 + $0x18] sm:$0xff]
        %v3838 = vld [vmem:[%s3833 + $0x20] sm:$0xff]
        %v3839 = vld [vmem:[%s3833 + $0x28] sm:$0xff]
        %v3840 = vld [vmem:[%s3833 + $0x30] sm:$0xff]
        %v3841 = vld [vmem:[%s3833 + $0x38] sm:$0xff]
        %v3843 = vsel %vm624, %v3801, 0
        %v3846 = vsel %vm624, %v3802, 0
        %v3849 = vsel %vm624, %v3803, 0
        %v3852 = vsel %vm624, %v3804, 0
        %v3855 = vsel %vm624, %v3805, 0
        %v3858 = vsel %vm624, %v3806, 0
        %v3861 = vsel %vm624, %v3807, 0
        %v3864 = vsel %vm624, %v3808, 0
        %v3867 = vsel %vm624, %v3809, 0
        %v3870 = vsel %vm624, %v3810, 0
        %v3873 = vsel %vm624, %v3811, 0
        %v3876 = vsel %vm624, %v3812, 0
        %v3879 = vsel %vm624, %v3813, 0
        %v3882 = vsel %vm624, %v3814, 0
        %v3885 = vsel %vm624, %v3815, 0
        %v3888 = vsel %vm624, %v3816, 0
        %v3891 = vsel %vm624, %v3817, 0
        %v3894 = vsel %vm624, %v3818, 0
        %v3897 = vsel %vm624, %v3819, 0
        %v3900 = vsel %vm624, %v3820, 0
        %v3903 = vsel %vm624, %v3821, 0
        %v3906 = vsel %vm624, %v3822, 0
        %v3909 = vsel %vm624, %v3823, 0
        %v3912 = vsel %vm624, %v3824, 0
        %v3915 = vsel %vm624, %v3825, 0
        %v3918 = vsel %vm624, %v3826, 0
        %v3921 = vsel %vm624, %v3827, 0
        %v3924 = vsel %vm624, %v3828, 0
        %v3927 = vsel %vm624, %v3829, 0
        %v3930 = vsel %vm624, %v3830, 0
        %v3933 = vsel %vm624, %v3831, 0
        %v3936 = vsel %vm624, %v3832, 0
        %3938 = vmatprep.subr.mxu0 0.0
        %3939 = vmatpush1.msra.mxu0 0.0
        %3940 = vmatprep.subr.mxu0 0.0
        %3941 = vmatpush1.msra.mxu0 0.0
        %3942 = vmatprep.subr.mxu0 0.0
        %3943 = vmatpush1.msra.mxu0 0.0
        %3944 = vmatprep.subr.mxu0 0.0
        %3945 = vmatpush1.msra.mxu0 0.0
        %3946 = vmatprep.subr.mxu0 0.0
        %3947 = vmatpush1.msra.mxu0 0.0
        %3948 = vmatprep.subr.mxu0 0.0
        %3949 = vmatpush1.msra.mxu0 0.0
        %3950 = vmatprep.subr.mxu0 0.0
        %3951 = vmatpush1.msra.mxu0 0.0
        %3952 = vmatprep.subr.mxu0 0.0
        %3953 = vmatpush1.msra.mxu0 0.0
        %3954 = vmatprep.subr.mxu0 0.0
        %3955 = vmatpush1.msra.mxu0 %v3841
        %3956 = vmatprep.subr.mxu0 0.0
        %3957 = vmatpush1.msra.mxu0 %v3840
        %3958 = vmatprep.subr.mxu0 0.0
        %3959 = vmatpush1.msra.mxu0 %v3839
        %3960 = vmatprep.subr.mxu0 0.0
        %3961 = vmatpush1.msra.mxu0 %v3838
        %3962 = vmatprep.subr.mxu0 0.0
        %3963 = vmatpush1.msra.mxu0 %v3837
        %3964 = vmatprep.subr.mxu0 0.0
        %3965 = vmatpush1.msra.mxu0 %v3836
        %3966 = vmatprep.subr.mxu0 0.0
        %3967 = vmatpush1.msra.mxu0 %v3835
        %3968 = vmatprep.subr.mxu0 0.0
        %3969 = vmatpush1.msra.mxu0 %v3834
        %3970 = vmatprep.subr.mxu0 0.0
        %3971 = vmatpush2.msra.mxu0 0.0
        %3972 = vmatprep.subr.mxu0 0.0
        %3973 = vmatpush2.msra.mxu0 0.0
        %3974 = vmatprep.subr.mxu0 0.0
        %3975 = vmatpush2.msra.mxu0 0.0
        %3976 = vmatprep.subr.mxu0 0.0
        %3977 = vmatpush2.msra.mxu0 0.0
        %3978 = vmatprep.subr.mxu0 0.0
        %3979 = vmatpush2.msra.mxu0 0.0
        %3980 = vmatprep.subr.mxu0 0.0
        %3981 = vmatpush2.msra.mxu0 0.0
        %3982 = vmatprep.subr.mxu0 0.0
        %3983 = vmatpush2.msra.mxu0 0.0
        %3984 = vmatprep.subr.mxu0 0.0
        %3985 = vmatpush2.msra.mxu0 0.0
        %3986 = vmatprep.subr.mxu0 0.0
        %3987 = vmatpush2.msra.mxu0 0.0
        %3988 = vmatprep.subr.mxu0 0.0
        %3989 = vmatpush2.msra.mxu0 0.0
        %3990 = vmatprep.subr.mxu0 0.0
        %3991 = vmatpush2.msra.mxu0 0.0
        %3992 = vmatprep.subr.mxu0 0.0
        %3993 = vmatpush2.msra.mxu0 0.0
        %3994 = vmatprep.subr.mxu0 0.0
        %3995 = vmatpush2.msra.mxu0 0.0
        %3996 = vmatprep.subr.mxu0 0.0
        %3997 = vmatpush2.msra.mxu0 0.0
        %3998 = vmatprep.subr.mxu0 0.0
        %3999 = vmatpush2.msra.mxu0 0.0
        %4000 = vmatprep.subr.mxu0 0.0
        %4001 = vmatpush2.msra.mxu0 0.0
        %4002 = vmatprep.mubr.f32.mxu0 0.0
        %4003 = vmatmul.mubr.f32.gmra.mxu0 %v3843
        %v4004 = vpop.f32.mrf.mxu0
        %v4005 = vadd.f32 0.0, %v4004
        %v4006 = vpop.f32.mrf.mxu0
        %4007 = vmatprep.mubr.f32.mxu0 0.0
        %4008 = vmatmul.mubr.f32.gmra.mxu0 %v3846
        %v4009 = vpop.f32.mrf.mxu0
        %v4010 = vadd.f32 0.0, %v4009
        %v4011 = vpop.f32.mrf.mxu0
        %4012 = vmatprep.mubr.f32.mxu0 0.0
        %4013 = vmatmul.mubr.f32.gmra.mxu0 %v3849
        %v4014 = vpop.f32.mrf.mxu0
        %v4015 = vadd.f32 0.0, %v4014
        %v4016 = vpop.f32.mrf.mxu0
        %4017 = vmatprep.mubr.f32.mxu0 0.0
        %4018 = vmatmul.mubr.f32.gmra.mxu0 %v3852
        %v4019 = vpop.f32.mrf.mxu0
        %v4020 = vadd.f32 0.0, %v4019
        %v4021 = vpop.f32.mrf.mxu0
        %4022 = vmatprep.mubr.f32.mxu0 0.0
        %4023 = vmatmul.mubr.f32.gmra.mxu0 %v3855
        %v4024 = vpop.f32.mrf.mxu0
        %v4025 = vadd.f32 0.0, %v4024
        %v4026 = vpop.f32.mrf.mxu0
        %4027 = vmatprep.mubr.f32.mxu0 0.0
        %4028 = vmatmul.mubr.f32.gmra.mxu0 %v3858
        %v4029 = vpop.f32.mrf.mxu0
        %v4030 = vadd.f32 0.0, %v4029
        %v4031 = vpop.f32.mrf.mxu0
        %4032 = vmatprep.mubr.f32.mxu0 0.0
        %4033 = vmatmul.mubr.f32.gmra.mxu0 %v3861
        %v4034 = vpop.f32.mrf.mxu0
        %v4035 = vadd.f32 0.0, %v4034
        %v4036 = vpop.f32.mrf.mxu0
        %4037 = vmatprep.mubr.f32.mxu0 0.0
        %4038 = vmatmul.mubr.f32.gmra.mxu0 %v3864
        %v4039 = vpop.f32.mrf.mxu0
        %v4040 = vadd.f32 0.0, %v4039
        %v4041 = vpop.f32.mrf.mxu0
        %4042 = vmatprep.mubr.f32.mxu0 0.0
        %4043 = vmatmul.mubr.f32.gmra.mxu0 %v3867
        %v4044 = vpop.f32.mrf.mxu0
        %v4045 = vadd.f32 0.0, %v4044
        %v4046 = vpop.f32.mrf.mxu0
        %4047 = vmatprep.mubr.f32.mxu0 0.0
        %4048 = vmatmul.mubr.f32.gmra.mxu0 %v3870
        %v4049 = vpop.f32.mrf.mxu0
        %v4050 = vadd.f32 0.0, %v4049
        %v4051 = vpop.f32.mrf.mxu0
        %4052 = vmatprep.mubr.f32.mxu0 0.0
        %4053 = vmatmul.mubr.f32.gmra.mxu0 %v3873
        %v4054 = vpop.f32.mrf.mxu0
        %v4055 = vadd.f32 0.0, %v4054
        %v4056 = vpop.f32.mrf.mxu0
        %4057 = vmatprep.mubr.f32.mxu0 0.0
        %4058 = vmatmul.mubr.f32.gmra.mxu0 %v3876
        %v4059 = vpop.f32.mrf.mxu0
        %v4060 = vadd.f32 0.0, %v4059
        %v4061 = vpop.f32.mrf.mxu0
        %4062 = vmatprep.mubr.f32.mxu0 0.0
        %4063 = vmatmul.mubr.f32.gmra.mxu0 %v3879
        %v4064 = vpop.f32.mrf.mxu0
        %v4065 = vadd.f32 0.0, %v4064
        %v4066 = vpop.f32.mrf.mxu0
        %4067 = vmatprep.mubr.f32.mxu0 0.0
        %4068 = vmatmul.mubr.f32.gmra.mxu0 %v3882
        %v4069 = vpop.f32.mrf.mxu0
        %v4070 = vadd.f32 0.0, %v4069
        %v4071 = vpop.f32.mrf.mxu0
        %4072 = vmatprep.mubr.f32.mxu0 0.0
        %4073 = vmatmul.mubr.f32.gmra.mxu0 %v3885
        %v4074 = vpop.f32.mrf.mxu0
        %v4075 = vadd.f32 0.0, %v4074
        %v4076 = vpop.f32.mrf.mxu0
        %4077 = vmatprep.mubr.f32.mxu0 0.0
        %4078 = vmatmul.mubr.f32.gmra.mxu0 %v3888
        %v4079 = vpop.f32.mrf.mxu0
        %v4080 = vadd.f32 0.0, %v4079
        %v4081 = vpop.f32.mrf.mxu0
        %4082 = vmatprep.mubr.f32.mxu0 0.0
        %4083 = vmatmul.mubr.f32.gmra.mxu0 %v3891
        %v4084 = vpop.f32.mrf.mxu0
        %v4085 = vadd.f32 0.0, %v4084
        %v4086 = vpop.f32.mrf.mxu0
        %4087 = vmatprep.mubr.f32.mxu0 0.0
        %4088 = vmatmul.mubr.f32.gmra.mxu0 %v3894
        %v4089 = vpop.f32.mrf.mxu0
        %v4090 = vadd.f32 0.0, %v4089
        %v4091 = vpop.f32.mrf.mxu0
        %4092 = vmatprep.mubr.f32.mxu0 0.0
        %4093 = vmatmul.mubr.f32.gmra.mxu0 %v3897
        %v4094 = vpop.f32.mrf.mxu0
        %v4095 = vadd.f32 0.0, %v4094
        %v4096 = vpop.f32.mrf.mxu0
        %4097 = vmatprep.mubr.f32.mxu0 0.0
        %4098 = vmatmul.mubr.f32.gmra.mxu0 %v3900
        %v4099 = vpop.f32.mrf.mxu0
        %v4100 = vadd.f32 0.0, %v4099
        %v4101 = vpop.f32.mrf.mxu0
        %4102 = vmatprep.mubr.f32.mxu0 0.0
        %4103 = vmatmul.mubr.f32.gmra.mxu0 %v3903
        %v4104 = vpop.f32.mrf.mxu0
        %v4105 = vadd.f32 0.0, %v4104
        %v4106 = vpop.f32.mrf.mxu0
        %4107 = vmatprep.mubr.f32.mxu0 0.0
        %4108 = vmatmul.mubr.f32.gmra.mxu0 %v3906
        %v4109 = vpop.f32.mrf.mxu0
        %v4110 = vadd.f32 0.0, %v4109
        %v4111 = vpop.f32.mrf.mxu0
        %4112 = vmatprep.mubr.f32.mxu0 0.0
        %4113 = vmatmul.mubr.f32.gmra.mxu0 %v3909
        %v4114 = vpop.f32.mrf.mxu0
        %v4115 = vadd.f32 0.0, %v4114
        %v4116 = vpop.f32.mrf.mxu0
        %4117 = vmatprep.mubr.f32.mxu0 0.0
        %4118 = vmatmul.mubr.f32.gmra.mxu0 %v3912
        %v4119 = vpop.f32.mrf.mxu0
        %v4120 = vadd.f32 0.0, %v4119
        %v4121 = vpop.f32.mrf.mxu0
        %4122 = vmatprep.mubr.f32.mxu0 0.0
        %4123 = vmatmul.mubr.f32.gmra.mxu0 %v3915
        %v4124 = vpop.f32.mrf.mxu0
        %v4125 = vadd.f32 0.0, %v4124
        %v4126 = vpop.f32.mrf.mxu0
        %4127 = vmatprep.mubr.f32.mxu0 0.0
        %4128 = vmatmul.mubr.f32.gmra.mxu0 %v3918
        %v4129 = vpop.f32.mrf.mxu0
        %v4130 = vadd.f32 0.0, %v4129
        %v4131 = vpop.f32.mrf.mxu0
        %4132 = vmatprep.mubr.f32.mxu0 0.0
        %4133 = vmatmul.mubr.f32.gmra.mxu0 %v3921
        %v4134 = vpop.f32.mrf.mxu0
        %v4135 = vadd.f32 0.0, %v4134
        %v4136 = vpop.f32.mrf.mxu0
        %4137 = vmatprep.mubr.f32.mxu0 0.0
        %4138 = vmatmul.mubr.f32.gmra.mxu0 %v3924
        %v4139 = vpop.f32.mrf.mxu0
        %v4140 = vadd.f32 0.0, %v4139
        %v4141 = vpop.f32.mrf.mxu0
        %4142 = vmatprep.mubr.f32.mxu0 0.0
        %4143 = vmatmul.mubr.f32.gmra.mxu0 %v3927
        %v4144 = vpop.f32.mrf.mxu0
        %v4145 = vadd.f32 0.0, %v4144
        %v4146 = vpop.f32.mrf.mxu0
        %4147 = vmatprep.mubr.f32.mxu0 0.0
        %4148 = vmatmul.mubr.f32.gmra.mxu0 %v3930
        %v4149 = vpop.f32.mrf.mxu0
        %v4150 = vadd.f32 0.0, %v4149
        %v4151 = vpop.f32.mrf.mxu0
        %4152 = vmatprep.mubr.f32.mxu0 0.0
        %4153 = vmatmul.mubr.f32.gmra.mxu0 %v3933
        %v4154 = vpop.f32.mrf.mxu0
        %v4155 = vadd.f32 0.0, %v4154
        %v4156 = vpop.f32.mrf.mxu0
        %4157 = vmatprep.mubr.f32.mxu0 0.0
        %4158 = vmatmul.mubr.f32.gmra.mxu0 %v3936
        %v4159 = vpop.f32.mrf.mxu0
        %v4160 = vadd.f32 0.0, %v4159
        %v4161 = vpop.f32.mrf.mxu0
        %4162 = vdwg.mxu0
        %v4163 = vadd.f32 %v3769, %v4005
        %v4164 = vadd.f32 %v3770, %v4010
        %v4165 = vadd.f32 %v3771, %v4015
        %v4166 = vadd.f32 %v3772, %v4020
        %v4167 = vadd.f32 %v3773, %v4025
        %v4168 = vadd.f32 %v3774, %v4030
        %v4169 = vadd.f32 %v3775, %v4035
        %v4170 = vadd.f32 %v3776, %v4040
        %v4171 = vadd.f32 %v3777, %v4045
        %v4172 = vadd.f32 %v3778, %v4050
        %v4173 = vadd.f32 %v3779, %v4055
        %v4174 = vadd.f32 %v3780, %v4060
        %v4175 = vadd.f32 %v3781, %v4065
        %v4176 = vadd.f32 %v3782, %v4070
        %v4177 = vadd.f32 %v3783, %v4075
        %v4178 = vadd.f32 %v3784, %v4080
        %v4179 = vadd.f32 %v3785, %v4085
        %v4180 = vadd.f32 %v3786, %v4090
        %v4181 = vadd.f32 %v3787, %v4095
        %v4182 = vadd.f32 %v3788, %v4100
        %v4183 = vadd.f32 %v3789, %v4105
        %v4184 = vadd.f32 %v3790, %v4110
        %v4185 = vadd.f32 %v3791, %v4115
        %v4186 = vadd.f32 %v3792, %v4120
        %v4187 = vadd.f32 %v3793, %v4125
        %v4188 = vadd.f32 %v3794, %v4130
        %v4189 = vadd.f32 %v3795, %v4135
        %v4190 = vadd.f32 %v3796, %v4140
        %v4191 = vadd.f32 %v3797, %v4145
        %v4192 = vadd.f32 %v3798, %v4150
        %v4193 = vadd.f32 %v3799, %v4155
        %v4194 = vadd.f32 %v3800, %v4160
        %v4195 = vld [vmem:[%s4] sm:$0x1]
        %v4197 = vlaneseq
        %v4198 = vshrl.u32 %v4197, 7
        %v4199 = vsub.s32 0, %v4198
        %v4200 = vrot.slane %v4195, %v4199
        %v4202 = vadd.f32 %v4163, %v4200
        %v4203 = vadd.f32 %v4164, %v4200
        %v4204 = vadd.f32 %v4165, %v4200
        %v4205 = vadd.f32 %v4166, %v4200
        %v4206 = vadd.f32 %v4167, %v4200
        %v4207 = vadd.f32 %v4168, %v4200
        %v4208 = vadd.f32 %v4169, %v4200
        %v4209 = vadd.f32 %v4170, %v4200
        %v4210 = vadd.f32 %v4171, %v4200
        %v4211 = vadd.f32 %v4172, %v4200
        %v4212 = vadd.f32 %v4173, %v4200
        %v4213 = vadd.f32 %v4174, %v4200
        %v4214 = vadd.f32 %v4175, %v4200
        %v4215 = vadd.f32 %v4176, %v4200
        %v4216 = vadd.f32 %v4177, %v4200
        %v4217 = vadd.f32 %v4178, %v4200
        %v4218 = vadd.f32 %v4179, %v4200
        %v4219 = vadd.f32 %v4180, %v4200
        %v4220 = vadd.f32 %v4181, %v4200
        %v4221 = vadd.f32 %v4182, %v4200
        %v4222 = vadd.f32 %v4183, %v4200
        %v4223 = vadd.f32 %v4184, %v4200
        %v4224 = vadd.f32 %v4185, %v4200
        %v4225 = vadd.f32 %v4186, %v4200
        %v4226 = vadd.f32 %v4187, %v4200
        %v4227 = vadd.f32 %v4188, %v4200
        %v4228 = vadd.f32 %v4189, %v4200
        %v4229 = vadd.f32 %v4190, %v4200
        %v4230 = vadd.f32 %v4191, %v4200
        %v4231 = vadd.f32 %v4192, %v4200
        %v4232 = vadd.f32 %v4193, %v4200
        %v4233 = vadd.f32 %v4194, %v4200
        %v4234 = vmax.f32 %v4202, 0.0
        %v4235 = vmax.f32 %v4203, 0.0
        %v4236 = vmax.f32 %v4204, 0.0
        %v4237 = vmax.f32 %v4205, 0.0
        %v4238 = vmax.f32 %v4206, 0.0
        %v4239 = vmax.f32 %v4207, 0.0
        %v4240 = vmax.f32 %v4208, 0.0
        %v4241 = vmax.f32 %v4209, 0.0
        %v4242 = vmax.f32 %v4210, 0.0
        %v4243 = vmax.f32 %v4211, 0.0
        %v4244 = vmax.f32 %v4212, 0.0
        %v4245 = vmax.f32 %v4213, 0.0
        %v4246 = vmax.f32 %v4214, 0.0
        %v4247 = vmax.f32 %v4215, 0.0
        %v4248 = vmax.f32 %v4216, 0.0
        %v4249 = vmax.f32 %v4217, 0.0
        %v4250 = vmax.f32 %v4218, 0.0
        %v4251 = vmax.f32 %v4219, 0.0
        %v4252 = vmax.f32 %v4220, 0.0
        %v4253 = vmax.f32 %v4221, 0.0
        %v4254 = vmax.f32 %v4222, 0.0
        %v4255 = vmax.f32 %v4223, 0.0
        %v4256 = vmax.f32 %v4224, 0.0
        %v4257 = vmax.f32 %v4225, 0.0
        %v4258 = vmax.f32 %v4226, 0.0
        %v4259 = vmax.f32 %v4227, 0.0
        %v4260 = vmax.f32 %v4228, 0.0
        %v4261 = vmax.f32 %v4229, 0.0
        %v4262 = vmax.f32 %v4230, 0.0
        %v4263 = vmax.f32 %v4231, 0.0
        %v4264 = vmax.f32 %v4232, 0.0
        %v4265 = vmax.f32 %v4233, 0.0
        %v4266 = vld [vmem:[%s5] sm:$0xff]
        %v4267 = vld [vmem:[%s5 + $0x8] sm:$0xff]
        %v4268 = vld [vmem:[%s5 + $0x10] sm:$0xff]
        %v4269 = vld [vmem:[%s5 + $0x18] sm:$0xff]
        %v4270 = vld [vmem:[%s5 + $0x20] sm:$0xff]
        %v4271 = vld [vmem:[%s5 + $0x28] sm:$0xff]
        %v4272 = vld [vmem:[%s5 + $0x30] sm:$0xff]
        %v4273 = vld [vmem:[%s5 + $0x38] sm:$0xff]
        %v4274 = vld [vmem:[%s5 + $0x40] sm:$0xff]
        %v4275 = vld [vmem:[%s5 + $0x48] sm:$0xff]
        %v4276 = vld [vmem:[%s5 + $0x50] sm:$0xff]
        %v4277 = vld [vmem:[%s5 + $0x58] sm:$0xff]
        %v4278 = vld [vmem:[%s5 + $0x60] sm:$0xff]
        %v4279 = vld [vmem:[%s5 + $0x68] sm:$0xff]
        %v4280 = vld [vmem:[%s5 + $0x70] sm:$0xff]
        %v4281 = vld [vmem:[%s5 + $0x78] sm:$0xff]
        %v4282 = vld [vmem:[%s6] sm:$0x1]
        %v4284 = vlaneseq
        %v4285 = vshrl.u32 %v4284, 7
        %v4286 = vsub.s32 0, %v4285
        %v4287 = vrot.slane %v4282, %v4286
        %4289 = vmatprep.subr.mxu0 0.0
        %4290 = vmatpush1.msra.mxu0 %v4281
        %4291 = vmatprep.subr.mxu0 0.0
        %4292 = vmatpush1.msra.mxu0 %v4280
        %4293 = vmatprep.subr.mxu0 0.0
        %4294 = vmatpush1.msra.mxu0 %v4279
        %4295 = vmatprep.subr.mxu0 0.0
        %4296 = vmatpush1.msra.mxu0 %v4278
        %4297 = vmatprep.subr.mxu0 0.0
        %4298 = vmatpush1.msra.mxu0 %v4277
        %4299 = vmatprep.subr.mxu0 0.0
        %4300 = vmatpush1.msra.mxu0 %v4276
        %4301 = vmatprep.subr.mxu0 0.0
        %4302 = vmatpush1.msra.mxu0 %v4275
        %4303 = vmatprep.subr.mxu0 0.0
        %4304 = vmatpush1.msra.mxu0 %v4274
        %4305 = vmatprep.subr.mxu0 0.0
        %4306 = vmatpush1.msra.mxu0 %v4273
        %4307 = vmatprep.subr.mxu0 0.0
        %4308 = vmatpush1.msra.mxu0 %v4272
        %4309 = vmatprep.subr.mxu0 0.0
        %4310 = vmatpush1.msra.mxu0 %v4271
        %4311 = vmatprep.subr.mxu0 0.0
        %4312 = vmatpush1.msra.mxu0 %v4270
        %4313 = vmatprep.subr.mxu0 0.0
        %4314 = vmatpush1.msra.mxu0 %v4269
        %4315 = vmatprep.subr.mxu0 0.0
        %4316 = vmatpush1.msra.mxu0 %v4268
        %4317 = vmatprep.subr.mxu0 0.0
        %4318 = vmatpush1.msra.mxu0 %v4267
        %4319 = vmatprep.subr.mxu0 0.0
        %4320 = vmatpush1.msra.mxu0 %v4266
        %4321 = vmatprep.subr.mxu0 0.0
        %4322 = vmatpush2.msra.mxu0 0.0
        %4323 = vmatprep.subr.mxu0 0.0
        %4324 = vmatpush2.msra.mxu0 0.0
        %4325 = vmatprep.subr.mxu0 0.0
        %4326 = vmatpush2.msra.mxu0 0.0
        %4327 = vmatprep.subr.mxu0 0.0
        %4328 = vmatpush2.msra.mxu0 0.0
        %4329 = vmatprep.subr.mxu0 0.0
        %4330 = vmatpush2.msra.mxu0 0.0
        %4331 = vmatprep.subr.mxu0 0.0
        %4332 = vmatpush2.msra.mxu0 0.0
        %4333 = vmatprep.subr.mxu0 0.0
        %4334 = vmatpush2.msra.mxu0 0.0
        %4335 = vmatprep.subr.mxu0 0.0
        %4336 = vmatpush2.msra.mxu0 0.0
        %4337 = vmatprep.subr.mxu0 0.0
        %4338 = vmatpush2.msra.mxu0 0.0
        %4339 = vmatprep.subr.mxu0 0.0
        %4340 = vmatpush2.msra.mxu0 0.0
        %4341 = vmatprep.subr.mxu0 0.0
        %4342 = vmatpush2.msra.mxu0 0.0
        %4343 = vmatprep.subr.mxu0 0.0
        %4344 = vmatpush2.msra.mxu0 0.0
        %4345 = vmatprep.subr.mxu0 0.0
        %4346 = vmatpush2.msra.mxu0 0.0
        %4347 = vmatprep.subr.mxu0 0.0
        %4348 = vmatpush2.msra.mxu0 0.0
        %4349 = vmatprep.subr.mxu0 0.0
        %4350 = vmatpush2.msra.mxu0 0.0
        %4351 = vmatprep.subr.mxu0 0.0
        %4352 = vmatpush2.msra.mxu0 0.0
        %4353 = vmatprep.mubr.f32.mxu0 0.0
        %4354 = vmatmul.mubr.f32.gmra.mxu0 %v4234
        %v4355 = vpop.f32.mrf.mxu0
        %v4356 = vadd.f32 %v4287, %v4355
        %v4357 = vpop.f32.mrf.mxu0
        %4358 = vmatprep.mubr.f32.mxu0 0.0
        %4359 = vmatmul.mubr.f32.gmra.mxu0 %v4235
        %v4360 = vpop.f32.mrf.mxu0
        %v4361 = vadd.f32 %v4287, %v4360
        %v4362 = vpop.f32.mrf.mxu0
        %4363 = vmatprep.mubr.f32.mxu0 0.0
        %4364 = vmatmul.mubr.f32.gmra.mxu0 %v4236
        %v4365 = vpop.f32.mrf.mxu0
        %v4366 = vadd.f32 %v4287, %v4365
        %v4367 = vpop.f32.mrf.mxu0
        %4368 = vmatprep.mubr.f32.mxu0 0.0
        %4369 = vmatmul.mubr.f32.gmra.mxu0 %v4237
        %v4370 = vpop.f32.mrf.mxu0
        %v4371 = vadd.f32 %v4287, %v4370
        %v4372 = vpop.f32.mrf.mxu0
        %4373 = vmatprep.mubr.f32.mxu0 0.0
        %4374 = vmatmul.mubr.f32.gmra.mxu0 %v4238
        %v4375 = vpop.f32.mrf.mxu0
        %v4376 = vadd.f32 %v4287, %v4375
        %v4377 = vpop.f32.mrf.mxu0
        %4378 = vmatprep.mubr.f32.mxu0 0.0
        %4379 = vmatmul.mubr.f32.gmra.mxu0 %v4239
        %v4380 = vpop.f32.mrf.mxu0
        %v4381 = vadd.f32 %v4287, %v4380
        %v4382 = vpop.f32.mrf.mxu0
        %4383 = vmatprep.mubr.f32.mxu0 0.0
        %4384 = vmatmul.mubr.f32.gmra.mxu0 %v4240
        %v4385 = vpop.f32.mrf.mxu0
        %v4386 = vadd.f32 %v4287, %v4385
        %v4387 = vpop.f32.mrf.mxu0
        %4388 = vmatprep.mubr.f32.mxu0 0.0
        %4389 = vmatmul.mubr.f32.gmra.mxu0 %v4241
        %v4390 = vpop.f32.mrf.mxu0
        %v4391 = vadd.f32 %v4287, %v4390
        %v4392 = vpop.f32.mrf.mxu0
        %4393 = vmatprep.mubr.f32.mxu0 0.0
        %4394 = vmatmul.mubr.f32.gmra.mxu0 %v4242
        %v4395 = vpop.f32.mrf.mxu0
        %v4396 = vadd.f32 %v4287, %v4395
        %v4397 = vpop.f32.mrf.mxu0
        %4398 = vmatprep.mubr.f32.mxu0 0.0
        %4399 = vmatmul.mubr.f32.gmra.mxu0 %v4243
        %v4400 = vpop.f32.mrf.mxu0
        %v4401 = vadd.f32 %v4287, %v4400
        %v4402 = vpop.f32.mrf.mxu0
        %4403 = vmatprep.mubr.f32.mxu0 0.0
        %4404 = vmatmul.mubr.f32.gmra.mxu0 %v4244
        %v4405 = vpop.f32.mrf.mxu0
        %v4406 = vadd.f32 %v4287, %v4405
        %v4407 = vpop.f32.mrf.mxu0
        %4408 = vmatprep.mubr.f32.mxu0 0.0
        %4409 = vmatmul.mubr.f32.gmra.mxu0 %v4245
        %v4410 = vpop.f32.mrf.mxu0
        %v4411 = vadd.f32 %v4287, %v4410
        %v4412 = vpop.f32.mrf.mxu0
        %4413 = vmatprep.mubr.f32.mxu0 0.0
        %4414 = vmatmul.mubr.f32.gmra.mxu0 %v4246
        %v4415 = vpop.f32.mrf.mxu0
        %v4416 = vadd.f32 %v4287, %v4415
        %v4417 = vpop.f32.mrf.mxu0
        %4418 = vmatprep.mubr.f32.mxu0 0.0
        %4419 = vmatmul.mubr.f32.gmra.mxu0 %v4247
        %v4420 = vpop.f32.mrf.mxu0
        %v4421 = vadd.f32 %v4287, %v4420
        %v4422 = vpop.f32.mrf.mxu0
        %4423 = vmatprep.mubr.f32.mxu0 0.0
        %4424 = vmatmul.mubr.f32.gmra.mxu0 %v4248
        %v4425 = vpop.f32.mrf.mxu0
        %v4426 = vadd.f32 %v4287, %v4425
        %v4427 = vpop.f32.mrf.mxu0
        %4428 = vmatprep.mubr.f32.mxu0 0.0
        %4429 = vmatmul.mubr.f32.gmra.mxu0 %v4249
        %v4430 = vpop.f32.mrf.mxu0
        %v4431 = vadd.f32 %v4287, %v4430
        %v4432 = vpop.f32.mrf.mxu0
        %4433 = vmatprep.mubr.f32.mxu0 0.0
        %4434 = vmatmul.mubr.f32.gmra.mxu0 %v4250
        %v4435 = vpop.f32.mrf.mxu0
        %v4436 = vadd.f32 %v4287, %v4435
        %v4437 = vpop.f32.mrf.mxu0
        %4438 = vmatprep.mubr.f32.mxu0 0.0
        %4439 = vmatmul.mubr.f32.gmra.mxu0 %v4251
        %v4440 = vpop.f32.mrf.mxu0
        %v4441 = vadd.f32 %v4287, %v4440
        %v4442 = vpop.f32.mrf.mxu0
        %4443 = vmatprep.mubr.f32.mxu0 0.0
        %4444 = vmatmul.mubr.f32.gmra.mxu0 %v4252
        %v4445 = vpop.f32.mrf.mxu0
        %v4446 = vadd.f32 %v4287, %v4445
        %v4447 = vpop.f32.mrf.mxu0
        %4448 = vmatprep.mubr.f32.mxu0 0.0
        %4449 = vmatmul.mubr.f32.gmra.mxu0 %v4253
        %v4450 = vpop.f32.mrf.mxu0
        %v4451 = vadd.f32 %v4287, %v4450
        %v4452 = vpop.f32.mrf.mxu0
        %4453 = vmatprep.mubr.f32.mxu0 0.0
        %4454 = vmatmul.mubr.f32.gmra.mxu0 %v4254
        %v4455 = vpop.f32.mrf.mxu0
        %v4456 = vadd.f32 %v4287, %v4455
        %v4457 = vpop.f32.mrf.mxu0
        %4458 = vmatprep.mubr.f32.mxu0 0.0
        %4459 = vmatmul.mubr.f32.gmra.mxu0 %v4255
        %v4460 = vpop.f32.mrf.mxu0
        %v4461 = vadd.f32 %v4287, %v4460
        %v4462 = vpop.f32.mrf.mxu0
        %4463 = vmatprep.mubr.f32.mxu0 0.0
        %4464 = vmatmul.mubr.f32.gmra.mxu0 %v4256
        %v4465 = vpop.f32.mrf.mxu0
        %v4466 = vadd.f32 %v4287, %v4465
        %v4467 = vpop.f32.mrf.mxu0
        %4468 = vmatprep.mubr.f32.mxu0 0.0
        %4469 = vmatmul.mubr.f32.gmra.mxu0 %v4257
        %v4470 = vpop.f32.mrf.mxu0
        %v4471 = vadd.f32 %v4287, %v4470
        %v4472 = vpop.f32.mrf.mxu0
        %4473 = vmatprep.mubr.f32.mxu0 0.0
        %4474 = vmatmul.mubr.f32.gmra.mxu0 %v4258
        %v4475 = vpop.f32.mrf.mxu0
        %v4476 = vadd.f32 %v4287, %v4475
        %v4477 = vpop.f32.mrf.mxu0
        %4478 = vmatprep.mubr.f32.mxu0 0.0
        %4479 = vmatmul.mubr.f32.gmra.mxu0 %v4259
        %v4480 = vpop.f32.mrf.mxu0
        %v4481 = vadd.f32 %v4287, %v4480
        %v4482 = vpop.f32.mrf.mxu0
        %4483 = vmatprep.mubr.f32.mxu0 0.0
        %4484 = vmatmul.mubr.f32.gmra.mxu0 %v4260
        %v4485 = vpop.f32.mrf.mxu0
        %v4486 = vadd.f32 %v4287, %v4485
        %v4487 = vpop.f32.mrf.mxu0
        %4488 = vmatprep.mubr.f32.mxu0 0.0
        %4489 = vmatmul.mubr.f32.gmra.mxu0 %v4261
        %v4490 = vpop.f32.mrf.mxu0
        %v4491 = vadd.f32 %v4287, %v4490
        %v4492 = vpop.f32.mrf.mxu0
        %4493 = vmatprep.mubr.f32.mxu0 0.0
        %4494 = vmatmul.mubr.f32.gmra.mxu0 %v4262
        %v4495 = vpop.f32.mrf.mxu0
        %v4496 = vadd.f32 %v4287, %v4495
        %v4497 = vpop.f32.mrf.mxu0
        %4498 = vmatprep.mubr.f32.mxu0 0.0
        %4499 = vmatmul.mubr.f32.gmra.mxu0 %v4263
        %v4500 = vpop.f32.mrf.mxu0
        %v4501 = vadd.f32 %v4287, %v4500
        %v4502 = vpop.f32.mrf.mxu0
        %4503 = vmatprep.mubr.f32.mxu0 0.0
        %4504 = vmatmul.mubr.f32.gmra.mxu0 %v4264
        %v4505 = vpop.f32.mrf.mxu0
        %v4506 = vadd.f32 %v4287, %v4505
        %v4507 = vpop.f32.mrf.mxu0
        %4508 = vmatprep.mubr.f32.mxu0 0.0
        %4509 = vmatmul.mubr.f32.gmra.mxu0 %v4265
        %v4510 = vpop.f32.mrf.mxu0
        %v4511 = vadd.f32 %v4287, %v4510
        %v4512 = vpop.f32.mrf.mxu0
        %4513 = vdwg.mxu0
        %v4514 = vmax.f32 %v4356, 0.0
        %v4515 = vmax.f32 %v4361, 0.0
        %v4516 = vmax.f32 %v4366, 0.0
        %v4517 = vmax.f32 %v4371, 0.0
        %v4518 = vmax.f32 %v4376, 0.0
        %v4519 = vmax.f32 %v4381, 0.0
        %v4520 = vmax.f32 %v4386, 0.0
        %v4521 = vmax.f32 %v4391, 0.0
        %v4522 = vmax.f32 %v4396, 0.0
        %v4523 = vmax.f32 %v4401, 0.0
        %v4524 = vmax.f32 %v4406, 0.0
        %v4525 = vmax.f32 %v4411, 0.0
        %v4526 = vmax.f32 %v4416, 0.0
        %v4527 = vmax.f32 %v4421, 0.0
        %v4528 = vmax.f32 %v4426, 0.0
        %v4529 = vmax.f32 %v4431, 0.0
        %v4530 = vmax.f32 %v4436, 0.0
        %v4531 = vmax.f32 %v4441, 0.0
        %v4532 = vmax.f32 %v4446, 0.0
        %v4533 = vmax.f32 %v4451, 0.0
        %v4534 = vmax.f32 %v4456, 0.0
        %v4535 = vmax.f32 %v4461, 0.0
        %v4536 = vmax.f32 %v4466, 0.0
        %v4537 = vmax.f32 %v4471, 0.0
        %v4538 = vmax.f32 %v4476, 0.0
        %v4539 = vmax.f32 %v4481, 0.0
        %v4540 = vmax.f32 %v4486, 0.0
        %v4541 = vmax.f32 %v4491, 0.0
        %v4542 = vmax.f32 %v4496, 0.0
        %v4543 = vmax.f32 %v4501, 0.0
        %v4544 = vmax.f32 %v4506, 0.0
        %v4545 = vmax.f32 %v4511, 0.0
        %v4546 = vadd.f32 %v4514, %v312
        %v4547 = vadd.f32 %v4515, %v313
        %v4548 = vadd.f32 %v4516, %v314
        %v4549 = vadd.f32 %v4517, %v315
        %v4550 = vadd.f32 %v4518, %v316
        %v4551 = vadd.f32 %v4519, %v317
        %v4552 = vadd.f32 %v4520, %v318
        %v4553 = vadd.f32 %v4521, %v319
        %v4554 = vadd.f32 %v4522, %v320
        %v4555 = vadd.f32 %v4523, %v321
        %v4556 = vadd.f32 %v4524, %v322
        %v4557 = vadd.f32 %v4525, %v323
        %v4558 = vadd.f32 %v4526, %v324
        %v4559 = vadd.f32 %v4527, %v325
        %v4560 = vadd.f32 %v4528, %v326
        %v4561 = vadd.f32 %v4529, %v327
        %v4562 = vadd.f32 %v4530, %v328
        %v4563 = vadd.f32 %v4531, %v329
        %v4564 = vadd.f32 %v4532, %v330
        %v4565 = vadd.f32 %v4533, %v331
        %v4566 = vadd.f32 %v4534, %v332
        %v4567 = vadd.f32 %v4535, %v333
        %v4568 = vadd.f32 %v4536, %v334
        %v4569 = vadd.f32 %v4537, %v335
        %v4570 = vadd.f32 %v4538, %v336
        %v4571 = vadd.f32 %v4539, %v337
        %v4572 = vadd.f32 %v4540, %v338
        %v4573 = vadd.f32 %v4541, %v339
        %v4574 = vadd.f32 %v4542, %v340
        %v4575 = vadd.f32 %v4543, %v341
        %v4576 = vadd.f32 %v4544, %v342
        %v4577 = vadd.f32 %v4545, %v343
        %4578 = vst [vmem:[%s311] sm:$0xff] %v4546
        %4579 = vst [vmem:[%s311 + $0x8] sm:$0xff] %v4547
        %4580 = vst [vmem:[%s311 + $0x10] sm:$0xff] %v4548
        %4581 = vst [vmem:[%s311 + $0x18] sm:$0xff] %v4549
        %4582 = vst [vmem:[%s311 + $0x20] sm:$0xff] %v4550
        %4583 = vst [vmem:[%s311 + $0x28] sm:$0xff] %v4551
        %4584 = vst [vmem:[%s311 + $0x30] sm:$0xff] %v4552
        %4585 = vst [vmem:[%s311 + $0x38] sm:$0xff] %v4553
        %4586 = vst [vmem:[%s311 + $0x40] sm:$0xff] %v4554
        %4587 = vst [vmem:[%s311 + $0x48] sm:$0xff] %v4555
        %4588 = vst [vmem:[%s311 + $0x50] sm:$0xff] %v4556
        %4589 = vst [vmem:[%s311 + $0x58] sm:$0xff] %v4557
        %4590 = vst [vmem:[%s311 + $0x60] sm:$0xff] %v4558
        %4591 = vst [vmem:[%s311 + $0x68] sm:$0xff] %v4559
        %4592 = vst [vmem:[%s311 + $0x70] sm:$0xff] %v4560
        %4593 = vst [vmem:[%s311 + $0x78] sm:$0xff] %v4561
        %4594 = vst [vmem:[%s311 + $0x80] sm:$0xff] %v4562
        %4595 = vst [vmem:[%s311 + $0x88] sm:$0xff] %v4563
        %4596 = vst [vmem:[%s311 + $0x90] sm:$0xff] %v4564
        %4597 = vst [vmem:[%s311 + $0x98] sm:$0xff] %v4565
        %4598 = vst [vmem:[%s311 + $0xa0] sm:$0xff] %v4566
        %4599 = vst [vmem:[%s311 + $0xa8] sm:$0xff] %v4567
        %4600 = vst [vmem:[%s311 + $0xb0] sm:$0xff] %v4568
        %4601 = vst [vmem:[%s311 + $0xb8] sm:$0xff] %v4569
        %4602 = vst [vmem:[%s311 + $0xc0] sm:$0xff] %v4570
        %4603 = vst [vmem:[%s311 + $0xc8] sm:$0xff] %v4571
        %4604 = vst [vmem:[%s311 + $0xd0] sm:$0xff] %v4572
        %4605 = vst [vmem:[%s311 + $0xd8] sm:$0xff] %v4573
        %4606 = vst [vmem:[%s311 + $0xe0] sm:$0xff] %v4574
        %4607 = vst [vmem:[%s311 + $0xe8] sm:$0xff] %v4575
        %4608 = vst [vmem:[%s311 + $0xf0] sm:$0xff] %v4576
        %4609 = vst [vmem:[%s311 + $0xf8] sm:$0xff] %v4577
        %s4610 = sand.u32 %s185, 1
        %s4611 = scalar_lea.sflag [#allocation5], %s4610
        %s4612 = sand.u32 %s185, 1
        %s4613 = smul.addr %s4612, 256
        %s4614 = scalar_lea.vmem [#allocation8], %s4613
        // Predicated region
        $region57: #{decoder_residual_block_forward.1} parent=47 // pred_check
          %p4615 = pneg %p195
        $region58: #{decoder_residual_block_forward.1} parent=47 // pred_check_branch
          %4617 = sbr.rel (%p4615) target = $region60
        $region59: #{decoder_residual_block_forward.1} parent=47 // pred_region
          %s4619 = ssub.s32 4096, 4096
          %4620 = vsyncadd %s4611, %s4619
          %s4621 = smul.addr %s25, 32
          %s4622 = smul.addr %s4621, 128
          %s4623 = scalar_lea.hbm %s7, %s4622
          %s4624 = sshll.u32 %s4614, 4
          %s4625 = int_to_ptr.vmem [resolvable:$true] %s4624
          %4630 = dma.vmem_to_hbm [thread:$0]  %s4625, 4096, %s4623, %s4611, 128, 128, 8
        $region60: #{decoder_residual_block_forward.1} parent=47 // pred_fallthru
          _
      $region48: #{decoder_residual_block_forward.1} parent=5 // pred_fallthru
        _
      %p4631 = scmp.le.s32.totalorder 2, %s20
      // Predicated region
      $region61: #{decoder_residual_block_forward.1} parent=5 // pred_check
        %p4632 = pneg %p4631
      $region62: #{decoder_residual_block_forward.1} parent=5 // pred_check_branch
        %4634 = sbr.rel (%p4632) target = $region64
      $region63: #{decoder_residual_block_forward.1} parent=5 // pred_region
        %s4635 = ssub.s32 %s20, 2
        // Predicated region
        $region65: #{decoder_residual_block_forward.1} parent=63 // pred_check
          %p4636 = pneg %p201
        $region66: #{decoder_residual_block_forward.1} parent=63 // pred_check_branch
          %4638 = sbr.rel (%p4636) target = $region68
        $region67: #{decoder_residual_block_forward.1} parent=63 // pred_region
          %s4639 = sand.u32 %s186, 1
          %s4640 = scalar_lea.sflag [#allocation5], %s4639
          %s4641 = sand.u32 %s186, 1
          %s4642 = smul.addr %s4641, 256
          %s4643 = scalar_lea.vmem [#allocation8], %s4642
          %4644 = dma.done %s4640, 4096
        $region68: #{decoder_residual_block_forward.1} parent=63 // pred_fallthru
          _
      $region64: #{decoder_residual_block_forward.1} parent=5 // pred_fallthru
        _
    $region6: #{decoder_residual_block_forward.1} parent=1 // loop_footer
      %s24 = sadd.s32 1, %s20
    $region7: #{decoder_residual_block_forward.1} parent=1 // loop_footer_branch
      %19 = sbr.rel target = $region3
    $region8: #{decoder_residual_block_forward.1} parent=1 // loop_exit
      _
    %4645 = vsyncpa [#allocation4], 1
    %s4646 = scalar_lea.sflag [#allocation4], 1
    %4647 = vsyncpa %s4646, 1
    %4648 = vsyncpa [#allocation7], 1
    %4649 = vsyncpa [#allocation5], 1
    %s4650 = scalar_lea.sflag [#allocation5], 1
    %4651 = vsyncpa %s4650, 1

</llo_original>
